<compile_context>
chip_gen: v6e
topology: v6e:2x2x1
jax: 0.10.0
libtpu: 0.0.40
codegen_flags: <defaults>
</compile_context>

<pallas_src>
import functools

import jax
import jax.numpy as jnp
from jax.experimental import pallas as pl
from jax.experimental.pallas import tpu as pltpu

LANE = 128
VMEM_LIMIT_BYTES = 32 * 1024 * 1024  # >= default scoped VMEM on v5e/v6e/v7x, far above our tile needs


def _round_up(n, m):
    return (n + m - 1) // m * m


def _pad2(a, rows, cols):
    r, c = a.shape
    return jnp.pad(a, ((0, rows - r), (0, cols - c)))


def _row_tile(n):
    if n <= 256:
        return n
    assert n % 256 == 0, "N must be a multiple of 256 for row tiling"
    return 256


def _cparams(dimension_semantics):
    return pltpu.CompilerParams(
        dimension_semantics=dimension_semantics,
        vmem_limit_bytes=VMEM_LIMIT_BYTES,
    )


# --------------------------------------------------------------------------- #
# Dense linear:  y = act(x @ W.T + b), gridded over row tiles.
# --------------------------------------------------------------------------- #
def _linear_kernel(x_ref, w_ref, b_ref, o_ref, *, act):
    y = jax.lax.dot_general(x_ref[...], w_ref[...], (((1,), (1,)), ((), ())),
                            preferred_element_type=jnp.float32)
    y = y + b_ref[...]
    if act == "relu":
        y = jnp.maximum(y, 0.0)
    o_ref[...] = y.astype(o_ref.dtype)


def _linear(x, w, b, *, act="none", out_dtype=jnp.float32):
    n, k = x.shape
    hout = w.shape[0]
    tt = _row_tile(n)
    return pl.pallas_call(
        functools.partial(_linear_kernel, act=act),
        out_shape=jax.ShapeDtypeStruct((n, hout), out_dtype),
        grid_spec=pltpu.PrefetchScalarGridSpec(
            num_scalar_prefetch=0,
            grid=(n // tt,),
            in_specs=[
                pl.BlockSpec((tt, k), lambda i: (i, 0)),
                pl.BlockSpec((hout, k), lambda i: (0, 0)),
                pl.BlockSpec((1, hout), lambda i: (0, 0)),
            ],
            out_specs=pl.BlockSpec((tt, hout), lambda i: (i, 0)),
        ),
        compiler_params=_cparams(("parallel",)),
    )(x, w, b)


# --------------------------------------------------------------------------- #
# GCN propagation:  o = [relu](A_norm @ xw + b), grid = (row tiles, src tiles).
# --------------------------------------------------------------------------- #
def _gcn_prop_kernel(a_ref, xw_ref, b_ref, o_ref, acc_ref, *, relu):
    @pl.when(pl.program_id(1) == 0)
    def _():
        acc_ref[...] = jnp.zeros_like(acc_ref)

    acc_ref[...] += jax.lax.dot_general(a_ref[...], xw_ref[...],
                                        (((1,), (0,)), ((), ())),
                                        preferred_element_type=jnp.float32)

    @pl.when(pl.program_id(1) == pl.num_programs(1) - 1)
    def _():
        z = acc_ref[...] + b_ref[...]
        if relu:
            z = jnp.maximum(z, 0.0)
        o_ref[...] = z.astype(o_ref.dtype)


def _gcn_propagate(a_norm, xw, b, *, relu, out_dtype=jnp.float32):
    n = a_norm.shape[0]
    hout = xw.shape[1]
    tt = _row_tile(n)
    ts = _row_tile(n)
    return pl.pallas_call(
        functools.partial(_gcn_prop_kernel, relu=relu),
        out_shape=jax.ShapeDtypeStruct((n, hout), out_dtype),
        grid_spec=pltpu.PrefetchScalarGridSpec(
            num_scalar_prefetch=0,
            grid=(n // tt, n // ts),
            in_specs=[
                pl.BlockSpec((tt, ts), lambda i, k: (i, k)),     # A_norm block
                pl.BlockSpec((ts, hout), lambda i, k: (k, 0)),   # (x @ W.T) block
                pl.BlockSpec((1, hout), lambda i, k: (0, 0)),    # bias
            ],
            out_specs=pl.BlockSpec((tt, hout), lambda i, k: (i, 0)),
            scratch_shapes=[pltpu.VMEM((tt, hout), jnp.float32)],
        ),
        compiler_params=_cparams(("parallel", "arbitrary")),
    )(a_norm, xw, b)


# --------------------------------------------------------------------------- #
# GATv2 (heads=1, edge_dim=1) with online softmax over source tiles.
# Logits are accumulated channel-by-channel on lane-dense [Tt, Ts] tiles, so no
# [N, N, H] intermediate is ever materialized.  Softmax/logit math stays f32.
# --------------------------------------------------------------------------- #
def _gat_kernel(ahat_ref, e_ref, xlt_ref, xr_ref, we_ref, att_ref, bg_ref,
                o_ref, m_ref, l_ref, acc_ref, *, h_real):
    k = pl.program_id(1)

    @pl.when(k == 0)
    def _():
        m_ref[...] = jnp.full(m_ref.shape, -1e30, dtype=jnp.float32)
        l_ref[...] = jnp.zeros_like(l_ref)
        acc_ref[...] = jnp.zeros_like(acc_ref)

    mask = ahat_ref[...] > 0.0                        # [Tt, Ts] (A + I) > 0
    e = e_ref[...].astype(jnp.float32)                # [Tt, Ts] edge attrs
    xr = xr_ref[...].astype(jnp.float32)              # [Tt, Hp] target transform
    xlt = xlt_ref[...]                                # [Hp, Ts] source transform (transposed)
    xlt_f = xlt.astype(jnp.float32)
    we = we_ref[...].astype(jnp.float32)              # [1, Hp] lin_edge weight
    att = att_ref[...].astype(jnp.float32)            # [1, Hp] attention vector

    tt, ts = e.shape
    logits = jnp.zeros((tt, ts), jnp.float32)
    for h in range(h_real):                           # unrolled over real hidden channels
        t = xr[:, h:h + 1] + xlt_f[h:h + 1, :] + we[:, h:h + 1] * e
        t = jnp.where(t >= 0.0, t, 0.2 * t)           # leaky_relu(0.2)
        logits = logits + att[:, h:h + 1] * t
    logits = jnp.where(mask, logits, -1e30)

    m_prev = m_ref[...]
    m_new = jnp.maximum(m_prev, jnp.max(logits, axis=1, keepdims=True))
    scale = jnp.exp(m_prev - m_new)
    p = jnp.where(mask, jnp.exp(logits - m_new), 0.0)
    l_ref[...] = scale * l_ref[...] + jnp.sum(p, axis=1, keepdims=True)
    # aggregate alpha * x_l[source]: contract over the source axis of [Hp, Ts]
    agg = jax.lax.dot_general(p.astype(xlt.dtype), xlt, (((1,), (1,)), ((), ())),
                              preferred_element_type=jnp.float32)
    acc_ref[...] = scale * acc_ref[...] + agg
    m_ref[...] = m_new

    @pl.when(k == pl.num_programs(1) - 1)
    def _():
        h2 = acc_ref[...] / l_ref[...] + bg_ref[...]
        o_ref[...] = jnp.maximum(h2, 0.0).astype(o_ref.dtype)


def _gatv2(a_hat, eattr, xl_t, xr, we, att, bg, *, h_real, out_dtype=jnp.float32):
    n = a_hat.shape[0]
    hp = xr.shape[1]
    tt = _row_tile(n)
    ts = _row_tile(n)
    return pl.pallas_call(
        functools.partial(_gat_kernel, h_real=h_real),
        out_shape=jax.ShapeDtypeStruct((n, hp), out_dtype),
        grid_spec=pltpu.PrefetchScalarGridSpec(
            num_scalar_prefetch=0,
            grid=(n // tt, n // ts),
            in_specs=[
                pl.BlockSpec((tt, ts), lambda i, k: (i, k)),   # A + I (mask)
                pl.BlockSpec((tt, ts), lambda i, k: (i, k)),   # edge attrs [N, N]
                pl.BlockSpec((hp, ts), lambda i, k: (0, k)),   # x_l transposed
                pl.BlockSpec((tt, hp), lambda i, k: (i, 0)),   # x_r
                pl.BlockSpec((1, hp), lambda i, k: (0, 0)),    # we (lin_edge weight)
                pl.BlockSpec((1, hp), lambda i, k: (0, 0)),    # att
                pl.BlockSpec((1, hp), lambda i, k: (0, 0)),    # output bias
            ],
            out_specs=pl.BlockSpec((tt, hp), lambda i, k: (i, 0)),
            scratch_shapes=[
                pltpu.VMEM((tt, 1), jnp.float32),    # running max
                pltpu.VMEM((tt, 1), jnp.float32),    # running denominator
                pltpu.VMEM((tt, hp), jnp.float32),   # weighted-value accumulator
            ],
        ),
        compiler_params=_cparams(("parallel", "arbitrary")),
    )(a_hat, eattr, xl_t, xr, we, att, bg)


# --------------------------------------------------------------------------- #
# Tiled Gram matrix:  out[i_blk, j_blk] = node_x[i_blk] @ node_x[j_blk].T
# --------------------------------------------------------------------------- #
def _gram_kernel(xi_ref, xj_ref, o_ref):
    o_ref[...] = jax.lax.dot_general(xi_ref[...], xj_ref[...],
                                     (((1,), (1,)), ((), ())),
                                     preferred_element_type=jnp.float32)


def _gram(node_x):
    n, hp = node_x.shape
    tt = _row_tile(n)
    return pl.pallas_call(
        _gram_kernel,
        out_shape=jax.ShapeDtypeStruct((n, n), jnp.float32),
        grid_spec=pltpu.PrefetchScalarGridSpec(
            num_scalar_prefetch=0,
            grid=(n // tt, n // tt),
            in_specs=[
                pl.BlockSpec((tt, hp), lambda i, j: (i, 0)),
                pl.BlockSpec((tt, hp), lambda i, j: (j, 0)),
            ],
            out_specs=pl.BlockSpec((tt, tt), lambda i, j: (i, j)),
        ),
        compiler_params=_cparams(("parallel", "parallel")),
    )(node_x, node_x)


# --------------------------------------------------------------------------- #
# Full forward pass.
# --------------------------------------------------------------------------- #
def gcn_gat_autoencoder(x, A, Eattr, params, *, compute_dtype=jnp.float32):
    """x: [N, F], A[target, source]: [N, N], Eattr[target, source]: [N, N].

    compute_dtype=jnp.bfloat16 may be used on v6e/v7x for the propagation
    matmuls; logits / softmax / accumulation always stay float32.
    """
    N, F = x.shape
    H = params["w1"].shape[0]
    E = params["w2"].shape[0]
    FP, HP, EP = (_round_up(d, LANE) for d in (F, H, E))

    # ---- graph preprocessing (per-graph constants, done once in XLA) ----
    A_hat = A + jnp.eye(N, dtype=jnp.float32)                  # add self loops
    deg = jnp.sum(A_hat, axis=1)
    dinv = jnp.where(deg > 0, jax.lax.rsqrt(deg), 0.0)
    A_norm = (dinv[:, None] * A_hat * dinv[None, :]).astype(compute_dtype)
    A_hat = A_hat.astype(jnp.float32)
    Eattr = Eattr.astype(jnp.float32)

    # ---- zero-pad feature dims to lane width (numerically exact) ----
    xp = _pad2(x, N, FP).astype(compute_dtype)
    w1p = _pad2(params["w1"], HP, FP).astype(compute_dtype)
    b1p = _pad2(params["b1"], 1, HP)
    wlp = _pad2(params["wl"], HP, HP).astype(compute_dtype)
    blp = _pad2(params["bl"], 1, HP)
    wrp = _pad2(params["wr"], HP, HP).astype(compute_dtype)
    brp = _pad2(params["br"], 1, HP)
    wep = _pad2(params["we"].reshape(1, H), 1, HP)
    attp = _pad2(params["att"].reshape(1, H), 1, HP)
    bgp = _pad2(params["bg"], 1, HP)
    w2p = _pad2(params["w2"], EP, HP).astype(compute_dtype)
    b2p = _pad2(params["b2"], 1, EP)
    w3p = _pad2(params["w3"], HP, EP)
    b3p = _pad2(params["b3"], 1, HP)

    zeros_h = jnp.zeros((1, HP), jnp.float32)
    zeros_e = jnp.zeros((1, EP), jnp.float32)

    # ---- GCNConv 1 + relu ----
    xw1 = _linear(xp, w1p, zeros_h, act="none", out_dtype=compute_dtype)
    h1 = _gcn_propagate(A_norm, xw1, b1p, relu=True, out_dtype=compute_dtype)

    # ---- GATv2Conv + relu (PyG defaults: bias on lin_l, lin_r and output) ----
    xl = _linear(h1, wlp, blp, act="none", out_dtype=compute_dtype)   # source transform
    xr = _linear(h1, wrp, brp, act="none", out_dtype=compute_dtype)   # target transform
    xl_t = jnp.transpose(xl)                                          # [HP, N]
    h2 = _gatv2(A_hat, Eattr, xl_t, xr, wep, attp, bgp, h_real=H,
                out_dtype=compute_dtype)

    # ---- GCNConv 2 ----
    hw2 = _linear(h2, w2p, zeros_e, act="none", out_dtype=compute_dtype)
    z = _gcn_propagate(A_norm, hw2, b2p, relu=False, out_dtype=jnp.float32)

    # ---- node_linear1 + relu, then Gram matrix ----
    node_x = _linear(z, w3p, b3p, act="relu", out_dtype=jnp.float32)
    return _gram(node_x)


def make_params(key, num_features, hidden, emb):
    ks = jax.random.split(key, 12)
    f32 = jnp.float32
    s = 0.1
    p = {
        # GCNConv(num_features -> hidden): lin weight [out, in], bias [out]
        "w1": s * jax.random.normal(ks[0], (hidden, num_features), f32),
        "b1": s * jax.random.normal(ks[1], (1, hidden), f32),
        # GATv2Conv(hidden -> hidden, heads=1, edge_dim=1)
        "wl": s * jax.random.normal(ks[2], (hidden, hidden), f32),
        "bl": s * jax.random.normal(ks[3], (1, hidden), f32),
        "wr": s * jax.random.normal(ks[4], (hidden, hidden), f32),
        "br": s * jax.random.normal(ks[5], (1, hidden), f32),
        "we": s * jax.random.normal(ks[6], (1, 1, hidden), f32),   # lin_edge weight (edge_dim=1)
        "att": s * jax.random.normal(ks[7], (1, 1, hidden), f32),  # attention vector
        "bg": s * jax.random.normal(ks[8], (1, hidden), f32),      # GAT output bias
        # GCNConv(hidden -> embedding_dim)
        "w2": s * jax.random.normal(ks[9], (emb, hidden), f32),
        "b2": s * jax.random.normal(ks[10], (1, emb), f32),
        # node_linear1: Linear(embedding_dim -> hidden)
        "w3": s * jax.random.normal(ks[11], (hidden, emb), f32),
        "b3": jnp.zeros((1, hidden), f32),
    }
    # TODO(synk): enc_linear1/2 and node_linear2/3/4 exist in __init__ but are unused
    # in forward(), so they are not materialized here.
    return p


def build_dense_graph(N, src, dst, edge_attr):
    """Dense A[target, source] and Eattr[target, source] with mean-filled self-loop attrs."""
    f32 = jnp.float32
    A = jnp.zeros((N, N), f32).at[dst, src].set(1.0)
    Eattr = jnp.zeros((N, N), f32).at[dst, src].set(edge_attr[:, 0])
    # per-node mean of incoming edge attrs (PyG add_self_loops fill_value='mean')
    sums = jax.ops.segment_sum(edge_attr[:, 0], dst, num_segments=N)
    cnts = jax.ops.segment_sum(jnp.ones_like(edge_attr[:, 0]), dst, num_segments=N)
    loop_attr = jnp.where(cnts > 0, sums / jnp.maximum(cnts, 1.0), 0.0)
    idx = jnp.arange(N)
    Eattr = Eattr.at[idx, idx].set(loop_attr)
    return A, Eattr


if __name__ == "__main__":
    key = jax.random.PRNGKey(0)
    k_x, k_e, k_p = jax.random.split(key, 3)

    N = 8            # nodes
    NUM_FEATURES = 16
    HIDDEN = 32
    EMB = 16

    # deterministic directed edge list (no self loops, no duplicates)
    edges = ([(i, (i + 1) % N) for i in range(N)]
             + [((i + 1) % N, i) for i in range(N)]
             + [(i, (i + 3) % N) for i in range(0, N, 2)])
    src = jnp.array([e[0] for e in edges], dtype=jnp.int32)
    dst = jnp.array([e[1] for e in edges], dtype=jnp.int32)
    E = len(edges)

    x = jax.random.normal(k_x, (N, NUM_FEATURES), jnp.float32)
    edge_attr = jax.random.uniform(k_e, (E, 1), jnp.float32)

    A, Eattr = build_dense_graph(N, src, dst, edge_attr)
    params = make_params(k_p, NUM_FEATURES, HIDDEN, EMB)

    fwd = jax.jit(functools.partial(gcn_gat_autoencoder, params=params))
    out = jax.block_until_ready(fwd(x, A, Eattr))
    assert out.shape == (N, N) and out.dtype == jnp.float32
    print("KERNEL_OK")
</pallas_src>

<mosaic_0001>
module attributes {stable_mosaic.version = 11 : i64} {
  func.func @_linear_kernel(%arg0: i32, %arg1: memref<8x128xf32, #tpu.memory_space<vmem>>, %arg2: memref<128x128xf32, #tpu.memory_space<vmem>>, %arg3: memref<1x128xf32, #tpu.memory_space<vmem>>, %arg4: memref<8x128xf32, #tpu.memory_space<vmem>>) attributes {dimension_semantics = [#tpu.dimension_semantics<parallel>], iteration_bounds = array<i64: 1>, scalar_prefetch = 0 : i64, scratch_operands = 0 : i64, tpu.core_type = #tpu.core_type<tc>, window_params = [{transform_indices = @transform_0, window_bounds = array<i64: 8, 128>}, {pipeline_mode = #tpu.pipeline_mode<synchronous>, transform_indices = @transform_1, window_bounds = array<i64: 128, 128>}, {pipeline_mode = #tpu.pipeline_mode<synchronous>, transform_indices = @transform_2, window_bounds = array<i64: 1, 128>}, {transform_indices = @transform_3, window_bounds = array<i64: 8, 128>}]} {
    %c0 = arith.constant 0 : index
    %c0_0 = arith.constant 0 : index
    %0 = vector.load %arg1[%c0, %c0_0] : memref<8x128xf32, #tpu.memory_space<vmem>>, vector<8x128xf32>
    %c0_1 = arith.constant 0 : index
    %c0_2 = arith.constant 0 : index
    %1 = vector.load %arg2[%c0_1, %c0_2] : memref<128x128xf32, #tpu.memory_space<vmem>>, vector<128x128xf32>
    %cst = arith.constant dense<0.000000e+00> : vector<8x128xf32>
    %2 = tpu.matmul %0, %1, %cst {dimension_numbers = #tpu.dot_dimension_numbers<[1], [1], [0], [0], [0, 0, 1, 0], [], []>} : vector<8x128xf32>, vector<128x128xf32>, vector<8x128xf32> -> vector<8x128xf32>
    %c0_3 = arith.constant 0 : index
    %c0_4 = arith.constant 0 : index
    %3 = vector.load %arg3[%c0_3, %c0_4] : memref<1x128xf32, #tpu.memory_space<vmem>>, vector<1x128xf32>
    %4 = vector.broadcast %3 : vector<1x128xf32> to vector<8x128xf32>
    %5 = arith.addf %2, %4 : vector<8x128xf32>
    %c0_5 = arith.constant 0 : index
    %c0_6 = arith.constant 0 : index
    %6 = vector.load %arg4[%c0_5, %c0_6] : memref<8x128xf32, #tpu.memory_space<vmem>>, vector<8x128xf32>
    tpu.vector_store %arg4[%c0_5, %c0_6], %5 {strides = array<i32>} : memref<8x128xf32, #tpu.memory_space<vmem>>, vector<8x128xf32>,
    return
  }
  func.func @transform_0(%arg0: i32) -> (i32, i32) {
    %c0_i32 = arith.constant 0 : i32
    %c0_i32_0 = arith.constant 0 : i32
    return %arg0, %c0_i32 : i32, i32
  }
  func.func @transform_1(%arg0: i32) -> (i32, i32) {
    %c0_i32 = arith.constant 0 : i32
    %c0_i32_0 = arith.constant 0 : i32
    %c0_i32_1 = arith.constant 0 : i32
    return %c0_i32, %c0_i32_0 : i32, i32
  }
  func.func @transform_2(%arg0: i32) -> (i32, i32) {
    %c0_i32 = arith.constant 0 : i32
    %c0_i32_0 = arith.constant 0 : i32
    %c0_i32_1 = arith.constant 0 : i32
    return %c0_i32, %c0_i32_0 : i32, i32
  }
  func.func @transform_3(%arg0: i32) -> (i32, i32) {
    %c0_i32 = arith.constant 0 : i32
    %c0_i32_0 = arith.constant 0 : i32
    return %arg0, %c0_i32 : i32, i32
  }
}

module attributes {stable_mosaic.version = 11 : i64} {
  func.func @_linear_kernel(%arg0: i32, %arg1: memref<8x128xf32, #tpu.memory_space<vmem>>, %arg2: memref<128x128xf32, #tpu.memory_space<vmem>>, %arg3: memref<1x128xf32, #tpu.memory_space<vmem>>, %arg4: memref<8x128xf32, #tpu.memory_space<vmem>>) attributes {dimension_semantics = [#tpu.dimension_semantics<parallel>], iteration_bounds = array<i64: 1>, scalar_prefetch = 0 : i64, scratch_operands = 0 : i64, tpu.core_type = #tpu.core_type<tc>, window_params = [{transform_indices = @transform_0, window_bounds = array<i64: 8, 128>}, {pipeline_mode = #tpu.pipeline_mode<synchronous>, transform_indices = @transform_1, window_bounds = array<i64: 128, 128>}, {pipeline_mode = #tpu.pipeline_mode<synchronous>, transform_indices = @transform_2, window_bounds = array<i64: 1, 128>}, {transform_indices = @transform_3, window_bounds = array<i64: 8, 128>}]} {
    %c0 = arith.constant 0 : index
    %c0_0 = arith.constant 0 : index
    %0 = vector.load %arg1[%c0, %c0_0] : memref<8x128xf32, #tpu.memory_space<vmem>>, vector<8x128xf32>
    %c0_1 = arith.constant 0 : index
    %c0_2 = arith.constant 0 : index
    %1 = vector.load %arg2[%c0_1, %c0_2] : memref<128x128xf32, #tpu.memory_space<vmem>>, vector<128x128xf32>
    %cst = arith.constant dense<0.000000e+00> : vector<8x128xf32>
    %2 = tpu.matmul %0, %1, %cst {dimension_numbers = #tpu.dot_dimension_numbers<[1], [1], [0], [0], [0, 0, 1, 0], [], []>} : vector<8x128xf32>, vector<128x128xf32>, vector<8x128xf32> -> vector<8x128xf32>
    %c0_3 = arith.constant 0 : index
    %c0_4 = arith.constant 0 : index
    %3 = vector.load %arg3[%c0_3, %c0_4] : memref<1x128xf32, #tpu.memory_space<vmem>>, vector<1x128xf32>
    %4 = vector.broadcast %3 : vector<1x128xf32> to vector<8x128xf32>
    %5 = arith.addf %2, %4 : vector<8x128xf32>
    %c0_5 = arith.constant 0 : index
    %c0_6 = arith.constant 0 : index
    %6 = vector.load %arg4[%c0_5, %c0_6] : memref<8x128xf32, #tpu.memory_space<vmem>>, vector<8x128xf32>
    tpu.vector_store %arg4[%c0_5, %c0_6], %5 {strides = array<i32>} : memref<8x128xf32, #tpu.memory_space<vmem>>, vector<8x128xf32>,
    return
  }
  func.func @transform_0(%arg0: i32) -> (i32, i32) {
    %c0_i32 = arith.constant 0 : i32
    %c0_i32_0 = arith.constant 0 : i32
    return %arg0, %c0_i32 : i32, i32
  }
  func.func @transform_1(%arg0: i32) -> (i32, i32) {
    %c0_i32 = arith.constant 0 : i32
    %c0_i32_0 = arith.constant 0 : i32
    %c0_i32_1 = arith.constant 0 : i32
    return %c0_i32, %c0_i32_0 : i32, i32
  }
  func.func @transform_2(%arg0: i32) -> (i32, i32) {
    %c0_i32 = arith.constant 0 : i32
    %c0_i32_0 = arith.constant 0 : i32
    %c0_i32_1 = arith.constant 0 : i32
    return %c0_i32, %c0_i32_0 : i32, i32
  }
  func.func @transform_3(%arg0: i32) -> (i32, i32) {
    %c0_i32 = arith.constant 0 : i32
    %c0_i32_0 = arith.constant 0 : i32
    return %arg0, %c0_i32 : i32, i32
  }
}

module attributes {stable_mosaic.version = 11 : i64} {
  func.func @_gcn_prop_kernel(%arg0: i32, %arg1: i32, %arg2: memref<8x8xf32, #tpu.memory_space<vmem>>, %arg3: memref<8x128xf32, #tpu.memory_space<vmem>>, %arg4: memref<1x128xf32, #tpu.memory_space<vmem>>, %arg5: memref<8x128xf32, #tpu.memory_space<vmem>>, %arg6: memref<8x128xf32, #tpu.memory_space<vmem>>) attributes {dimension_semantics = [#tpu.dimension_semantics<parallel>, #tpu.dimension_semantics<arbitrary>], iteration_bounds = array<i64: 1, 1>, scalar_prefetch = 0 : i64, scratch_operands = 1 : i64, tpu.core_type = #tpu.core_type<tc>, window_params = [{transform_indices = @transform_0, window_bounds = array<i64: 8, 8>}, {transform_indices = @transform_1, window_bounds = array<i64: 8, 128>}, {pipeline_mode = #tpu.pipeline_mode<synchronous>, transform_indices = @transform_2, window_bounds = array<i64: 1, 128>}, {transform_indices = @transform_3, window_bounds = array<i64: 8, 128>}]} {
    %c0_i32 = arith.constant 0 : i32
    %0 = arith.cmpi eq, %arg1, %c0_i32 : i32
    %1 = arith.extui %0 : i1 to i32
    %c0_i32_0 = arith.constant 0 : i32
    %2 = arith.cmpi ne, %1, %c0_i32_0 : i32
    scf.if %2 {
      %cst_10 = arith.constant 0.000000e+00 : f32
      %12 = vector.broadcast %cst_10 : f32 to vector<8x128xf32>
      %c0_11 = arith.constant 0 : index
      %c0_12 = arith.constant 0 : index
      %13 = vector.load %arg6[%c0_11, %c0_12] : memref<8x128xf32, #tpu.memory_space<vmem>>, vector<8x128xf32>
      tpu.vector_store %arg6[%c0_11, %c0_12], %12 {strides = array<i32>} : memref<8x128xf32, #tpu.memory_space<vmem>>, vector<8x128xf32>,
    } else {
    }
    %c0 = arith.constant 0 : index
    %c0_1 = arith.constant 0 : index
    %3 = vector.load %arg6[%c0, %c0_1] : memref<8x128xf32, #tpu.memory_space<vmem>>, vector<8x128xf32>
    %c0_2 = arith.constant 0 : index
    %c0_3 = arith.constant 0 : index
    %4 = vector.load %arg2[%c0_2, %c0_3] : memref<8x8xf32, #tpu.memory_space<vmem>>, vector<8x8xf32>
    %c0_4 = arith.constant 0 : index
    %c0_5 = arith.constant 0 : index
    %5 = vector.load %arg3[%c0_4, %c0_5] : memref<8x128xf32, #tpu.memory_space<vmem>>, vector<8x128xf32>
    %cst = arith.constant dense<0.000000e+00> : vector<8x128xf32>
    %6 = tpu.matmul %4, %5, %cst {dimension_numbers = #tpu.dot_dimension_numbers<[1], [0], [0], [1], [0, 0, 1, 1], [], []>} : vector<8x8xf32>, vector<8x128xf32>, vector<8x128xf32> -> vector<8x128xf32>
    %7 = arith.addf %3, %6 : vector<8x128xf32>
    %c0_6 = arith.constant 0 : index
    %c0_7 = arith.constant 0 : index
    %8 = vector.load %arg6[%c0_6, %c0_7] : memref<8x128xf32, #tpu.memory_space<vmem>>, vector<8x128xf32>
    tpu.vector_store %arg6[%c0_6, %c0_7], %7 {strides = array<i32>} : memref<8x128xf32, #tpu.memory_space<vmem>>, vector<8x128xf32>,
    %c0_i32_8 = arith.constant 0 : i32
    %9 = arith.cmpi eq, %arg1, %c0_i32_8 : i32
    %10 = arith.extui %9 : i1 to i32
    %c0_i32_9 = arith.constant 0 : i32
    %11 = arith.cmpi ne, %10, %c0_i32_9 : i32
    scf.if %11 {
      %c0_10 = arith.constant 0 : index
      %c0_11 = arith.constant 0 : index
      %12 = vector.load %arg6[%c0_10, %c0_11] : memref<8x128xf32, #tpu.memory_space<vmem>>, vector<8x128xf32>
      %c0_12 = arith.constant 0 : index
      %c0_13 = arith.constant 0 : index
      %13 = vector.load %arg4[%c0_12, %c0_13] : memref<1x128xf32, #tpu.memory_space<vmem>>, vector<1x128xf32>
      %14 = vector.broadcast %13 : vector<1x128xf32> to vector<8x128xf32>
      %15 = arith.addf %12, %14 : vector<8x128xf32>
      %cst_14 = arith.constant 0.000000e+00 : f32
      %16 = vector.broadcast %cst_14 : f32 to vector<8x128xf32>
      %17 = arith.maximumf %15, %16 : vector<8x128xf32>
      %c0_15 = arith.constant 0 : index
      %c0_16 = arith.constant 0 : index
      %18 = vector.load %arg5[%c0_15, %c0_16] : memref<8x128xf32, #tpu.memory_space<vmem>>, vector<8x128xf32>
      tpu.vector_store %arg5[%c0_15, %c0_16], %17 {strides = array<i32>} : memref<8x128xf32, #tpu.memory_space<vmem>>, vector<8x128xf32>,
    } else {
    }
    return
  }
  func.func @transform_0(%arg0: i32, %arg1: i32) -> (i32, i32) {
    %c0_i32 = arith.constant 0 : i32
    return %arg0, %arg1 : i32, i32
  }
  func.func @transform_1(%arg0: i32, %arg1: i32) -> (i32, i32) {
    %c0_i32 = arith.constant 0 : i32
    %c0_i32_0 = arith.constant 0 : i32
    return %arg1, %c0_i32 : i32, i32
  }
  func.func @transform_2(%arg0: i32, %arg1: i32) -> (i32, i32) {
    %c0_i32 = arith.constant 0 : i32
    %c0_i32_0 = arith.constant 0 : i32
    %c0_i32_1 = arith.constant 0 : i32
    return %c0_i32, %c0_i32_0 : i32, i32
  }
  func.func @transform_3(%arg0: i32, %arg1: i32) -> (i32, i32) {
    %c0_i32 = arith.constant 0 : i32
    %c0_i32_0 = arith.constant 0 : i32
    return %arg0, %c0_i32 : i32, i32
  }
}

module attributes {stable_mosaic.version = 11 : i64} {
  func.func @_gat_kernel(%arg0: i32, %arg1: i32, %arg2: memref<8x8xf32, #tpu.memory_space<vmem>>, %arg3: memref<8x8xf32, #tpu.memory_space<vmem>>, %arg4: memref<128x8xf32, #tpu.memory_space<vmem>>, %arg5: memref<8x128xf32, #tpu.memory_space<vmem>>, %arg6: memref<1x128xf32, #tpu.memory_space<vmem>>, %arg7: memref<1x128xf32, #tpu.memory_space<vmem>>, %arg8: memref<1x128xf32, #tpu.memory_space<vmem>>, %arg9: memref<8x128xf32, #tpu.memory_space<vmem>>, %arg10: memref<8x1xf32, #tpu.memory_space<vmem>>, %arg11: memref<8x1xf32, #tpu.memory_space<vmem>>, %arg12: memref<8x128xf32, #tpu.memory_space<vmem>>) attributes {dimension_semantics = [#tpu.dimension_semantics<parallel>, #tpu.dimension_semantics<arbitrary>], iteration_bounds = array<i64: 1, 1>, scalar_prefetch = 0 : i64, scratch_operands = 3 : i64, tpu.core_type = #tpu.core_type<tc>, window_params = [{transform_indices = @transform_0, window_bounds = array<i64: 8, 8>}, {transform_indices = @transform_1, window_bounds = array<i64: 8, 8>}, {transform_indices = @transform_2, window_bounds = array<i64: 128, 8>}, {transform_indices = @transform_3, window_bounds = array<i64: 8, 128>}, {pipeline_mode = #tpu.pipeline_mode<synchronous>, transform_indices = @transform_4, window_bounds = array<i64: 1, 128>}, {pipeline_mode = #tpu.pipeline_mode<synchronous>, transform_indices = @transform_5, window_bounds = array<i64: 1, 128>}, {pipeline_mode = #tpu.pipeline_mode<synchronous>, transform_indices = @transform_6, window_bounds = array<i64: 1, 128>}, {transform_indices = @transform_7, window_bounds = array<i64: 8, 128>}]} {
    %c0_i32 = arith.constant 0 : i32
    %0 = arith.cmpi eq, %arg1, %c0_i32 : i32
    %1 = arith.extui %0 : i1 to i32
    %c0_i32_0 = arith.constant 0 : i32
    %2 = arith.cmpi ne, %1, %c0_i32_0 : i32
    scf.if %2 {
      %cst_96 = arith.constant -1.000000e+30 : f32
      %617 = vector.broadcast %cst_96 : f32 to vector<8x1xf32>
      %c0_97 = arith.constant 0 : index
      %c0_98 = arith.constant 0 : index
      %618 = vector.load %arg10[%c0_97, %c0_98] : memref<8x1xf32, #tpu.memory_space<vmem>>, vector<8x1xf32>
      tpu.vector_store %arg10[%c0_97, %c0_98], %617 {strides = array<i32>} : memref<8x1xf32, #tpu.memory_space<vmem>>, vector<8x1xf32>,
      %cst_99 = arith.constant 0.000000e+00 : f32
      %619 = vector.broadcast %cst_99 : f32 to vector<8x1xf32>
      %c0_100 = arith.constant 0 : index
      %c0_101 = arith.constant 0 : index
      %620 = vector.load %arg11[%c0_100, %c0_101] : memref<8x1xf32, #tpu.memory_space<vmem>>, vector<8x1xf32>
      tpu.vector_store %arg11[%c0_100, %c0_101], %619 {strides = array<i32>} : memref<8x1xf32, #tpu.memory_space<vmem>>, vector<8x1xf32>,
      %cst_102 = arith.constant 0.000000e+00 : f32
      %621 = vector.broadcast %cst_102 : f32 to vector<8x128xf32>
      %c0_103 = arith.constant 0 : index
      %c0_104 = arith.constant 0 : index
      %622 = vector.load %arg12[%c0_103, %c0_104] : memref<8x128xf32, #tpu.memory_space<vmem>>, vector<8x128xf32>
      tpu.vector_store %arg12[%c0_103, %c0_104], %621 {strides = array<i32>} : memref<8x128xf32, #tpu.memory_space<vmem>>, vector<8x128xf32>,
    } else {
    }
    %c0 = arith.constant 0 : index
    %c0_1 = arith.constant 0 : index
    %3 = vector.load %arg2[%c0, %c0_1] : memref<8x8xf32, #tpu.memory_space<vmem>>, vector<8x8xf32>
    %cst = arith.constant 0.000000e+00 : f32
    %4 = vector.broadcast %cst : f32 to vector<8x8xf32>
    %5 = arith.cmpf ogt, %3, %4 : vector<8x8xf32>
    %c0_2 = arith.constant 0 : index
    %c0_3 = arith.constant 0 : index
    %6 = vector.load %arg3[%c0_2, %c0_3] : memref<8x8xf32, #tpu.memory_space<vmem>>, vector<8x8xf32>
    %c0_4 = arith.constant 0 : index
    %c0_5 = arith.constant 0 : index
    %7 = vector.load %arg5[%c0_4, %c0_5] : memref<8x128xf32, #tpu.memory_space<vmem>>, vector<8x128xf32>
    %c0_6 = arith.constant 0 : index
    %c0_7 = arith.constant 0 : index
    %8 = vector.load %arg4[%c0_6, %c0_7] : memref<128x8xf32, #tpu.memory_space<vmem>>, vector<128x8xf32>
    %c0_8 = arith.constant 0 : index
    %c0_9 = arith.constant 0 : index
    %9 = vector.load %arg6[%c0_8, %c0_9] : memref<1x128xf32, #tpu.memory_space<vmem>>, vector<1x128xf32>
    %c0_10 = arith.constant 0 : index
    %c0_11 = arith.constant 0 : index
    %10 = vector.load %arg7[%c0_10, %c0_11] : memref<1x128xf32, #tpu.memory_space<vmem>>, vector<1x128xf32>
    %cst_12 = arith.constant 0.000000e+00 : f32
    %11 = vector.broadcast %cst_12 : f32 to vector<8x8xf32>
    %12 = vector.extract_strided_slice %7 {offsets = [0, 0], sizes = [8, 1], strides = [1, 1]} : vector<8x128xf32> to vector<8x1xf32>
    %13 = vector.extract_strided_slice %8 {offsets = [0, 0], sizes = [1, 8], strides = [1, 1]} : vector<128x8xf32> to vector<1x8xf32>
    %14 = vector.broadcast %12 : vector<8x1xf32> to vector<8x8xf32>
    %15 = vector.broadcast %13 : vector<1x8xf32> to vector<8x8xf32>
    %16 = arith.addf %14, %15 : vector<8x8xf32>
    %17 = vector.extract_strided_slice %9 {offsets = [0, 0], sizes = [1, 1], strides = [1, 1]} : vector<1x128xf32> to vector<1x1xf32>
    %18 = vector.broadcast %17 : vector<1x1xf32> to vector<8x8xf32>
    %19 = arith.mulf %18, %6 : vector<8x8xf32>
    %20 = arith.addf %16, %19 : vector<8x8xf32>
    %cst_13 = arith.constant 0.000000e+00 : f32
    %21 = vector.broadcast %cst_13 : f32 to vector<8x8xf32>
    %22 = arith.cmpf oge, %20, %21 : vector<8x8xf32>
    %cst_14 = arith.constant 2.000000e-01 : f32
    %23 = vector.broadcast %cst_14 : f32 to vector<8x8xf32>
    %24 = arith.mulf %23, %20 : vector<8x8xf32>
    %25 = arith.select %22, %20, %24 : vector<8x8xi1>, vector<8x8xf32>
    %26 = vector.extract_strided_slice %10 {offsets = [0, 0], sizes = [1, 1], strides = [1, 1]} : vector<1x128xf32> to vector<1x1xf32>
    %27 = vector.broadcast %26 : vector<1x1xf32> to vector<8x8xf32>
    %28 = arith.mulf %27, %25 : vector<8x8xf32>
    %29 = arith.addf %11, %28 : vector<8x8xf32>
    %30 = vector.extract_strided_slice %7 {offsets = [0, 1], sizes = [8, 1], strides = [1, 1]} : vector<8x128xf32> to vector<8x1xf32>
    %31 = vector.extract_strided_slice %8 {offsets = [1, 0], sizes = [1, 8], strides = [1, 1]} : vector<128x8xf32> to vector<1x8xf32>
    %32 = vector.broadcast %30 : vector<8x1xf32> to vector<8x8xf32>
    %33 = vector.broadcast %31 : vector<1x8xf32> to vector<8x8xf32>
    %34 = arith.addf %32, %33 : vector<8x8xf32>
    %35 = vector.extract_strided_slice %9 {offsets = [0, 1], sizes = [1, 1], strides = [1, 1]} : vector<1x128xf32> to vector<1x1xf32>
    %36 = vector.broadcast %35 : vector<1x1xf32> to vector<8x8xf32>
    %37 = arith.mulf %36, %6 : vector<8x8xf32>
    %38 = arith.addf %34, %37 : vector<8x8xf32>
    %cst_15 = arith.constant 0.000000e+00 : f32
    %39 = vector.broadcast %cst_15 : f32 to vector<8x8xf32>
    %40 = arith.cmpf oge, %38, %39 : vector<8x8xf32>
    %cst_16 = arith.constant 2.000000e-01 : f32
    %41 = vector.broadcast %cst_16 : f32 to vector<8x8xf32>
    %42 = arith.mulf %41, %38 : vector<8x8xf32>
    %43 = arith.select %40, %38, %42 : vector<8x8xi1>, vector<8x8xf32>
    %44 = vector.extract_strided_slice %10 {offsets = [0, 1], sizes = [1, 1], strides = [1, 1]} : vector<1x128xf32> to vector<1x1xf32>
    %45 = vector.broadcast %44 : vector<1x1xf32> to vector<8x8xf32>
    %46 = arith.mulf %45, %43 : vector<8x8xf32>
    %47 = arith.addf %29, %46 : vector<8x8xf32>
    %48 = vector.extract_strided_slice %7 {offsets = [0, 2], sizes = [8, 1], strides = [1, 1]} : vector<8x128xf32> to vector<8x1xf32>
    %49 = vector.extract_strided_slice %8 {offsets = [2, 0], sizes = [1, 8], strides = [1, 1]} : vector<128x8xf32> to vector<1x8xf32>
    %50 = vector.broadcast %48 : vector<8x1xf32> to vector<8x8xf32>
    %51 = vector.broadcast %49 : vector<1x8xf32> to vector<8x8xf32>
    %52 = arith.addf %50, %51 : vector<8x8xf32>
    %53 = vector.extract_strided_slice %9 {offsets = [0, 2], sizes = [1, 1], strides = [1, 1]} : vector<1x128xf32> to vector<1x1xf32>
    %54 = vector.broadcast %53 : vector<1x1xf32> to vector<8x8xf32>
    %55 = arith.mulf %54, %6 : vector<8x8xf32>
    %56 = arith.addf %52, %55 : vector<8x8xf32>
    %cst_17 = arith.constant 0.000000e+00 : f32
    %57 = vector.broadcast %cst_17 : f32 to vector<8x8xf32>
    %58 = arith.cmpf oge, %56, %57 : vector<8x8xf32>
    %cst_18 = arith.constant 2.000000e-01 : f32
    %59 = vector.broadcast %cst_18 : f32 to vector<8x8xf32>
    %60 = arith.mulf %59, %56 : vector<8x8xf32>
    %61 = arith.select %58, %56, %60 : vector<8x8xi1>, vector<8x8xf32>
    %62 = vector.extract_strided_slice %10 {offsets = [0, 2], sizes = [1, 1], strides = [1, 1]} : vector<1x128xf32> to vector<1x1xf32>
    %63 = vector.broadcast %62 : vector<1x1xf32> to vector<8x8xf32>
    %64 = arith.mulf %63, %61 : vector<8x8xf32>
    %65 = arith.addf %47, %64 : vector<8x8xf32>
    %66 = vector.extract_strided_slice %7 {offsets = [0, 3], sizes = [8, 1], strides = [1, 1]} : vector<8x128xf32> to vector<8x1xf32>
    %67 = vector.extract_strided_slice %8 {offsets = [3, 0], sizes = [1, 8], strides = [1, 1]} : vector<128x8xf32> to vector<1x8xf32>
    %68 = vector.broadcast %66 : vector<8x1xf32> to vector<8x8xf32>
    %69 = vector.broadcast %67 : vector<1x8xf32> to vector<8x8xf32>
    %70 = arith.addf %68, %69 : vector<8x8xf32>
    %71 = vector.extract_strided_slice %9 {offsets = [0, 3], sizes = [1, 1], strides = [1, 1]} : vector<1x128xf32> to vector<1x1xf32>
    %72 = vector.broadcast %71 : vector<1x1xf32> to vector<8x8xf32>
    %73 = arith.mulf %72, %6 : vector<8x8xf32>
    %74 = arith.addf %70, %73 : vector<8x8xf32>
    %cst_19 = arith.constant 0.000000e+00 : f32
    %75 = vector.broadcast %cst_19 : f32 to vector<8x8xf32>
    %76 = arith.cmpf oge, %74, %75 : vector<8x8xf32>
    %cst_20 = arith.constant 2.000000e-01 : f32
    %77 = vector.broadcast %cst_20 : f32 to vector<8x8xf32>
    %78 = arith.mulf %77, %74 : vector<8x8xf32>
    %79 = arith.select %76, %74, %78 : vector<8x8xi1>, vector<8x8xf32>
    %80 = vector.extract_strided_slice %10 {offsets = [0, 3], sizes = [1, 1], strides = [1, 1]} : vector<1x128xf32> to vector<1x1xf32>
    %81 = vector.broadcast %80 : vector<1x1xf32> to vector<8x8xf32>
    %82 = arith.mulf %81, %79 : vector<8x8xf32>
    %83 = arith.addf %65, %82 : vector<8x8xf32>
    %84 = vector.extract_strided_slice %7 {offsets = [0, 4], sizes = [8, 1], strides = [1, 1]} : vector<8x128xf32> to vector<8x1xf32>
    %85 = vector.extract_strided_slice %8 {offsets = [4, 0], sizes = [1, 8], strides = [1, 1]} : vector<128x8xf32> to vector<1x8xf32>
    %86 = vector.broadcast %84 : vector<8x1xf32> to vector<8x8xf32>
    %87 = vector.broadcast %85 : vector<1x8xf32> to vector<8x8xf32>
    %88 = arith.addf %86, %87 : vector<8x8xf32>
    %89 = vector.extract_strided_slice %9 {offsets = [0, 4], sizes = [1, 1], strides = [1, 1]} : vector<1x128xf32> to vector<1x1xf32>
    %90 = vector.broadcast %89 : vector<1x1xf32> to vector<8x8xf32>
    %91 = arith.mulf %90, %6 : vector<8x8xf32>
    %92 = arith.addf %88, %91 : vector<8x8xf32>
    %cst_21 = arith.constant 0.000000e+00 : f32
    %93 = vector.broadcast %cst_21 : f32 to vector<8x8xf32>
    %94 = arith.cmpf oge, %92, %93 : vector<8x8xf32>
    %cst_22 = arith.constant 2.000000e-01 : f32
    %95 = vector.broadcast %cst_22 : f32 to vector<8x8xf32>
    %96 = arith.mulf %95, %92 : vector<8x8xf32>
    %97 = arith.select %94, %92, %96 : vector<8x8xi1>, vector<8x8xf32>
    %98 = vector.extract_strided_slice %10 {offsets = [0, 4], sizes = [1, 1], strides = [1, 1]} : vector<1x128xf32> to vector<1x1xf32>
    %99 = vector.broadcast %98 : vector<1x1xf32> to vector<8x8xf32>
    %100 = arith.mulf %99, %97 : vector<8x8xf32>
    %101 = arith.addf %83, %100 : vector<8x8xf32>
    %102 = vector.extract_strided_slice %7 {offsets = [0, 5], sizes = [8, 1], strides = [1, 1]} : vector<8x128xf32> to vector<8x1xf32>
    %103 = vector.extract_strided_slice %8 {offsets = [5, 0], sizes = [1, 8], strides = [1, 1]} : vector<128x8xf32> to vector<1x8xf32>
    %104 = vector.broadcast %102 : vector<8x1xf32> to vector<8x8xf32>
    %105 = vector.broadcast %103 : vector<1x8xf32> to vector<8x8xf32>
    %106 = arith.addf %104, %105 : vector<8x8xf32>
    %107 = vector.extract_strided_slice %9 {offsets = [0, 5], sizes = [1, 1], strides = [1, 1]} : vector<1x128xf32> to vector<1x1xf32>
    %108 = vector.broadcast %107 : vector<1x1xf32> to vector<8x8xf32>
    %109 = arith.mulf %108, %6 : vector<8x8xf32>
    %110 = arith.addf %106, %109 : vector<8x8xf32>
    %cst_23 = arith.constant 0.000000e+00 : f32
    %111 = vector.broadcast %cst_23 : f32 to vector<8x8xf32>
    %112 = arith.cmpf oge, %110, %111 : vector<8x8xf32>
    %cst_24 = arith.constant 2.000000e-01 : f32
    %113 = vector.broadcast %cst_24 : f32 to vector<8x8xf32>
    %114 = arith.mulf %113, %110 : vector<8x8xf32>
    %115 = arith.select %112, %110, %114 : vector<8x8xi1>, vector<8x8xf32>
    %116 = vector.extract_strided_slice %10 {offsets = [0, 5], sizes = [1, 1], strides = [1, 1]} : vector<1x128xf32> to vector<1x1xf32>
    %117 = vector.broadcast %116 : vector<1x1xf32> to vector<8x8xf32>
    %118 = arith.mulf %117, %115 : vector<8x8xf32>
    %119 = arith.addf %101, %118 : vector<8x8xf32>
    %120 = vector.extract_strided_slice %7 {offsets = [0, 6], sizes = [8, 1], strides = [1, 1]} : vector<8x128xf32> to vector<8x1xf32>
    %121 = vector.extract_strided_slice %8 {offsets = [6, 0], sizes = [1, 8], strides = [1, 1]} : vector<128x8xf32> to vector<1x8xf32>
    %122 = vector.broadcast %120 : vector<8x1xf32> to vector<8x8xf32>
    %123 = vector.broadcast %121 : vector<1x8xf32> to vector<8x8xf32>
    %124 = arith.addf %122, %123 : vector<8x8xf32>
    %125 = vector.extract_strided_slice %9 {offsets = [0, 6], sizes = [1, 1], strides = [1, 1]} : vector<1x128xf32> to vector<1x1xf32>
    %126 = vector.broadcast %125 : vector<1x1xf32> to vector<8x8xf32>
    %127 = arith.mulf %126, %6 : vector<8x8xf32>
    %128 = arith.addf %124, %127 : vector<8x8xf32>
    %cst_25 = arith.constant 0.000000e+00 : f32
    %129 = vector.broadcast %cst_25 : f32 to vector<8x8xf32>
    %130 = arith.cmpf oge, %128, %129 : vector<8x8xf32>
    %cst_26 = arith.constant 2.000000e-01 : f32
    %131 = vector.broadcast %cst_26 : f32 to vector<8x8xf32>
    %132 = arith.mulf %131, %128 : vector<8x8xf32>
    %133 = arith.select %130, %128, %132 : vector<8x8xi1>, vector<8x8xf32>
    %134 = vector.extract_strided_slice %10 {offsets = [0, 6], sizes = [1, 1], strides = [1, 1]} : vector<1x128xf32> to vector<1x1xf32>
    %135 = vector.broadcast %134 : vector<1x1xf32> to vector<8x8xf32>
    %136 = arith.mulf %135, %133 : vector<8x8xf32>
    %137 = arith.addf %119, %136 : vector<8x8xf32>
    %138 = vector.extract_strided_slice %7 {offsets = [0, 7], sizes = [8, 1], strides = [1, 1]} : vector<8x128xf32> to vector<8x1xf32>
    %139 = vector.extract_strided_slice %8 {offsets = [7, 0], sizes = [1, 8], strides = [1, 1]} : vector<128x8xf32> to vector<1x8xf32>
    %140 = vector.broadcast %138 : vector<8x1xf32> to vector<8x8xf32>
    %141 = vector.broadcast %139 : vector<1x8xf32> to vector<8x8xf32>
    %142 = arith.addf %140, %141 : vector<8x8xf32>
    %143 = vector.extract_strided_slice %9 {offsets = [0, 7], sizes = [1, 1], strides = [1, 1]} : vector<1x128xf32> to vector<1x1xf32>
    %144 = vector.broadcast %143 : vector<1x1xf32> to vector<8x8xf32>
    %145 = arith.mulf %144, %6 : vector<8x8xf32>
    %146 = arith.addf %142, %145 : vector<8x8xf32>
    %cst_27 = arith.constant 0.000000e+00 : f32
    %147 = vector.broadcast %cst_27 : f32 to vector<8x8xf32>
    %148 = arith.cmpf oge, %146, %147 : vector<8x8xf32>
    %cst_28 = arith.constant 2.000000e-01 : f32
    %149 = vector.broadcast %cst_28 : f32 to vector<8x8xf32>
    %150 = arith.mulf %149, %146 : vector<8x8xf32>
    %151 = arith.select %148, %146, %150 : vector<8x8xi1>, vector<8x8xf32>
    %152 = vector.extract_strided_slice %10 {offsets = [0, 7], sizes = [1, 1], strides = [1, 1]} : vector<1x128xf32> to vector<1x1xf32>
    %153 = vector.broadcast %152 : vector<1x1xf32> to vector<8x8xf32>
    %154 = arith.mulf %153, %151 : vector<8x8xf32>
    %155 = arith.addf %137, %154 : vector<8x8xf32>
    %156 = vector.extract_strided_slice %7 {offsets = [0, 8], sizes = [8, 1], strides = [1, 1]} : vector<8x128xf32> to vector<8x1xf32>
    %157 = vector.extract_strided_slice %8 {offsets = [8, 0], sizes = [1, 8], strides = [1, 1]} : vector<128x8xf32> to vector<1x8xf32>
    %158 = vector.broadcast %156 : vector<8x1xf32> to vector<8x8xf32>
    %159 = vector.broadcast %157 : vector<1x8xf32> to vector<8x8xf32>
    %160 = arith.addf %158, %159 : vector<8x8xf32>
    %161 = vector.extract_strided_slice %9 {offsets = [0, 8], sizes = [1, 1], strides = [1, 1]} : vector<1x128xf32> to vector<1x1xf32>
    %162 = vector.broadcast %161 : vector<1x1xf32> to vector<8x8xf32>
    %163 = arith.mulf %162, %6 : vector<8x8xf32>
    %164 = arith.addf %160, %163 : vector<8x8xf32>
    %cst_29 = arith.constant 0.000000e+00 : f32
    %165 = vector.broadcast %cst_29 : f32 to vector<8x8xf32>
    %166 = arith.cmpf oge, %164, %165 : vector<8x8xf32>
    %cst_30 = arith.constant 2.000000e-01 : f32
    %167 = vector.broadcast %cst_30 : f32 to vector<8x8xf32>
    %168 = arith.mulf %167, %164 : vector<8x8xf32>
    %169 = arith.select %166, %164, %168 : vector<8x8xi1>, vector<8x8xf32>
    %170 = vector.extract_strided_slice %10 {offsets = [0, 8], sizes = [1, 1], strides = [1, 1]} : vector<1x128xf32> to vector<1x1xf32>
    %171 = vector.broadcast %170 : vector<1x1xf32> to vector<8x8xf32>
    %172 = arith.mulf %171, %169 : vector<8x8xf32>
    %173 = arith.addf %155, %172 : vector<8x8xf32>
    %174 = vector.extract_strided_slice %7 {offsets = [0, 9], sizes = [8, 1], strides = [1, 1]} : vector<8x128xf32> to vector<8x1xf32>
    %175 = vector.extract_strided_slice %8 {offsets = [9, 0], sizes = [1, 8], strides = [1, 1]} : vector<128x8xf32> to vector<1x8xf32>
    %176 = vector.broadcast %174 : vector<8x1xf32> to vector<8x8xf32>
    %177 = vector.broadcast %175 : vector<1x8xf32> to vector<8x8xf32>
    %178 = arith.addf %176, %177 : vector<8x8xf32>
    %179 = vector.extract_strided_slice %9 {offsets = [0, 9], sizes = [1, 1], strides = [1, 1]} : vector<1x128xf32> to vector<1x1xf32>
    %180 = vector.broadcast %179 : vector<1x1xf32> to vector<8x8xf32>
    %181 = arith.mulf %180, %6 : vector<8x8xf32>
    %182 = arith.addf %178, %181 : vector<8x8xf32>
    %cst_31 = arith.constant 0.000000e+00 : f32
    %183 = vector.broadcast %cst_31 : f32 to vector<8x8xf32>
    %184 = arith.cmpf oge, %182, %183 : vector<8x8xf32>
    %cst_32 = arith.constant 2.000000e-01 : f32
    %185 = vector.broadcast %cst_32 : f32 to vector<8x8xf32>
    %186 = arith.mulf %185, %182 : vector<8x8xf32>
    %187 = arith.select %184, %182, %186 : vector<8x8xi1>, vector<8x8xf32>
    %188 = vector.extract_strided_slice %10 {offsets = [0, 9], sizes = [1, 1], strides = [1, 1]} : vector<1x128xf32> to vector<1x1xf32>
    %189 = vector.broadcast %188 : vector<1x1xf32> to vector<8x8xf32>
    %190 = arith.mulf %189, %187 : vector<8x8xf32>
    %191 = arith.addf %173, %190 : vector<8x8xf32>
    %192 = vector.extract_strided_slice %7 {offsets = [0, 10], sizes = [8, 1], strides = [1, 1]} : vector<8x128xf32> to vector<8x1xf32>
    %193 = vector.extract_strided_slice %8 {offsets = [10, 0], sizes = [1, 8], strides = [1, 1]} : vector<128x8xf32> to vector<1x8xf32>
    %194 = vector.broadcast %192 : vector<8x1xf32> to vector<8x8xf32>
    %195 = vector.broadcast %193 : vector<1x8xf32> to vector<8x8xf32>
    %196 = arith.addf %194, %195 : vector<8x8xf32>
    %197 = vector.extract_strided_slice %9 {offsets = [0, 10], sizes = [1, 1], strides = [1, 1]} : vector<1x128xf32> to vector<1x1xf32>
    %198 = vector.broadcast %197 : vector<1x1xf32> to vector<8x8xf32>
    %199 = arith.mulf %198, %6 : vector<8x8xf32>
    %200 = arith.addf %196, %199 : vector<8x8xf32>
    %cst_33 = arith.constant 0.000000e+00 : f32
    %201 = vector.broadcast %cst_33 : f32 to vector<8x8xf32>
    %202 = arith.cmpf oge, %200, %201 : vector<8x8xf32>
    %cst_34 = arith.constant 2.000000e-01 : f32
    %203 = vector.broadcast %cst_34 : f32 to vector<8x8xf32>
    %204 = arith.mulf %203, %200 : vector<8x8xf32>
    %205 = arith.select %202, %200, %204 : vector<8x8xi1>, vector<8x8xf32>
    %206 = vector.extract_strided_slice %10 {offsets = [0, 10], sizes = [1, 1], strides = [1, 1]} : vector<1x128xf32> to vector<1x1xf32>
    %207 = vector.broadcast %206 : vector<1x1xf32> to vector<8x8xf32>
    %208 = arith.mulf %207, %205 : vector<8x8xf32>
    %209 = arith.addf %191, %208 : vector<8x8xf32>
    %210 = vector.extract_strided_slice %7 {offsets = [0, 11], sizes = [8, 1], strides = [1, 1]} : vector<8x128xf32> to vector<8x1xf32>
    %211 = vector.extract_strided_slice %8 {offsets = [11, 0], sizes = [1, 8], strides = [1, 1]} : vector<128x8xf32> to vector<1x8xf32>
    %212 = vector.broadcast %210 : vector<8x1xf32> to vector<8x8xf32>
    %213 = vector.broadcast %211 : vector<1x8xf32> to vector<8x8xf32>
    %214 = arith.addf %212, %213 : vector<8x8xf32>
    %215 = vector.extract_strided_slice %9 {offsets = [0, 11], sizes = [1, 1], strides = [1, 1]} : vector<1x128xf32> to vector<1x1xf32>
    %216 = vector.broadcast %215 : vector<1x1xf32> to vector<8x8xf32>
    %217 = arith.mulf %216, %6 : vector<8x8xf32>
    %218 = arith.addf %214, %217 : vector<8x8xf32>
    %cst_35 = arith.constant 0.000000e+00 : f32
    %219 = vector.broadcast %cst_35 : f32 to vector<8x8xf32>
    %220 = arith.cmpf oge, %218, %219 : vector<8x8xf32>
    %cst_36 = arith.constant 2.000000e-01 : f32
    %221 = vector.broadcast %cst_36 : f32 to vector<8x8xf32>
    %222 = arith.mulf %221, %218 : vector<8x8xf32>
    %223 = arith.select %220, %218, %222 : vector<8x8xi1>, vector<8x8xf32>
    %224 = vector.extract_strided_slice %10 {offsets = [0, 11], sizes = [1, 1], strides = [1, 1]} : vector<1x128xf32> to vector<1x1xf32>
    %225 = vector.broadcast %224 : vector<1x1xf32> to vector<8x8xf32>
    %226 = arith.mulf %225, %223 : vector<8x8xf32>
    %227 = arith.addf %209, %226 : vector<8x8xf32>
    %228 = vector.extract_strided_slice %7 {offsets = [0, 12], sizes = [8, 1], strides = [1, 1]} : vector<8x128xf32> to vector<8x1xf32>
    %229 = vector.extract_strided_slice %8 {offsets = [12, 0], sizes = [1, 8], strides = [1, 1]} : vector<128x8xf32> to vector<1x8xf32>
    %230 = vector.broadcast %228 : vector<8x1xf32> to vector<8x8xf32>
    %231 = vector.broadcast %229 : vector<1x8xf32> to vector<8x8xf32>
    %232 = arith.addf %230, %231 : vector<8x8xf32>
    %233 = vector.extract_strided_slice %9 {offsets = [0, 12], sizes = [1, 1], strides = [1, 1]} : vector<1x128xf32> to vector<1x1xf32>
    %234 = vector.broadcast %233 : vector<1x1xf32> to vector<8x8xf32>
    %235 = arith.mulf %234, %6 : vector<8x8xf32>
    %236 = arith.addf %232, %235 : vector<8x8xf32>
    %cst_37 = arith.constant 0.000000e+00 : f32
    %237 = vector.broadcast %cst_37 : f32 to vector<8x8xf32>
    %238 = arith.cmpf oge, %236, %237 : vector<8x8xf32>
    %cst_38 = arith.constant 2.000000e-01 : f32
    %239 = vector.broadcast %cst_38 : f32 to vector<8x8xf32>
    %240 = arith.mulf %239, %236 : vector<8x8xf32>
    %241 = arith.select %238, %236, %240 : vector<8x8xi1>, vector<8x8xf32>
    %242 = vector.extract_strided_slice %10 {offsets = [0, 12], sizes = [1, 1], strides = [1, 1]} : vector<1x128xf32> to vector<1x1xf32>
    %243 = vector.broadcast %242 : vector<1x1xf32> to vector<8x8xf32>
    %244 = arith.mulf %243, %241 : vector<8x8xf32>
    %245 = arith.addf %227, %244 : vector<8x8xf32>
    %246 = vector.extract_strided_slice %7 {offsets = [0, 13], sizes = [8, 1], strides = [1, 1]} : vector<8x128xf32> to vector<8x1xf32>
    %247 = vector.extract_strided_slice %8 {offsets = [13, 0], sizes = [1, 8], strides = [1, 1]} : vector<128x8xf32> to vector<1x8xf32>
    %248 = vector.broadcast %246 : vector<8x1xf32> to vector<8x8xf32>
    %249 = vector.broadcast %247 : vector<1x8xf32> to vector<8x8xf32>
    %250 = arith.addf %248, %249 : vector<8x8xf32>
    %251 = vector.extract_strided_slice %9 {offsets = [0, 13], sizes = [1, 1], strides = [1, 1]} : vector<1x128xf32> to vector<1x1xf32>
    %252 = vector.broadcast %251 : vector<1x1xf32> to vector<8x8xf32>
    %253 = arith.mulf %252, %6 : vector<8x8xf32>
    %254 = arith.addf %250, %253 : vector<8x8xf32>
    %cst_39 = arith.constant 0.000000e+00 : f32
    %255 = vector.broadcast %cst_39 : f32 to vector<8x8xf32>
    %256 = arith.cmpf oge, %254, %255 : vector<8x8xf32>
    %cst_40 = arith.constant 2.000000e-01 : f32
    %257 = vector.broadcast %cst_40 : f32 to vector<8x8xf32>
    %258 = arith.mulf %257, %254 : vector<8x8xf32>
    %259 = arith.select %256, %254, %258 : vector<8x8xi1>, vector<8x8xf32>
    %260 = vector.extract_strided_slice %10 {offsets = [0, 13], sizes = [1, 1], strides = [1, 1]} : vector<1x128xf32> to vector<1x1xf32>
    %261 = vector.broadcast %260 : vector<1x1xf32> to vector<8x8xf32>
    %262 = arith.mulf %261, %259 : vector<8x8xf32>
    %263 = arith.addf %245, %262 : vector<8x8xf32>
    %264 = vector.extract_strided_slice %7 {offsets = [0, 14], sizes = [8, 1], strides = [1, 1]} : vector<8x128xf32> to vector<8x1xf32>
    %265 = vector.extract_strided_slice %8 {offsets = [14, 0], sizes = [1, 8], strides = [1, 1]} : vector<128x8xf32> to vector<1x8xf32>
    %266 = vector.broadcast %264 : vector<8x1xf32> to vector<8x8xf32>
    %267 = vector.broadcast %265 : vector<1x8xf32> to vector<8x8xf32>
    %268 = arith.addf %266, %267 : vector<8x8xf32>
    %269 = vector.extract_strided_slice %9 {offsets = [0, 14], sizes = [1, 1], strides = [1, 1]} : vector<1x128xf32> to vector<1x1xf32>
    %270 = vector.broadcast %269 : vector<1x1xf32> to vector<8x8xf32>
    %271 = arith.mulf %270, %6 : vector<8x8xf32>
    %272 = arith.addf %268, %271 : vector<8x8xf32>
    %cst_41 = arith.constant 0.000000e+00 : f32
    %273 = vector.broadcast %cst_41 : f32 to vector<8x8xf32>
    %274 = arith.cmpf oge, %272, %273 : vector<8x8xf32>
    %cst_42 = arith.constant 2.000000e-01 : f32
    %275 = vector.broadcast %cst_42 : f32 to vector<8x8xf32>
    %276 = arith.mulf %275, %272 : vector<8x8xf32>
    %277 = arith.select %274, %272, %276 : vector<8x8xi1>, vector<8x8xf32>
    %278 = vector.extract_strided_slice %10 {offsets = [0, 14], sizes = [1, 1], strides = [1, 1]} : vector<1x128xf32> to vector<1x1xf32>
    %279 = vector.broadcast %278 : vector<1x1xf32> to vector<8x8xf32>
    %280 = arith.mulf %279, %277 : vector<8x8xf32>
    %281 = arith.addf %263, %280 : vector<8x8xf32>
    %282 = vector.extract_strided_slice %7 {offsets = [0, 15], sizes = [8, 1], strides = [1, 1]} : vector<8x128xf32> to vector<8x1xf32>
    %283 = vector.extract_strided_slice %8 {offsets = [15, 0], sizes = [1, 8], strides = [1, 1]} : vector<128x8xf32> to vector<1x8xf32>
    %284 = vector.broadcast %282 : vector<8x1xf32> to vector<8x8xf32>
    %285 = vector.broadcast %283 : vector<1x8xf32> to vector<8x8xf32>
    %286 = arith.addf %284, %285 : vector<8x8xf32>
    %287 = vector.extract_strided_slice %9 {offsets = [0, 15], sizes = [1, 1], strides = [1, 1]} : vector<1x128xf32> to vector<1x1xf32>
    %288 = vector.broadcast %287 : vector<1x1xf32> to vector<8x8xf32>
    %289 = arith.mulf %288, %6 : vector<8x8xf32>
    %290 = arith.addf %286, %289 : vector<8x8xf32>
    %cst_43 = arith.constant 0.000000e+00 : f32
    %291 = vector.broadcast %cst_43 : f32 to vector<8x8xf32>
    %292 = arith.cmpf oge, %290, %291 : vector<8x8xf32>
    %cst_44 = arith.constant 2.000000e-01 : f32
    %293 = vector.broadcast %cst_44 : f32 to vector<8x8xf32>
    %294 = arith.mulf %293, %290 : vector<8x8xf32>
    %295 = arith.select %292, %290, %294 : vector<8x8xi1>, vector<8x8xf32>
    %296 = vector.extract_strided_slice %10 {offsets = [0, 15], sizes = [1, 1], strides = [1, 1]} : vector<1x128xf32> to vector<1x1xf32>
    %297 = vector.broadcast %296 : vector<1x1xf32> to vector<8x8xf32>
    %298 = arith.mulf %297, %295 : vector<8x8xf32>
    %299 = arith.addf %281, %298 : vector<8x8xf32>
    %300 = vector.extract_strided_slice %7 {offsets = [0, 16], sizes = [8, 1], strides = [1, 1]} : vector<8x128xf32> to vector<8x1xf32>
    %301 = vector.extract_strided_slice %8 {offsets = [16, 0], sizes = [1, 8], strides = [1, 1]} : vector<128x8xf32> to vector<1x8xf32>
    %302 = vector.broadcast %300 : vector<8x1xf32> to vector<8x8xf32>
    %303 = vector.broadcast %301 : vector<1x8xf32> to vector<8x8xf32>
    %304 = arith.addf %302, %303 : vector<8x8xf32>
    %305 = vector.extract_strided_slice %9 {offsets = [0, 16], sizes = [1, 1], strides = [1, 1]} : vector<1x128xf32> to vector<1x1xf32>
    %306 = vector.broadcast %305 : vector<1x1xf32> to vector<8x8xf32>
    %307 = arith.mulf %306, %6 : vector<8x8xf32>
    %308 = arith.addf %304, %307 : vector<8x8xf32>
    %cst_45 = arith.constant 0.000000e+00 : f32
    %309 = vector.broadcast %cst_45 : f32 to vector<8x8xf32>
    %310 = arith.cmpf oge, %308, %309 : vector<8x8xf32>
    %cst_46 = arith.constant 2.000000e-01 : f32
    %311 = vector.broadcast %cst_46 : f32 to vector<8x8xf32>
    %312 = arith.mulf %311, %308 : vector<8x8xf32>
    %313 = arith.select %310, %308, %312 : vector<8x8xi1>, vector<8x8xf32>
    %314 = vector.extract_strided_slice %10 {offsets = [0, 16], sizes = [1, 1], strides = [1, 1]} : vector<1x128xf32> to vector<1x1xf32>
    %315 = vector.broadcast %314 : vector<1x1xf32> to vector<8x8xf32>
    %316 = arith.mulf %315, %313 : vector<8x8xf32>
    %317 = arith.addf %299, %316 : vector<8x8xf32>
    %318 = vector.extract_strided_slice %7 {offsets = [0, 17], sizes = [8, 1], strides = [1, 1]} : vector<8x128xf32> to vector<8x1xf32>
    %319 = vector.extract_strided_slice %8 {offsets = [17, 0], sizes = [1, 8], strides = [1, 1]} : vector<128x8xf32> to vector<1x8xf32>
    %320 = vector.broadcast %318 : vector<8x1xf32> to vector<8x8xf32>
    %321 = vector.broadcast %319 : vector<1x8xf32> to vector<8x8xf32>
    %322 = arith.addf %320, %321 : vector<8x8xf32>
    %323 = vector.extract_strided_slice %9 {offsets = [0, 17], sizes = [1, 1], strides = [1, 1]} : vector<1x128xf32> to vector<1x1xf32>
    %324 = vector.broadcast %323 : vector<1x1xf32> to vector<8x8xf32>
    %325 = arith.mulf %324, %6 : vector<8x8xf32>
    %326 = arith.addf %322, %325 : vector<8x8xf32>
    %cst_47 = arith.constant 0.000000e+00 : f32
    %327 = vector.broadcast %cst_47 : f32 to vector<8x8xf32>
    %328 = arith.cmpf oge, %326, %327 : vector<8x8xf32>
    %cst_48 = arith.constant 2.000000e-01 : f32
    %329 = vector.broadcast %cst_48 : f32 to vector<8x8xf32>
    %330 = arith.mulf %329, %326 : vector<8x8xf32>
    %331 = arith.select %328, %326, %330 : vector<8x8xi1>, vector<8x8xf32>
    %332 = vector.extract_strided_slice %10 {offsets = [0, 17], sizes = [1, 1], strides = [1, 1]} : vector<1x128xf32> to vector<1x1xf32>
    %333 = vector.broadcast %332 : vector<1x1xf32> to vector<8x8xf32>
    %334 = arith.mulf %333, %331 : vector<8x8xf32>
    %335 = arith.addf %317, %334 : vector<8x8xf32>
    %336 = vector.extract_strided_slice %7 {offsets = [0, 18], sizes = [8, 1], strides = [1, 1]} : vector<8x128xf32> to vector<8x1xf32>
    %337 = vector.extract_strided_slice %8 {offsets = [18, 0], sizes = [1, 8], strides = [1, 1]} : vector<128x8xf32> to vector<1x8xf32>
    %338 = vector.broadcast %336 : vector<8x1xf32> to vector<8x8xf32>
    %339 = vector.broadcast %337 : vector<1x8xf32> to vector<8x8xf32>
    %340 = arith.addf %338, %339 : vector<8x8xf32>
    %341 = vector.extract_strided_slice %9 {offsets = [0, 18], sizes = [1, 1], strides = [1, 1]} : vector<1x128xf32> to vector<1x1xf32>
    %342 = vector.broadcast %341 : vector<1x1xf32> to vector<8x8xf32>
    %343 = arith.mulf %342, %6 : vector<8x8xf32>
    %344 = arith.addf %340, %343 : vector<8x8xf32>
    %cst_49 = arith.constant 0.000000e+00 : f32
    %345 = vector.broadcast %cst_49 : f32 to vector<8x8xf32>
    %346 = arith.cmpf oge, %344, %345 : vector<8x8xf32>
    %cst_50 = arith.constant 2.000000e-01 : f32
    %347 = vector.broadcast %cst_50 : f32 to vector<8x8xf32>
    %348 = arith.mulf %347, %344 : vector<8x8xf32>
    %349 = arith.select %346, %344, %348 : vector<8x8xi1>, vector<8x8xf32>
    %350 = vector.extract_strided_slice %10 {offsets = [0, 18], sizes = [1, 1], strides = [1, 1]} : vector<1x128xf32> to vector<1x1xf32>
    %351 = vector.broadcast %350 : vector<1x1xf32> to vector<8x8xf32>
    %352 = arith.mulf %351, %349 : vector<8x8xf32>
    %353 = arith.addf %335, %352 : vector<8x8xf32>
    %354 = vector.extract_strided_slice %7 {offsets = [0, 19], sizes = [8, 1], strides = [1, 1]} : vector<8x128xf32> to vector<8x1xf32>
    %355 = vector.extract_strided_slice %8 {offsets = [19, 0], sizes = [1, 8], strides = [1, 1]} : vector<128x8xf32> to vector<1x8xf32>
    %356 = vector.broadcast %354 : vector<8x1xf32> to vector<8x8xf32>
    %357 = vector.broadcast %355 : vector<1x8xf32> to vector<8x8xf32>
    %358 = arith.addf %356, %357 : vector<8x8xf32>
    %359 = vector.extract_strided_slice %9 {offsets = [0, 19], sizes = [1, 1], strides = [1, 1]} : vector<1x128xf32> to vector<1x1xf32>
    %360 = vector.broadcast %359 : vector<1x1xf32> to vector<8x8xf32>
    %361 = arith.mulf %360, %6 : vector<8x8xf32>
    %362 = arith.addf %358, %361 : vector<8x8xf32>
    %cst_51 = arith.constant 0.000000e+00 : f32
    %363 = vector.broadcast %cst_51 : f32 to vector<8x8xf32>
    %364 = arith.cmpf oge, %362, %363 : vector<8x8xf32>
    %cst_52 = arith.constant 2.000000e-01 : f32
    %365 = vector.broadcast %cst_52 : f32 to vector<8x8xf32>
    %366 = arith.mulf %365, %362 : vector<8x8xf32>
    %367 = arith.select %364, %362, %366 : vector<8x8xi1>, vector<8x8xf32>
    %368 = vector.extract_strided_slice %10 {offsets = [0, 19], sizes = [1, 1], strides = [1, 1]} : vector<1x128xf32> to vector<1x1xf32>
    %369 = vector.broadcast %368 : vector<1x1xf32> to vector<8x8xf32>
    %370 = arith.mulf %369, %367 : vector<8x8xf32>
    %371 = arith.addf %353, %370 : vector<8x8xf32>
    %372 = vector.extract_strided_slice %7 {offsets = [0, 20], sizes = [8, 1], strides = [1, 1]} : vector<8x128xf32> to vector<8x1xf32>
    %373 = vector.extract_strided_slice %8 {offsets = [20, 0], sizes = [1, 8], strides = [1, 1]} : vector<128x8xf32> to vector<1x8xf32>
    %374 = vector.broadcast %372 : vector<8x1xf32> to vector<8x8xf32>
    %375 = vector.broadcast %373 : vector<1x8xf32> to vector<8x8xf32>
    %376 = arith.addf %374, %375 : vector<8x8xf32>
    %377 = vector.extract_strided_slice %9 {offsets = [0, 20], sizes = [1, 1], strides = [1, 1]} : vector<1x128xf32> to vector<1x1xf32>
    %378 = vector.broadcast %377 : vector<1x1xf32> to vector<8x8xf32>
    %379 = arith.mulf %378, %6 : vector<8x8xf32>
    %380 = arith.addf %376, %379 : vector<8x8xf32>
    %cst_53 = arith.constant 0.000000e+00 : f32
    %381 = vector.broadcast %cst_53 : f32 to vector<8x8xf32>
    %382 = arith.cmpf oge, %380, %381 : vector<8x8xf32>
    %cst_54 = arith.constant 2.000000e-01 : f32
    %383 = vector.broadcast %cst_54 : f32 to vector<8x8xf32>
    %384 = arith.mulf %383, %380 : vector<8x8xf32>
    %385 = arith.select %382, %380, %384 : vector<8x8xi1>, vector<8x8xf32>
    %386 = vector.extract_strided_slice %10 {offsets = [0, 20], sizes = [1, 1], strides = [1, 1]} : vector<1x128xf32> to vector<1x1xf32>
    %387 = vector.broadcast %386 : vector<1x1xf32> to vector<8x8xf32>
    %388 = arith.mulf %387, %385 : vector<8x8xf32>
    %389 = arith.addf %371, %388 : vector<8x8xf32>
    %390 = vector.extract_strided_slice %7 {offsets = [0, 21], sizes = [8, 1], strides = [1, 1]} : vector<8x128xf32> to vector<8x1xf32>
    %391 = vector.extract_strided_slice %8 {offsets = [21, 0], sizes = [1, 8], strides = [1, 1]} : vector<128x8xf32> to vector<1x8xf32>
    %392 = vector.broadcast %390 : vector<8x1xf32> to vector<8x8xf32>
    %393 = vector.broadcast %391 : vector<1x8xf32> to vector<8x8xf32>
    %394 = arith.addf %392, %393 : vector<8x8xf32>
    %395 = vector.extract_strided_slice %9 {offsets = [0, 21], sizes = [1, 1], strides = [1, 1]} : vector<1x128xf32> to vector<1x1xf32>
    %396 = vector.broadcast %395 : vector<1x1xf32> to vector<8x8xf32>
    %397 = arith.mulf %396, %6 : vector<8x8xf32>
    %398 = arith.addf %394, %397 : vector<8x8xf32>
    %cst_55 = arith.constant 0.000000e+00 : f32
    %399 = vector.broadcast %cst_55 : f32 to vector<8x8xf32>
    %400 = arith.cmpf oge, %398, %399 : vector<8x8xf32>
    %cst_56 = arith.constant 2.000000e-01 : f32
    %401 = vector.broadcast %cst_56 : f32 to vector<8x8xf32>
    %402 = arith.mulf %401, %398 : vector<8x8xf32>
    %403 = arith.select %400, %398, %402 : vector<8x8xi1>, vector<8x8xf32>
    %404 = vector.extract_strided_slice %10 {offsets = [0, 21], sizes = [1, 1], strides = [1, 1]} : vector<1x128xf32> to vector<1x1xf32>
    %405 = vector.broadcast %404 : vector<1x1xf32> to vector<8x8xf32>
    %406 = arith.mulf %405, %403 : vector<8x8xf32>
    %407 = arith.addf %389, %406 : vector<8x8xf32>
    %408 = vector.extract_strided_slice %7 {offsets = [0, 22], sizes = [8, 1], strides = [1, 1]} : vector<8x128xf32> to vector<8x1xf32>
    %409 = vector.extract_strided_slice %8 {offsets = [22, 0], sizes = [1, 8], strides = [1, 1]} : vector<128x8xf32> to vector<1x8xf32>
    %410 = vector.broadcast %408 : vector<8x1xf32> to vector<8x8xf32>
    %411 = vector.broadcast %409 : vector<1x8xf32> to vector<8x8xf32>
    %412 = arith.addf %410, %411 : vector<8x8xf32>
    %413 = vector.extract_strided_slice %9 {offsets = [0, 22], sizes = [1, 1], strides = [1, 1]} : vector<1x128xf32> to vector<1x1xf32>
    %414 = vector.broadcast %413 : vector<1x1xf32> to vector<8x8xf32>
    %415 = arith.mulf %414, %6 : vector<8x8xf32>
    %416 = arith.addf %412, %415 : vector<8x8xf32>
    %cst_57 = arith.constant 0.000000e+00 : f32
    %417 = vector.broadcast %cst_57 : f32 to vector<8x8xf32>
    %418 = arith.cmpf oge, %416, %417 : vector<8x8xf32>
    %cst_58 = arith.constant 2.000000e-01 : f32
    %419 = vector.broadcast %cst_58 : f32 to vector<8x8xf32>
    %420 = arith.mulf %419, %416 : vector<8x8xf32>
    %421 = arith.select %418, %416, %420 : vector<8x8xi1>, vector<8x8xf32>
    %422 = vector.extract_strided_slice %10 {offsets = [0, 22], sizes = [1, 1], strides = [1, 1]} : vector<1x128xf32> to vector<1x1xf32>
    %423 = vector.broadcast %422 : vector<1x1xf32> to vector<8x8xf32>
    %424 = arith.mulf %423, %421 : vector<8x8xf32>
    %425 = arith.addf %407, %424 : vector<8x8xf32>
    %426 = vector.extract_strided_slice %7 {offsets = [0, 23], sizes = [8, 1], strides = [1, 1]} : vector<8x128xf32> to vector<8x1xf32>
    %427 = vector.extract_strided_slice %8 {offsets = [23, 0], sizes = [1, 8], strides = [1, 1]} : vector<128x8xf32> to vector<1x8xf32>
    %428 = vector.broadcast %426 : vector<8x1xf32> to vector<8x8xf32>
    %429 = vector.broadcast %427 : vector<1x8xf32> to vector<8x8xf32>
    %430 = arith.addf %428, %429 : vector<8x8xf32>
    %431 = vector.extract_strided_slice %9 {offsets = [0, 23], sizes = [1, 1], strides = [1, 1]} : vector<1x128xf32> to vector<1x1xf32>
    %432 = vector.broadcast %431 : vector<1x1xf32> to vector<8x8xf32>
    %433 = arith.mulf %432, %6 : vector<8x8xf32>
    %434 = arith.addf %430, %433 : vector<8x8xf32>
    %cst_59 = arith.constant 0.000000e+00 : f32
    %435 = vector.broadcast %cst_59 : f32 to vector<8x8xf32>
    %436 = arith.cmpf oge, %434, %435 : vector<8x8xf32>
    %cst_60 = arith.constant 2.000000e-01 : f32
    %437 = vector.broadcast %cst_60 : f32 to vector<8x8xf32>
    %438 = arith.mulf %437, %434 : vector<8x8xf32>
    %439 = arith.select %436, %434, %438 : vector<8x8xi1>, vector<8x8xf32>
    %440 = vector.extract_strided_slice %10 {offsets = [0, 23], sizes = [1, 1], strides = [1, 1]} : vector<1x128xf32> to vector<1x1xf32>
    %441 = vector.broadcast %440 : vector<1x1xf32> to vector<8x8xf32>
    %442 = arith.mulf %441, %439 : vector<8x8xf32>
    %443 = arith.addf %425, %442 : vector<8x8xf32>
    %444 = vector.extract_strided_slice %7 {offsets = [0, 24], sizes = [8, 1], strides = [1, 1]} : vector<8x128xf32> to vector<8x1xf32>
    %445 = vector.extract_strided_slice %8 {offsets = [24, 0], sizes = [1, 8], strides = [1, 1]} : vector<128x8xf32> to vector<1x8xf32>
    %446 = vector.broadcast %444 : vector<8x1xf32> to vector<8x8xf32>
    %447 = vector.broadcast %445 : vector<1x8xf32> to vector<8x8xf32>
    %448 = arith.addf %446, %447 : vector<8x8xf32>
    %449 = vector.extract_strided_slice %9 {offsets = [0, 24], sizes = [1, 1], strides = [1, 1]} : vector<1x128xf32> to vector<1x1xf32>
    %450 = vector.broadcast %449 : vector<1x1xf32> to vector<8x8xf32>
    %451 = arith.mulf %450, %6 : vector<8x8xf32>
    %452 = arith.addf %448, %451 : vector<8x8xf32>
    %cst_61 = arith.constant 0.000000e+00 : f32
    %453 = vector.broadcast %cst_61 : f32 to vector<8x8xf32>
    %454 = arith.cmpf oge, %452, %453 : vector<8x8xf32>
    %cst_62 = arith.constant 2.000000e-01 : f32
    %455 = vector.broadcast %cst_62 : f32 to vector<8x8xf32>
    %456 = arith.mulf %455, %452 : vector<8x8xf32>
    %457 = arith.select %454, %452, %456 : vector<8x8xi1>, vector<8x8xf32>
    %458 = vector.extract_strided_slice %10 {offsets = [0, 24], sizes = [1, 1], strides = [1, 1]} : vector<1x128xf32> to vector<1x1xf32>
    %459 = vector.broadcast %458 : vector<1x1xf32> to vector<8x8xf32>
    %460 = arith.mulf %459, %457 : vector<8x8xf32>
    %461 = arith.addf %443, %460 : vector<8x8xf32>
    %462 = vector.extract_strided_slice %7 {offsets = [0, 25], sizes = [8, 1], strides = [1, 1]} : vector<8x128xf32> to vector<8x1xf32>
    %463 = vector.extract_strided_slice %8 {offsets = [25, 0], sizes = [1, 8], strides = [1, 1]} : vector<128x8xf32> to vector<1x8xf32>
    %464 = vector.broadcast %462 : vector<8x1xf32> to vector<8x8xf32>
    %465 = vector.broadcast %463 : vector<1x8xf32> to vector<8x8xf32>
    %466 = arith.addf %464, %465 : vector<8x8xf32>
    %467 = vector.extract_strided_slice %9 {offsets = [0, 25], sizes = [1, 1], strides = [1, 1]} : vector<1x128xf32> to vector<1x1xf32>
    %468 = vector.broadcast %467 : vector<1x1xf32> to vector<8x8xf32>
    %469 = arith.mulf %468, %6 : vector<8x8xf32>
    %470 = arith.addf %466, %469 : vector<8x8xf32>
    %cst_63 = arith.constant 0.000000e+00 : f32
    %471 = vector.broadcast %cst_63 : f32 to vector<8x8xf32>
    %472 = arith.cmpf oge, %470, %471 : vector<8x8xf32>
    %cst_64 = arith.constant 2.000000e-01 : f32
    %473 = vector.broadcast %cst_64 : f32 to vector<8x8xf32>
    %474 = arith.mulf %473, %470 : vector<8x8xf32>
    %475 = arith.select %472, %470, %474 : vector<8x8xi1>, vector<8x8xf32>
    %476 = vector.extract_strided_slice %10 {offsets = [0, 25], sizes = [1, 1], strides = [1, 1]} : vector<1x128xf32> to vector<1x1xf32>
    %477 = vector.broadcast %476 : vector<1x1xf32> to vector<8x8xf32>
    %478 = arith.mulf %477, %475 : vector<8x8xf32>
    %479 = arith.addf %461, %478 : vector<8x8xf32>
    %480 = vector.extract_strided_slice %7 {offsets = [0, 26], sizes = [8, 1], strides = [1, 1]} : vector<8x128xf32> to vector<8x1xf32>
    %481 = vector.extract_strided_slice %8 {offsets = [26, 0], sizes = [1, 8], strides = [1, 1]} : vector<128x8xf32> to vector<1x8xf32>
    %482 = vector.broadcast %480 : vector<8x1xf32> to vector<8x8xf32>
    %483 = vector.broadcast %481 : vector<1x8xf32> to vector<8x8xf32>
    %484 = arith.addf %482, %483 : vector<8x8xf32>
    %485 = vector.extract_strided_slice %9 {offsets = [0, 26], sizes = [1, 1], strides = [1, 1]} : vector<1x128xf32> to vector<1x1xf32>
    %486 = vector.broadcast %485 : vector<1x1xf32> to vector<8x8xf32>
    %487 = arith.mulf %486, %6 : vector<8x8xf32>
    %488 = arith.addf %484, %487 : vector<8x8xf32>
    %cst_65 = arith.constant 0.000000e+00 : f32
    %489 = vector.broadcast %cst_65 : f32 to vector<8x8xf32>
    %490 = arith.cmpf oge, %488, %489 : vector<8x8xf32>
    %cst_66 = arith.constant 2.000000e-01 : f32
    %491 = vector.broadcast %cst_66 : f32 to vector<8x8xf32>
    %492 = arith.mulf %491, %488 : vector<8x8xf32>
    %493 = arith.select %490, %488, %492 : vector<8x8xi1>, vector<8x8xf32>
    %494 = vector.extract_strided_slice %10 {offsets = [0, 26], sizes = [1, 1], strides = [1, 1]} : vector<1x128xf32> to vector<1x1xf32>
    %495 = vector.broadcast %494 : vector<1x1xf32> to vector<8x8xf32>
    %496 = arith.mulf %495, %493 : vector<8x8xf32>
    %497 = arith.addf %479, %496 : vector<8x8xf32>
    %498 = vector.extract_strided_slice %7 {offsets = [0, 27], sizes = [8, 1], strides = [1, 1]} : vector<8x128xf32> to vector<8x1xf32>
    %499 = vector.extract_strided_slice %8 {offsets = [27, 0], sizes = [1, 8], strides = [1, 1]} : vector<128x8xf32> to vector<1x8xf32>
    %500 = vector.broadcast %498 : vector<8x1xf32> to vector<8x8xf32>
    %501 = vector.broadcast %499 : vector<1x8xf32> to vector<8x8xf32>
    %502 = arith.addf %500, %501 : vector<8x8xf32>
    %503 = vector.extract_strided_slice %9 {offsets = [0, 27], sizes = [1, 1], strides = [1, 1]} : vector<1x128xf32> to vector<1x1xf32>
    %504 = vector.broadcast %503 : vector<1x1xf32> to vector<8x8xf32>
    %505 = arith.mulf %504, %6 : vector<8x8xf32>
    %506 = arith.addf %502, %505 : vector<8x8xf32>
    %cst_67 = arith.constant 0.000000e+00 : f32
    %507 = vector.broadcast %cst_67 : f32 to vector<8x8xf32>
    %508 = arith.cmpf oge, %506, %507 : vector<8x8xf32>
    %cst_68 = arith.constant 2.000000e-01 : f32
    %509 = vector.broadcast %cst_68 : f32 to vector<8x8xf32>
    %510 = arith.mulf %509, %506 : vector<8x8xf32>
    %511 = arith.select %508, %506, %510 : vector<8x8xi1>, vector<8x8xf32>
    %512 = vector.extract_strided_slice %10 {offsets = [0, 27], sizes = [1, 1], strides = [1, 1]} : vector<1x128xf32> to vector<1x1xf32>
    %513 = vector.broadcast %512 : vector<1x1xf32> to vector<8x8xf32>
    %514 = arith.mulf %513, %511 : vector<8x8xf32>
    %515 = arith.addf %497, %514 : vector<8x8xf32>
    %516 = vector.extract_strided_slice %7 {offsets = [0, 28], sizes = [8, 1], strides = [1, 1]} : vector<8x128xf32> to vector<8x1xf32>
    %517 = vector.extract_strided_slice %8 {offsets = [28, 0], sizes = [1, 8], strides = [1, 1]} : vector<128x8xf32> to vector<1x8xf32>
    %518 = vector.broadcast %516 : vector<8x1xf32> to vector<8x8xf32>
    %519 = vector.broadcast %517 : vector<1x8xf32> to vector<8x8xf32>
    %520 = arith.addf %518, %519 : vector<8x8xf32>
    %521 = vector.extract_strided_slice %9 {offsets = [0, 28], sizes = [1, 1], strides = [1, 1]} : vector<1x128xf32> to vector<1x1xf32>
    %522 = vector.broadcast %521 : vector<1x1xf32> to vector<8x8xf32>
    %523 = arith.mulf %522, %6 : vector<8x8xf32>
    %524 = arith.addf %520, %523 : vector<8x8xf32>
    %cst_69 = arith.constant 0.000000e+00 : f32
    %525 = vector.broadcast %cst_69 : f32 to vector<8x8xf32>
    %526 = arith.cmpf oge, %524, %525 : vector<8x8xf32>
    %cst_70 = arith.constant 2.000000e-01 : f32
    %527 = vector.broadcast %cst_70 : f32 to vector<8x8xf32>
    %528 = arith.mulf %527, %524 : vector<8x8xf32>
    %529 = arith.select %526, %524, %528 : vector<8x8xi1>, vector<8x8xf32>
    %530 = vector.extract_strided_slice %10 {offsets = [0, 28], sizes = [1, 1], strides = [1, 1]} : vector<1x128xf32> to vector<1x1xf32>
    %531 = vector.broadcast %530 : vector<1x1xf32> to vector<8x8xf32>
    %532 = arith.mulf %531, %529 : vector<8x8xf32>
    %533 = arith.addf %515, %532 : vector<8x8xf32>
    %534 = vector.extract_strided_slice %7 {offsets = [0, 29], sizes = [8, 1], strides = [1, 1]} : vector<8x128xf32> to vector<8x1xf32>
    %535 = vector.extract_strided_slice %8 {offsets = [29, 0], sizes = [1, 8], strides = [1, 1]} : vector<128x8xf32> to vector<1x8xf32>
    %536 = vector.broadcast %534 : vector<8x1xf32> to vector<8x8xf32>
    %537 = vector.broadcast %535 : vector<1x8xf32> to vector<8x8xf32>
    %538 = arith.addf %536, %537 : vector<8x8xf32>
    %539 = vector.extract_strided_slice %9 {offsets = [0, 29], sizes = [1, 1], strides = [1, 1]} : vector<1x128xf32> to vector<1x1xf32>
    %540 = vector.broadcast %539 : vector<1x1xf32> to vector<8x8xf32>
    %541 = arith.mulf %540, %6 : vector<8x8xf32>
    %542 = arith.addf %538, %541 : vector<8x8xf32>
    %cst_71 = arith.constant 0.000000e+00 : f32
    %543 = vector.broadcast %cst_71 : f32 to vector<8x8xf32>
    %544 = arith.cmpf oge, %542, %543 : vector<8x8xf32>
    %cst_72 = arith.constant 2.000000e-01 : f32
    %545 = vector.broadcast %cst_72 : f32 to vector<8x8xf32>
    %546 = arith.mulf %545, %542 : vector<8x8xf32>
    %547 = arith.select %544, %542, %546 : vector<8x8xi1>, vector<8x8xf32>
    %548 = vector.extract_strided_slice %10 {offsets = [0, 29], sizes = [1, 1], strides = [1, 1]} : vector<1x128xf32> to vector<1x1xf32>
    %549 = vector.broadcast %548 : vector<1x1xf32> to vector<8x8xf32>
    %550 = arith.mulf %549, %547 : vector<8x8xf32>
    %551 = arith.addf %533, %550 : vector<8x8xf32>
    %552 = vector.extract_strided_slice %7 {offsets = [0, 30], sizes = [8, 1], strides = [1, 1]} : vector<8x128xf32> to vector<8x1xf32>
    %553 = vector.extract_strided_slice %8 {offsets = [30, 0], sizes = [1, 8], strides = [1, 1]} : vector<128x8xf32> to vector<1x8xf32>
    %554 = vector.broadcast %552 : vector<8x1xf32> to vector<8x8xf32>
    %555 = vector.broadcast %553 : vector<1x8xf32> to vector<8x8xf32>
    %556 = arith.addf %554, %555 : vector<8x8xf32>
    %557 = vector.extract_strided_slice %9 {offsets = [0, 30], sizes = [1, 1], strides = [1, 1]} : vector<1x128xf32> to vector<1x1xf32>
    %558 = vector.broadcast %557 : vector<1x1xf32> to vector<8x8xf32>
    %559 = arith.mulf %558, %6 : vector<8x8xf32>
    %560 = arith.addf %556, %559 : vector<8x8xf32>
    %cst_73 = arith.constant 0.000000e+00 : f32
    %561 = vector.broadcast %cst_73 : f32 to vector<8x8xf32>
    %562 = arith.cmpf oge, %560, %561 : vector<8x8xf32>
    %cst_74 = arith.constant 2.000000e-01 : f32
    %563 = vector.broadcast %cst_74 : f32 to vector<8x8xf32>
    %564 = arith.mulf %563, %560 : vector<8x8xf32>
    %565 = arith.select %562, %560, %564 : vector<8x8xi1>, vector<8x8xf32>
    %566 = vector.extract_strided_slice %10 {offsets = [0, 30], sizes = [1, 1], strides = [1, 1]} : vector<1x128xf32> to vector<1x1xf32>
    %567 = vector.broadcast %566 : vector<1x1xf32> to vector<8x8xf32>
    %568 = arith.mulf %567, %565 : vector<8x8xf32>
    %569 = arith.addf %551, %568 : vector<8x8xf32>
    %570 = vector.extract_strided_slice %7 {offsets = [0, 31], sizes = [8, 1], strides = [1, 1]} : vector<8x128xf32> to vector<8x1xf32>
    %571 = vector.extract_strided_slice %8 {offsets = [31, 0], sizes = [1, 8], strides = [1, 1]} : vector<128x8xf32> to vector<1x8xf32>
    %572 = vector.broadcast %570 : vector<8x1xf32> to vector<8x8xf32>
    %573 = vector.broadcast %571 : vector<1x8xf32> to vector<8x8xf32>
    %574 = arith.addf %572, %573 : vector<8x8xf32>
    %575 = vector.extract_strided_slice %9 {offsets = [0, 31], sizes = [1, 1], strides = [1, 1]} : vector<1x128xf32> to vector<1x1xf32>
    %576 = vector.broadcast %575 : vector<1x1xf32> to vector<8x8xf32>
    %577 = arith.mulf %576, %6 : vector<8x8xf32>
    %578 = arith.addf %574, %577 : vector<8x8xf32>
    %cst_75 = arith.constant 0.000000e+00 : f32
    %579 = vector.broadcast %cst_75 : f32 to vector<8x8xf32>
    %580 = arith.cmpf oge, %578, %579 : vector<8x8xf32>
    %cst_76 = arith.constant 2.000000e-01 : f32
    %581 = vector.broadcast %cst_76 : f32 to vector<8x8xf32>
    %582 = arith.mulf %581, %578 : vector<8x8xf32>
    %583 = arith.select %580, %578, %582 : vector<8x8xi1>, vector<8x8xf32>
    %584 = vector.extract_strided_slice %10 {offsets = [0, 31], sizes = [1, 1], strides = [1, 1]} : vector<1x128xf32> to vector<1x1xf32>
    %585 = vector.broadcast %584 : vector<1x1xf32> to vector<8x8xf32>
    %586 = arith.mulf %585, %583 : vector<8x8xf32>
    %587 = arith.addf %569, %586 : vector<8x8xf32>
    %cst_77 = arith.constant -1.000000e+30 : f32
    %588 = vector.broadcast %cst_77 : f32 to vector<8x8xf32>
    %589 = arith.select %5, %587, %588 : vector<8x8xi1>, vector<8x8xf32>
    %c0_78 = arith.constant 0 : index
    %c0_79 = arith.constant 0 : index
    %590 = vector.load %arg10[%c0_78, %c0_79] : memref<8x1xf32, #tpu.memory_space<vmem>>, vector<8x1xf32>
    %cst_80 = arith.constant dense<0xFF800000> : vector<8xf32>
    %591 = vector.multi_reduction <maximumf>, %589, %cst_80 [1] : vector<8x8xf32> to vector<8xf32>
    %592 = vector.shape_cast %591 : vector<8xf32> to vector<8x1xf32>
    %593 = arith.maximumf %590, %592 : vector<8x1xf32>
    %594 = arith.subf %590, %593 : vector<8x1xf32>
    %595 = math.exp %594 : vector<8x1xf32>
    %596 = vector.broadcast %593 : vector<8x1xf32> to vector<8x8xf32>
    %597 = arith.subf %589, %596 : vector<8x8xf32>
    %598 = math.exp %597 : vector<8x8xf32>
    %cst_81 = arith.constant 0.000000e+00 : f32
    %599 = vector.broadcast %cst_81 : f32 to vector<8x8xf32>
    %600 = arith.select %5, %598, %599 : vector<8x8xi1>, vector<8x8xf32>
    %c0_82 = arith.constant 0 : index
    %c0_83 = arith.constant 0 : index
    %601 = vector.load %arg11[%c0_82, %c0_83] : memref<8x1xf32, #tpu.memory_space<vmem>>, vector<8x1xf32>
    %602 = arith.mulf %595, %601 : vector<8x1xf32>
    %cst_84 = arith.constant dense<0.000000e+00> : vector<8xf32>
    %603 = vector.multi_reduction <add>, %600, %cst_84 [1] : vector<8x8xf32> to vector<8xf32>
    %604 = vector.shape_cast %603 : vector<8xf32> to vector<8x1xf32>
    %605 = arith.addf %602, %604 : vector<8x1xf32>
    %c0_85 = arith.constant 0 : index
    %c0_86 = arith.constant 0 : index
    %606 = vector.load %arg11[%c0_85, %c0_86] : memref<8x1xf32, #tpu.memory_space<vmem>>, vector<8x1xf32>
    tpu.vector_store %arg11[%c0_85, %c0_86], %605 {strides = array<i32>} : memref<8x1xf32, #tpu.memory_space<vmem>>, vector<8x1xf32>,
    %cst_87 = arith.constant dense<0.000000e+00> : vector<8x128xf32>
    %607 = tpu.matmul %600, %8, %cst_87 {dimension_numbers = #tpu.dot_dimension_numbers<[1], [1], [0], [0], [0, 0, 1, 0], [], []>} : vector<8x8xf32>, vector<128x8xf32>, vector<8x128xf32> -> vector<8x128xf32>
    %c0_88 = arith.constant 0 : index
    %c0_89 = arith.constant 0 : index
    %608 = vector.load %arg12[%c0_88, %c0_89] : memref<8x128xf32, #tpu.memory_space<vmem>>, vector<8x128xf32>
    %609 = vector.broadcast %595 : vector<8x1xf32> to vector<8x128xf32>
    %610 = arith.mulf %609, %608 : vector<8x128xf32>
    %611 = arith.addf %610, %607 : vector<8x128xf32>
    %c0_90 = arith.constant 0 : index
    %c0_91 = arith.constant 0 : index
    %612 = vector.load %arg12[%c0_90, %c0_91] : memref<8x128xf32, #tpu.memory_space<vmem>>, vector<8x128xf32>
    tpu.vector_store %arg12[%c0_90, %c0_91], %611 {strides = array<i32>} : memref<8x128xf32, #tpu.memory_space<vmem>>, vector<8x128xf32>,
    %c0_92 = arith.constant 0 : index
    %c0_93 = arith.constant 0 : index
    %613 = vector.load %arg10[%c0_92, %c0_93] : memref<8x1xf32, #tpu.memory_space<vmem>>, vector<8x1xf32>
    tpu.vector_store %arg10[%c0_92, %c0_93], %593 {strides = array<i32>} : memref<8x1xf32, #tpu.memory_space<vmem>>, vector<8x1xf32>,
    %c0_i32_94 = arith.constant 0 : i32
    %614 = arith.cmpi eq, %arg1, %c0_i32_94 : i32
    %615 = arith.extui %614 : i1 to i32
    %c0_i32_95 = arith.constant 0 : i32
    %616 = arith.cmpi ne, %615, %c0_i32_95 : i32
    scf.if %616 {
      %c0_96 = arith.constant 0 : index
      %c0_97 = arith.constant 0 : index
      %617 = vector.load %arg12[%c0_96, %c0_97] : memref<8x128xf32, #tpu.memory_space<vmem>>, vector<8x128xf32>
      %c0_98 = arith.constant 0 : index
      %c0_99 = arith.constant 0 : index
      %618 = vector.load %arg11[%c0_98, %c0_99] : memref<8x1xf32, #tpu.memory_space<vmem>>, vector<8x1xf32>
      %619 = vector.broadcast %618 : vector<8x1xf32> to vector<8x128xf32>
      %620 = arith.divf %617, %619 : vector<8x128xf32>
      %c0_100 = arith.constant 0 : index
      %c0_101 = arith.constant 0 : index
      %621 = vector.load %arg8[%c0_100, %c0_101] : memref<1x128xf32, #tpu.memory_space<vmem>>, vector<1x128xf32>
      %622 = vector.broadcast %621 : vector<1x128xf32> to vector<8x128xf32>
      %623 = arith.addf %620, %622 : vector<8x128xf32>
      %cst_102 = arith.constant 0.000000e+00 : f32
      %624 = vector.broadcast %cst_102 : f32 to vector<8x128xf32>
      %625 = arith.maximumf %623, %624 : vector<8x128xf32>
      %c0_103 = arith.constant 0 : index
      %c0_104 = arith.constant 0 : index
      %626 = vector.load %arg9[%c0_103, %c0_104] : memref<8x128xf32, #tpu.memory_space<vmem>>, vector<8x128xf32>
      tpu.vector_store %arg9[%c0_103, %c0_104], %625 {strides = array<i32>} : memref<8x128xf32, #tpu.memory_space<vmem>>, vector<8x128xf32>,
    } else {
    }
    return
  }
  func.func @transform_0(%arg0: i32, %arg1: i32) -> (i32, i32) {
    %c0_i32 = arith.constant 0 : i32
    return %arg0, %arg1 : i32, i32
  }
  func.func @transform_1(%arg0: i32, %arg1: i32) -> (i32, i32) {
    %c0_i32 = arith.constant 0 : i32
    return %arg0, %arg1 : i32, i32
  }
  func.func @transform_2(%arg0: i32, %arg1: i32) -> (i32, i32) {
    %c0_i32 = arith.constant 0 : i32
    %c0_i32_0 = arith.constant 0 : i32
    return %c0_i32, %arg1 : i32, i32
  }
  func.func @transform_3(%arg0: i32, %arg1: i32) -> (i32, i32) {
    %c0_i32 = arith.constant 0 : i32
    %c0_i32_0 = arith.constant 0 : i32
    return %arg0, %c0_i32 : i32, i32
  }
  func.func @transform_4(%arg0: i32, %arg1: i32) -> (i32, i32) {
    %c0_i32 = arith.constant 0 : i32
    %c0_i32_0 = arith.constant 0 : i32
    %c0_i32_1 = arith.constant 0 : i32
    return %c0_i32, %c0_i32_0 : i32, i32
  }
  func.func @transform_5(%arg0: i32, %arg1: i32) -> (i32, i32) {
    %c0_i32 = arith.constant 0 : i32
    %c0_i32_0 = arith.constant 0 : i32
    %c0_i32_1 = arith.constant 0 : i32
    return %c0_i32, %c0_i32_0 : i32, i32
  }
  func.func @transform_6(%arg0: i32, %arg1: i32) -> (i32, i32) {
    %c0_i32 = arith.constant 0 : i32
    %c0_i32_0 = arith.constant 0 : i32
    %c0_i32_1 = arith.constant 0 : i32
    return %c0_i32, %c0_i32_0 : i32, i32
  }
  func.func @transform_7(%arg0: i32, %arg1: i32) -> (i32, i32) {
    %c0_i32 = arith.constant 0 : i32
    %c0_i32_0 = arith.constant 0 : i32
    return %arg0, %c0_i32 : i32, i32
  }
}

module attributes {stable_mosaic.version = 11 : i64} {
  func.func @_gcn_prop_kernel(%arg0: i32, %arg1: i32, %arg2: memref<8x8xf32, #tpu.memory_space<vmem>>, %arg3: memref<8x128xf32, #tpu.memory_space<vmem>>, %arg4: memref<1x128xf32, #tpu.memory_space<vmem>>, %arg5: memref<8x128xf32, #tpu.memory_space<vmem>>, %arg6: memref<8x128xf32, #tpu.memory_space<vmem>>) attributes {dimension_semantics = [#tpu.dimension_semantics<parallel>, #tpu.dimension_semantics<arbitrary>], iteration_bounds = array<i64: 1, 1>, scalar_prefetch = 0 : i64, scratch_operands = 1 : i64, tpu.core_type = #tpu.core_type<tc>, window_params = [{transform_indices = @transform_0, window_bounds = array<i64: 8, 8>}, {transform_indices = @transform_1, window_bounds = array<i64: 8, 128>}, {pipeline_mode = #tpu.pipeline_mode<synchronous>, transform_indices = @transform_2, window_bounds = array<i64: 1, 128>}, {transform_indices = @transform_3, window_bounds = array<i64: 8, 128>}]} {
    %c0_i32 = arith.constant 0 : i32
    %0 = arith.cmpi eq, %arg1, %c0_i32 : i32
    %1 = arith.extui %0 : i1 to i32
    %c0_i32_0 = arith.constant 0 : i32
    %2 = arith.cmpi ne, %1, %c0_i32_0 : i32
    scf.if %2 {
      %cst_10 = arith.constant 0.000000e+00 : f32
      %12 = vector.broadcast %cst_10 : f32 to vector<8x128xf32>
      %c0_11 = arith.constant 0 : index
      %c0_12 = arith.constant 0 : index
      %13 = vector.load %arg6[%c0_11, %c0_12] : memref<8x128xf32, #tpu.memory_space<vmem>>, vector<8x128xf32>
      tpu.vector_store %arg6[%c0_11, %c0_12], %12 {strides = array<i32>} : memref<8x128xf32, #tpu.memory_space<vmem>>, vector<8x128xf32>,
    } else {
    }
    %c0 = arith.constant 0 : index
    %c0_1 = arith.constant 0 : index
    %3 = vector.load %arg6[%c0, %c0_1] : memref<8x128xf32, #tpu.memory_space<vmem>>, vector<8x128xf32>
    %c0_2 = arith.constant 0 : index
    %c0_3 = arith.constant 0 : index
    %4 = vector.load %arg2[%c0_2, %c0_3] : memref<8x8xf32, #tpu.memory_space<vmem>>, vector<8x8xf32>
    %c0_4 = arith.constant 0 : index
    %c0_5 = arith.constant 0 : index
    %5 = vector.load %arg3[%c0_4, %c0_5] : memref<8x128xf32, #tpu.memory_space<vmem>>, vector<8x128xf32>
    %cst = arith.constant dense<0.000000e+00> : vector<8x128xf32>
    %6 = tpu.matmul %4, %5, %cst {dimension_numbers = #tpu.dot_dimension_numbers<[1], [0], [0], [1], [0, 0, 1, 1], [], []>} : vector<8x8xf32>, vector<8x128xf32>, vector<8x128xf32> -> vector<8x128xf32>
    %7 = arith.addf %3, %6 : vector<8x128xf32>
    %c0_6 = arith.constant 0 : index
    %c0_7 = arith.constant 0 : index
    %8 = vector.load %arg6[%c0_6, %c0_7] : memref<8x128xf32, #tpu.memory_space<vmem>>, vector<8x128xf32>
    tpu.vector_store %arg6[%c0_6, %c0_7], %7 {strides = array<i32>} : memref<8x128xf32, #tpu.memory_space<vmem>>, vector<8x128xf32>,
    %c0_i32_8 = arith.constant 0 : i32
    %9 = arith.cmpi eq, %arg1, %c0_i32_8 : i32
    %10 = arith.extui %9 : i1 to i32
    %c0_i32_9 = arith.constant 0 : i32
    %11 = arith.cmpi ne, %10, %c0_i32_9 : i32
    scf.if %11 {
      %c0_10 = arith.constant 0 : index
      %c0_11 = arith.constant 0 : index
      %12 = vector.load %arg6[%c0_10, %c0_11] : memref<8x128xf32, #tpu.memory_space<vmem>>, vector<8x128xf32>
      %c0_12 = arith.constant 0 : index
      %c0_13 = arith.constant 0 : index
      %13 = vector.load %arg4[%c0_12, %c0_13] : memref<1x128xf32, #tpu.memory_space<vmem>>, vector<1x128xf32>
      %14 = vector.broadcast %13 : vector<1x128xf32> to vector<8x128xf32>
      %15 = arith.addf %12, %14 : vector<8x128xf32>
      %c0_14 = arith.constant 0 : index
      %c0_15 = arith.constant 0 : index
      %16 = vector.load %arg5[%c0_14, %c0_15] : memref<8x128xf32, #tpu.memory_space<vmem>>, vector<8x128xf32>
      tpu.vector_store %arg5[%c0_14, %c0_15], %15 {strides = array<i32>} : memref<8x128xf32, #tpu.memory_space<vmem>>, vector<8x128xf32>,
    } else {
    }
    return
  }
  func.func @transform_0(%arg0: i32, %arg1: i32) -> (i32, i32) {
    %c0_i32 = arith.constant 0 : i32
    return %arg0, %arg1 : i32, i32
  }
  func.func @transform_1(%arg0: i32, %arg1: i32) -> (i32, i32) {
    %c0_i32 = arith.constant 0 : i32
    %c0_i32_0 = arith.constant 0 : i32
    return %arg1, %c0_i32 : i32, i32
  }
  func.func @transform_2(%arg0: i32, %arg1: i32) -> (i32, i32) {
    %c0_i32 = arith.constant 0 : i32
    %c0_i32_0 = arith.constant 0 : i32
    %c0_i32_1 = arith.constant 0 : i32
    return %c0_i32, %c0_i32_0 : i32, i32
  }
  func.func @transform_3(%arg0: i32, %arg1: i32) -> (i32, i32) {
    %c0_i32 = arith.constant 0 : i32
    %c0_i32_0 = arith.constant 0 : i32
    return %arg0, %c0_i32 : i32, i32
  }
}

module attributes {stable_mosaic.version = 11 : i64} {
  func.func @_linear_kernel(%arg0: i32, %arg1: memref<8x128xf32, #tpu.memory_space<vmem>>, %arg2: memref<128x128xf32, #tpu.memory_space<vmem>>, %arg3: memref<1x128xf32, #tpu.memory_space<vmem>>, %arg4: memref<8x128xf32, #tpu.memory_space<vmem>>) attributes {dimension_semantics = [#tpu.dimension_semantics<parallel>], iteration_bounds = array<i64: 1>, scalar_prefetch = 0 : i64, scratch_operands = 0 : i64, tpu.core_type = #tpu.core_type<tc>, window_params = [{transform_indices = @transform_0, window_bounds = array<i64: 8, 128>}, {pipeline_mode = #tpu.pipeline_mode<synchronous>, transform_indices = @transform_1, window_bounds = array<i64: 128, 128>}, {pipeline_mode = #tpu.pipeline_mode<synchronous>, transform_indices = @transform_2, window_bounds = array<i64: 1, 128>}, {transform_indices = @transform_3, window_bounds = array<i64: 8, 128>}]} {
    %c0 = arith.constant 0 : index
    %c0_0 = arith.constant 0 : index
    %0 = vector.load %arg1[%c0, %c0_0] : memref<8x128xf32, #tpu.memory_space<vmem>>, vector<8x128xf32>
    %c0_1 = arith.constant 0 : index
    %c0_2 = arith.constant 0 : index
    %1 = vector.load %arg2[%c0_1, %c0_2] : memref<128x128xf32, #tpu.memory_space<vmem>>, vector<128x128xf32>
    %cst = arith.constant dense<0.000000e+00> : vector<8x128xf32>
    %2 = tpu.matmul %0, %1, %cst {dimension_numbers = #tpu.dot_dimension_numbers<[1], [1], [0], [0], [0, 0, 1, 0], [], []>} : vector<8x128xf32>, vector<128x128xf32>, vector<8x128xf32> -> vector<8x128xf32>
    %c0_3 = arith.constant 0 : index
    %c0_4 = arith.constant 0 : index
    %3 = vector.load %arg3[%c0_3, %c0_4] : memref<1x128xf32, #tpu.memory_space<vmem>>, vector<1x128xf32>
    %4 = vector.broadcast %3 : vector<1x128xf32> to vector<8x128xf32>
    %5 = arith.addf %2, %4 : vector<8x128xf32>
    %cst_5 = arith.constant 0.000000e+00 : f32
    %6 = vector.broadcast %cst_5 : f32 to vector<8x128xf32>
    %7 = arith.maximumf %5, %6 : vector<8x128xf32>
    %c0_6 = arith.constant 0 : index
    %c0_7 = arith.constant 0 : index
    %8 = vector.load %arg4[%c0_6, %c0_7] : memref<8x128xf32, #tpu.memory_space<vmem>>, vector<8x128xf32>
    tpu.vector_store %arg4[%c0_6, %c0_7], %7 {strides = array<i32>} : memref<8x128xf32, #tpu.memory_space<vmem>>, vector<8x128xf32>,
    return
  }
  func.func @transform_0(%arg0: i32) -> (i32, i32) {
    %c0_i32 = arith.constant 0 : i32
    %c0_i32_0 = arith.constant 0 : i32
    return %arg0, %c0_i32 : i32, i32
  }
  func.func @transform_1(%arg0: i32) -> (i32, i32) {
    %c0_i32 = arith.constant 0 : i32
    %c0_i32_0 = arith.constant 0 : i32
    %c0_i32_1 = arith.constant 0 : i32
    return %c0_i32, %c0_i32_0 : i32, i32
  }
  func.func @transform_2(%arg0: i32) -> (i32, i32) {
    %c0_i32 = arith.constant 0 : i32
    %c0_i32_0 = arith.constant 0 : i32
    %c0_i32_1 = arith.constant 0 : i32
    return %c0_i32, %c0_i32_0 : i32, i32
  }
  func.func @transform_3(%arg0: i32) -> (i32, i32) {
    %c0_i32 = arith.constant 0 : i32
    %c0_i32_0 = arith.constant 0 : i32
    return %arg0, %c0_i32 : i32, i32
  }
}

module attributes {stable_mosaic.version = 11 : i64} {
  func.func @_gram_kernel(%arg0: i32, %arg1: i32, %arg2: memref<8x128xf32, #tpu.memory_space<vmem>>, %arg3: memref<8x128xf32, #tpu.memory_space<vmem>>, %arg4: memref<8x8xf32, #tpu.memory_space<vmem>>) attributes {dimension_semantics = [#tpu.dimension_semantics<parallel>, #tpu.dimension_semantics<parallel>], iteration_bounds = array<i64: 1, 1>, scalar_prefetch = 0 : i64, scratch_operands = 0 : i64, tpu.core_type = #tpu.core_type<tc>, window_params = [{transform_indices = @transform_0, window_bounds = array<i64: 8, 128>}, {transform_indices = @transform_1, window_bounds = array<i64: 8, 128>}, {transform_indices = @transform_2, window_bounds = array<i64: 8, 8>}]} {
    %c0 = arith.constant 0 : index
    %c0_0 = arith.constant 0 : index
    %0 = vector.load %arg2[%c0, %c0_0] : memref<8x128xf32, #tpu.memory_space<vmem>>, vector<8x128xf32>
    %c0_1 = arith.constant 0 : index
    %c0_2 = arith.constant 0 : index
    %1 = vector.load %arg3[%c0_1, %c0_2] : memref<8x128xf32, #tpu.memory_space<vmem>>, vector<8x128xf32>
    %cst = arith.constant dense<0.000000e+00> : vector<8x8xf32>
    %2 = tpu.matmul %0, %1, %cst {dimension_numbers = #tpu.dot_dimension_numbers<[1], [1], [0], [0], [0, 0, 1, 0], [], []>} : vector<8x128xf32>, vector<8x128xf32>, vector<8x8xf32> -> vector<8x8xf32>
    %c0_3 = arith.constant 0 : index
    %c0_4 = arith.constant 0 : index
    %3 = vector.load %arg4[%c0_3, %c0_4] : memref<8x8xf32, #tpu.memory_space<vmem>>, vector<8x8xf32>
    tpu.vector_store %arg4[%c0_3, %c0_4], %2 {strides = array<i32>} : memref<8x8xf32, #tpu.memory_space<vmem>>, vector<8x8xf32>,
    return
  }
  func.func @transform_0(%arg0: i32, %arg1: i32) -> (i32, i32) {
    %c0_i32 = arith.constant 0 : i32
    %c0_i32_0 = arith.constant 0 : i32
    return %arg0, %c0_i32 : i32, i32
  }
  func.func @transform_1(%arg0: i32, %arg1: i32) -> (i32, i32) {
    %c0_i32 = arith.constant 0 : i32
    %c0_i32_0 = arith.constant 0 : i32
    return %arg1, %c0_i32 : i32, i32
  }
  func.func @transform_2(%arg0: i32, %arg1: i32) -> (i32, i32) {
    %c0_i32 = arith.constant 0 : i32
    return %arg0, %arg1 : i32, i32
  }
}

</mosaic_0001>

<llo_original>
// kernel: gcn_gat_autoencoder.11
$region0: #{gcn_gat_autoencoder.11}
  #allocation0 [shape = 'u32[]', space=smem, size = 0x4, offset = 0x4, fixed_abs, tag = 'smem constant byte address 0x4 - core index']
  #allocation1 [shape = 'u32[144,128]{1,0:T(1,128)}', space=vmem, size = 0x12000, scoped, tag = 'internal scratch']
  %s0 = inlined_call_operand.vmem [shape: f32[8,128], index: 0, kind: input, shape index: {}]
  %s1 = inlined_call_operand.vmem [shape: f32[128,128], index: 1, kind: input, shape index: {}]
  %s2 = inlined_call_operand.vmem [shape: f32[1,128], index: 2, kind: input, shape index: {}]
  %s3 = inlined_call_operand.vmem [shape: f32[8,128], index: 3, kind: output, shape index: {}]
  %s4 = sld [smem:[#allocation0]]
  $region22: #{gcn_gat_autoencoder.11} parent=0
    _
  %s6 = ssub.s32 1, %s4
  %s7 = scalar_select 0, %s6, %s4
  // Predicated region
  $region2: #{gcn_gat_autoencoder.11} parent=0 // pred_check
    _
  $region3: #{gcn_gat_autoencoder.11} parent=0 // pred_check_branch
    %9 = sbr.rel (0) target = $region5
  $region4: #{gcn_gat_autoencoder.11} parent=0 // pred_region
    _
  $region5: #{gcn_gat_autoencoder.11} parent=0 // pred_fallthru
    _
  // Predicated region
  $region6: #{gcn_gat_autoencoder.11} parent=0 // pred_check
    _
  $region7: #{gcn_gat_autoencoder.11} parent=0 // pred_check_branch
    %11 = sbr.rel (0) target = $region9
  $region8: #{gcn_gat_autoencoder.11} parent=0 // pred_region
    _
  $region9: #{gcn_gat_autoencoder.11} parent=0 // pred_fallthru
    _
  // Predicated region
  $region10: #{gcn_gat_autoencoder.11} parent=0 // pred_check
    _
  $region11: #{gcn_gat_autoencoder.11} parent=0 // pred_check_branch
    %13 = sbr.rel (0) target = $region13
  $region12: #{gcn_gat_autoencoder.11} parent=0 // pred_region
    _
  $region13: #{gcn_gat_autoencoder.11} parent=0 // pred_fallthru
    _
  %v14 = vld [vmem:[%s0] sm:$0xff]
  %v15 = vld [vmem:[%s1] sm:$0xff]
  %v16 = vld [vmem:[%s1 + $0x8] sm:$0xff]
  %v17 = vld [vmem:[%s1 + $0x10] sm:$0xff]
  %v18 = vld [vmem:[%s1 + $0x18] sm:$0xff]
  %v19 = vld [vmem:[%s1 + $0x20] sm:$0xff]
  %v20 = vld [vmem:[%s1 + $0x28] sm:$0xff]
  %v21 = vld [vmem:[%s1 + $0x30] sm:$0xff]
  %v22 = vld [vmem:[%s1 + $0x38] sm:$0xff]
  %v23 = vld [vmem:[%s1 + $0x40] sm:$0xff]
  %v24 = vld [vmem:[%s1 + $0x48] sm:$0xff]
  %v25 = vld [vmem:[%s1 + $0x50] sm:$0xff]
  %v26 = vld [vmem:[%s1 + $0x58] sm:$0xff]
  %v27 = vld [vmem:[%s1 + $0x60] sm:$0xff]
  %v28 = vld [vmem:[%s1 + $0x68] sm:$0xff]
  %v29 = vld [vmem:[%s1 + $0x70] sm:$0xff]
  %v30 = vld [vmem:[%s1 + $0x78] sm:$0xff]
  %v31 = vld [vmem:[%s2] sm:$0x1]
  %v33 = vlaneseq
  %v34 = vshrl.u32 %v33, 7
  %v35 = vsub.s32 0, %v34
  %v36 = vrot.slane %v31, %v35
  %38 = vmatprep.subr.mxu0 0.0
  %39 = vmatpush1.xpose.msra.mxu0 %v30
  %40 = vmatprep.subr.mxu0 0.0
  %41 = vmatpush1.xpose.msra.mxu0 %v29
  %42 = vmatprep.subr.mxu0 0.0
  %43 = vmatpush1.xpose.msra.mxu0 %v28
  %44 = vmatprep.subr.mxu0 0.0
  %45 = vmatpush1.xpose.msra.mxu0 %v27
  %46 = vmatprep.subr.mxu0 0.0
  %47 = vmatpush1.xpose.msra.mxu0 %v26
  %48 = vmatprep.subr.mxu0 0.0
  %49 = vmatpush1.xpose.msra.mxu0 %v25
  %50 = vmatprep.subr.mxu0 0.0
  %51 = vmatpush1.xpose.msra.mxu0 %v24
  %52 = vmatprep.subr.mxu0 0.0
  %53 = vmatpush1.xpose.msra.mxu0 %v23
  %54 = vmatprep.subr.mxu0 0.0
  %55 = vmatpush1.xpose.msra.mxu0 %v22
  %56 = vmatprep.subr.mxu0 0.0
  %57 = vmatpush1.xpose.msra.mxu0 %v21
  %58 = vmatprep.subr.mxu0 0.0
  %59 = vmatpush1.xpose.msra.mxu0 %v20
  %60 = vmatprep.subr.mxu0 0.0
  %61 = vmatpush1.xpose.msra.mxu0 %v19
  %62 = vmatprep.subr.mxu0 0.0
  %63 = vmatpush1.xpose.msra.mxu0 %v18
  %64 = vmatprep.subr.mxu0 0.0
  %65 = vmatpush1.xpose.msra.mxu0 %v17
  %66 = vmatprep.subr.mxu0 0.0
  %67 = vmatpush1.xpose.msra.mxu0 %v16
  %68 = vmatprep.subr.mxu0 0.0
  %69 = vmatpush1.xpose.msra.mxu0 %v15
  %70 = vmatprep.subr.mxu0 0.0
  %71 = vmatpush2.xpose.msra.mxu0 0.0
  %72 = vmatprep.subr.mxu0 0.0
  %73 = vmatpush2.xpose.msra.mxu0 0.0
  %74 = vmatprep.subr.mxu0 0.0
  %75 = vmatpush2.xpose.msra.mxu0 0.0
  %76 = vmatprep.subr.mxu0 0.0
  %77 = vmatpush2.xpose.msra.mxu0 0.0
  %78 = vmatprep.subr.mxu0 0.0
  %79 = vmatpush2.xpose.msra.mxu0 0.0
  %80 = vmatprep.subr.mxu0 0.0
  %81 = vmatpush2.xpose.msra.mxu0 0.0
  %82 = vmatprep.subr.mxu0 0.0
  %83 = vmatpush2.xpose.msra.mxu0 0.0
  %84 = vmatprep.subr.mxu0 0.0
  %85 = vmatpush2.xpose.msra.mxu0 0.0
  %86 = vmatprep.subr.mxu0 0.0
  %87 = vmatpush2.xpose.msra.mxu0 0.0
  %88 = vmatprep.subr.mxu0 0.0
  %89 = vmatpush2.xpose.msra.mxu0 0.0
  %90 = vmatprep.subr.mxu0 0.0
  %91 = vmatpush2.xpose.msra.mxu0 0.0
  %92 = vmatprep.subr.mxu0 0.0
  %93 = vmatpush2.xpose.msra.mxu0 0.0
  %94 = vmatprep.subr.mxu0 0.0
  %95 = vmatpush2.xpose.msra.mxu0 0.0
  %96 = vmatprep.subr.mxu0 0.0
  %97 = vmatpush2.xpose.msra.mxu0 0.0
  %98 = vmatprep.subr.mxu0 0.0
  %99 = vmatpush2.xpose.msra.mxu0 0.0
  %100 = vmatprep.subr.mxu0 0.0
  %101 = vmatpush2.xpose.msra.mxu0 0.0
  %102 = vmatprep.mubr.f32.mxu0 0.0
  %103 = vmatmul.mubr.f32.gmra.mxu0 %v14
  %v104 = vpop.f32.mrf.mxu0
  %v105 = vadd.f32 %v36, %v104
  %v106 = vpop.f32.mrf.mxu0
  %107 = vdwg.mxu0
  %108 = vst [vmem:[%s3] sm:$0xff] %v105
  // Predicated region
  $region14: #{gcn_gat_autoencoder.11} parent=0 // pred_check
    _
  $region15: #{gcn_gat_autoencoder.11} parent=0 // pred_check_branch
    %110 = sbr.rel (0) target = $region17
  $region16: #{gcn_gat_autoencoder.11} parent=0 // pred_region
    _
  $region17: #{gcn_gat_autoencoder.11} parent=0 // pred_fallthru
    _
  // Predicated region
  $region18: #{gcn_gat_autoencoder.11} parent=0 // pred_check
    _
  $region19: #{gcn_gat_autoencoder.11} parent=0 // pred_check_branch
    %112 = sbr.rel (0) target = $region21
  $region20: #{gcn_gat_autoencoder.11} parent=0 // pred_region
    _
  $region21: #{gcn_gat_autoencoder.11} parent=0 // pred_fallthru
    _

// kernel: gcn_gat_autoencoder.9
$region0: #{gcn_gat_autoencoder.9}
  #allocation0 [shape = 'u32[]', space=smem, size = 0x4, offset = 0x4, fixed_abs, tag = 'smem constant byte address 0x4 - core index']
  #allocation1 [shape = 'u32[144,128]{1,0:T(1,128)}', space=vmem, size = 0x12000, scoped, tag = 'internal scratch']
  %s0 = inlined_call_operand.vmem [shape: f32[8,128], index: 0, kind: input, shape index: {}]
  %s1 = inlined_call_operand.hbm [shape: f32[128,128], index: 1, kind: input, shape index: {}]
  %s2 = inlined_call_operand.vmem [shape: f32[1,128], index: 2, kind: input, shape index: {}]
  %s3 = inlined_call_operand.vmem [shape: f32[8,128], index: 3, kind: output, shape index: {}]
  %s4 = sld [smem:[#allocation0]]
  $region26: #{gcn_gat_autoencoder.9} parent=0
    _
  %s6 = ssub.s32 1, %s4
  %s7 = scalar_select 0, %s6, %s4
  $region1: #{gcn_gat_autoencoder.9} parent=0
    #allocation2 [shape = 'u8[65536]{0}', space=vmem, size = 0x10000, scoped, tag = 'input window, operand 1, single buffered']
    #allocation3 [shape = 's32[1]{0}', space=sflag, size = 0x4, scoped, tag = 'scoped memory for gcn_gat_autoencoder.9']
    %8 = vsyncpa [#allocation3], 0
    // Predicated region
    $region2: #{gcn_gat_autoencoder.9} parent=1 // pred_check
      _
    $region3: #{gcn_gat_autoencoder.9} parent=1 // pred_check_branch
      %10 = sbr.rel (0) target = $region5
    $region4: #{gcn_gat_autoencoder.9} parent=1 // pred_region
      _
    $region5: #{gcn_gat_autoencoder.9} parent=1 // pred_fallthru
      _
    // Predicated region
    $region6: #{gcn_gat_autoencoder.9} parent=1 // pred_check
      _
    $region7: #{gcn_gat_autoencoder.9} parent=1 // pred_check_branch
      %12 = sbr.rel (0) target = $region9
    $region8: #{gcn_gat_autoencoder.9} parent=1 // pred_region
      %s14 = ssub.s32 2048, 2048
      %15 = vsyncadd [#allocation3], %s14
      %s16 = sshll.u32 [#allocation2], 4
      %s17 = int_to_ptr.vmem [resolvable:$true] %s16
      %22 = dma.hbm_to_vmem [thread:$0]  %s1, 2048, %s17, [#allocation3], 128, 128, 8
    $region9: #{gcn_gat_autoencoder.9} parent=1 // pred_fallthru
      _
    // Predicated region
    $region10: #{gcn_gat_autoencoder.9} parent=1 // pred_check
      _
    $region11: #{gcn_gat_autoencoder.9} parent=1 // pred_check_branch
      %24 = sbr.rel (0) target = $region13
    $region12: #{gcn_gat_autoencoder.9} parent=1 // pred_region
      _
    $region13: #{gcn_gat_autoencoder.9} parent=1 // pred_fallthru
      _
    // Predicated region
    $region14: #{gcn_gat_autoencoder.9} parent=1 // pred_check
      _
    $region15: #{gcn_gat_autoencoder.9} parent=1 // pred_check_branch
      %26 = sbr.rel (0) target = $region17
    $region16: #{gcn_gat_autoencoder.9} parent=1 // pred_region
      %27 = dma.done [#allocation3], 2048
    $region17: #{gcn_gat_autoencoder.9} parent=1 // pred_fallthru
      _
    %v28 = vld [vmem:[%s0] sm:$0xff]
    %v29 = vld [vmem:[#allocation2] sm:$0xff]
    %v30 = vld [vmem:[#allocation2 + $0x8] sm:$0xff]
    %v31 = vld [vmem:[#allocation2 + $0x10] sm:$0xff]
    %v32 = vld [vmem:[#allocation2 + $0x18] sm:$0xff]
    %v33 = vld [vmem:[#allocation2 + $0x20] sm:$0xff]
    %v34 = vld [vmem:[#allocation2 + $0x28] sm:$0xff]
    %v35 = vld [vmem:[#allocation2 + $0x30] sm:$0xff]
    %v36 = vld [vmem:[#allocation2 + $0x38] sm:$0xff]
    %v37 = vld [vmem:[#allocation2 + $0x40] sm:$0xff]
    %v38 = vld [vmem:[#allocation2 + $0x48] sm:$0xff]
    %v39 = vld [vmem:[#allocation2 + $0x50] sm:$0xff]
    %v40 = vld [vmem:[#allocation2 + $0x58] sm:$0xff]
    %v41 = vld [vmem:[#allocation2 + $0x60] sm:$0xff]
    %v42 = vld [vmem:[#allocation2 + $0x68] sm:$0xff]
    %v43 = vld [vmem:[#allocation2 + $0x70] sm:$0xff]
    %v44 = vld [vmem:[#allocation2 + $0x78] sm:$0xff]
    %v45 = vld [vmem:[%s2] sm:$0x1]
    %v47 = vlaneseq
    %v48 = vshrl.u32 %v47, 7
    %v49 = vsub.s32 0, %v48
    %v50 = vrot.slane %v45, %v49
    %52 = vmatprep.subr.mxu0 0.0
    %53 = vmatpush1.xpose.msra.mxu0 %v44
    %54 = vmatprep.subr.mxu0 0.0
    %55 = vmatpush1.xpose.msra.mxu0 %v43
    %56 = vmatprep.subr.mxu0 0.0
    %57 = vmatpush1.xpose.msra.mxu0 %v42
    %58 = vmatprep.subr.mxu0 0.0
    %59 = vmatpush1.xpose.msra.mxu0 %v41
    %60 = vmatprep.subr.mxu0 0.0
    %61 = vmatpush1.xpose.msra.mxu0 %v40
    %62 = vmatprep.subr.mxu0 0.0
    %63 = vmatpush1.xpose.msra.mxu0 %v39
    %64 = vmatprep.subr.mxu0 0.0
    %65 = vmatpush1.xpose.msra.mxu0 %v38
    %66 = vmatprep.subr.mxu0 0.0
    %67 = vmatpush1.xpose.msra.mxu0 %v37
    %68 = vmatprep.subr.mxu0 0.0
    %69 = vmatpush1.xpose.msra.mxu0 %v36
    %70 = vmatprep.subr.mxu0 0.0
    %71 = vmatpush1.xpose.msra.mxu0 %v35
    %72 = vmatprep.subr.mxu0 0.0
    %73 = vmatpush1.xpose.msra.mxu0 %v34
    %74 = vmatprep.subr.mxu0 0.0
    %75 = vmatpush1.xpose.msra.mxu0 %v33
    %76 = vmatprep.subr.mxu0 0.0
    %77 = vmatpush1.xpose.msra.mxu0 %v32
    %78 = vmatprep.subr.mxu0 0.0
    %79 = vmatpush1.xpose.msra.mxu0 %v31
    %80 = vmatprep.subr.mxu0 0.0
    %81 = vmatpush1.xpose.msra.mxu0 %v30
    %82 = vmatprep.subr.mxu0 0.0
    %83 = vmatpush1.xpose.msra.mxu0 %v29
    %84 = vmatprep.subr.mxu0 0.0
    %85 = vmatpush2.xpose.msra.mxu0 0.0
    %86 = vmatprep.subr.mxu0 0.0
    %87 = vmatpush2.xpose.msra.mxu0 0.0
    %88 = vmatprep.subr.mxu0 0.0
    %89 = vmatpush2.xpose.msra.mxu0 0.0
    %90 = vmatprep.subr.mxu0 0.0
    %91 = vmatpush2.xpose.msra.mxu0 0.0
    %92 = vmatprep.subr.mxu0 0.0
    %93 = vmatpush2.xpose.msra.mxu0 0.0
    %94 = vmatprep.subr.mxu0 0.0
    %95 = vmatpush2.xpose.msra.mxu0 0.0
    %96 = vmatprep.subr.mxu0 0.0
    %97 = vmatpush2.xpose.msra.mxu0 0.0
    %98 = vmatprep.subr.mxu0 0.0
    %99 = vmatpush2.xpose.msra.mxu0 0.0
    %100 = vmatprep.subr.mxu0 0.0
    %101 = vmatpush2.xpose.msra.mxu0 0.0
    %102 = vmatprep.subr.mxu0 0.0
    %103 = vmatpush2.xpose.msra.mxu0 0.0
    %104 = vmatprep.subr.mxu0 0.0
    %105 = vmatpush2.xpose.msra.mxu0 0.0
    %106 = vmatprep.subr.mxu0 0.0
    %107 = vmatpush2.xpose.msra.mxu0 0.0
    %108 = vmatprep.subr.mxu0 0.0
    %109 = vmatpush2.xpose.msra.mxu0 0.0
    %110 = vmatprep.subr.mxu0 0.0
    %111 = vmatpush2.xpose.msra.mxu0 0.0
    %112 = vmatprep.subr.mxu0 0.0
    %113 = vmatpush2.xpose.msra.mxu0 0.0
    %114 = vmatprep.subr.mxu0 0.0
    %115 = vmatpush2.xpose.msra.mxu0 0.0
    %116 = vmatprep.mubr.f32.mxu0 0.0
    %117 = vmatmul.mubr.f32.gmra.mxu0 %v28
    %v118 = vpop.f32.mrf.mxu0
    %v119 = vadd.f32 %v50, %v118
    %v120 = vpop.f32.mrf.mxu0
    %121 = vdwg.mxu0
    %122 = vst [vmem:[%s3] sm:$0xff] %v119
    // Predicated region
    $region18: #{gcn_gat_autoencoder.9} parent=1 // pred_check
      _
    $region19: #{gcn_gat_autoencoder.9} parent=1 // pred_check_branch
      %124 = sbr.rel (0) target = $region21
    $region20: #{gcn_gat_autoencoder.9} parent=1 // pred_region
      _
    $region21: #{gcn_gat_autoencoder.9} parent=1 // pred_fallthru
      _
    // Predicated region
    $region22: #{gcn_gat_autoencoder.9} parent=1 // pred_check
      _
    $region23: #{gcn_gat_autoencoder.9} parent=1 // pred_check_branch
      %126 = sbr.rel (0) target = $region25
    $region24: #{gcn_gat_autoencoder.9} parent=1 // pred_region
      _
    $region25: #{gcn_gat_autoencoder.9} parent=1 // pred_fallthru
      _
    %127 = vsyncpa [#allocation3], 1

// kernel: gcn_gat_autoencoder.10
$region0: #{gcn_gat_autoencoder.10}
  #allocation0 [shape = 'u32[]', space=smem, size = 0x4, offset = 0x4, fixed_abs, tag = 'smem constant byte address 0x4 - core index']
  #allocation1 [shape = 'u32[144,128]{1,0:T(1,128)}', space=vmem, size = 0x12000, scoped, tag = 'internal scratch']
  #allocation2 [shape = 'f32[8,128]{1,0:T(8,128)}', space=vmem, size = 0x1000, scoped, tag = 'scratch operand']
  %s0 = inlined_call_operand.vmem [shape: f32[8,8], index: 0, kind: input, shape index: {}]
  %s1 = inlined_call_operand.vmem [shape: f32[8,128], index: 1, kind: input, shape index: {}]
  %s2 = inlined_call_operand.vmem [shape: f32[1,128], index: 2, kind: input, shape index: {}]
  %s3 = inlined_call_operand.vmem [shape: f32[8,128], index: 3, kind: output, shape index: {}]
  %s4 = sld [smem:[#allocation0]]
  $region30: #{gcn_gat_autoencoder.10} parent=0
    _
  %s6 = ssub.s32 1, %s4
  %s7 = scalar_select 0, %s6, %s4
  // Predicated region
  $region2: #{gcn_gat_autoencoder.10} parent=0 // pred_check
    _
  $region3: #{gcn_gat_autoencoder.10} parent=0 // pred_check_branch
    %9 = sbr.rel (0) target = $region5
  $region4: #{gcn_gat_autoencoder.10} parent=0 // pred_region
    _
  $region5: #{gcn_gat_autoencoder.10} parent=0 // pred_fallthru
    _
  // Predicated region
  $region6: #{gcn_gat_autoencoder.10} parent=0 // pred_check
    _
  $region7: #{gcn_gat_autoencoder.10} parent=0 // pred_check_branch
    %11 = sbr.rel (0) target = $region9
  $region8: #{gcn_gat_autoencoder.10} parent=0 // pred_region
    _
  $region9: #{gcn_gat_autoencoder.10} parent=0 // pred_fallthru
    _
  // Predicated region
  $region10: #{gcn_gat_autoencoder.10} parent=0 // pred_check
    _
  $region11: #{gcn_gat_autoencoder.10} parent=0 // pred_check_branch
    %13 = sbr.rel (0) target = $region13
  $region12: #{gcn_gat_autoencoder.10} parent=0 // pred_region
    _
  $region13: #{gcn_gat_autoencoder.10} parent=0 // pred_fallthru
    _
  %p14 = scmp.eq.s32.totalorder 0, 0
  // Predicated region
  $region14: #{gcn_gat_autoencoder.10} parent=0 // pred_check
    %p15 = pneg %p14
  $region15: #{gcn_gat_autoencoder.10} parent=0 // pred_check_branch
    %17 = sbr.rel (%p15) target = $region17
  $region16: #{gcn_gat_autoencoder.10} parent=0 // pred_region
    %18 = vst [vmem:[#allocation2] sm:$0xff] 0.0
  $region17: #{gcn_gat_autoencoder.10} parent=0 // pred_fallthru
    _
  %v19 = vld [vmem:[#allocation2] sm:$0xff]
  %v20 = vld [vmem:[%s0] sm:$0xff]
  %v21 = vld [vmem:[%s1] sm:$0xff]
  %vm22 = vcmask 64512
  %v24 = vsel %vm22, %v20, 0
  %26 = vmatprep.subr.mxu0 0.0
  %27 = vmatpush1.msra.mxu0 0.0
  %28 = vmatprep.subr.mxu0 0.0
  %29 = vmatpush1.msra.mxu0 0.0
  %30 = vmatprep.subr.mxu0 0.0
  %31 = vmatpush1.msra.mxu0 0.0
  %32 = vmatprep.subr.mxu0 0.0
  %33 = vmatpush1.msra.mxu0 0.0
  %34 = vmatprep.subr.mxu0 0.0
  %35 = vmatpush1.msra.mxu0 0.0
  %36 = vmatprep.subr.mxu0 0.0
  %37 = vmatpush1.msra.mxu0 0.0
  %38 = vmatprep.subr.mxu0 0.0
  %39 = vmatpush1.msra.mxu0 0.0
  %40 = vmatprep.subr.mxu0 0.0
  %41 = vmatpush1.msra.mxu0 0.0
  %42 = vmatprep.subr.mxu0 0.0
  %43 = vmatpush1.msra.mxu0 0.0
  %44 = vmatprep.subr.mxu0 0.0
  %45 = vmatpush1.msra.mxu0 0.0
  %46 = vmatprep.subr.mxu0 0.0
  %47 = vmatpush1.msra.mxu0 0.0
  %48 = vmatprep.subr.mxu0 0.0
  %49 = vmatpush1.msra.mxu0 0.0
  %50 = vmatprep.subr.mxu0 0.0
  %51 = vmatpush1.msra.mxu0 0.0
  %52 = vmatprep.subr.mxu0 0.0
  %53 = vmatpush1.msra.mxu0 0.0
  %54 = vmatprep.subr.mxu0 0.0
  %55 = vmatpush1.msra.mxu0 0.0
  %56 = vmatprep.subr.mxu0 0.0
  %57 = vmatpush1.msra.mxu0 %v21
  %58 = vmatprep.subr.mxu0 0.0
  %59 = vmatpush2.msra.mxu0 0.0
  %60 = vmatprep.subr.mxu0 0.0
  %61 = vmatpush2.msra.mxu0 0.0
  %62 = vmatprep.subr.mxu0 0.0
  %63 = vmatpush2.msra.mxu0 0.0
  %64 = vmatprep.subr.mxu0 0.0
  %65 = vmatpush2.msra.mxu0 0.0
  %66 = vmatprep.subr.mxu0 0.0
  %67 = vmatpush2.msra.mxu0 0.0
  %68 = vmatprep.subr.mxu0 0.0
  %69 = vmatpush2.msra.mxu0 0.0
  %70 = vmatprep.subr.mxu0 0.0
  %71 = vmatpush2.msra.mxu0 0.0
  %72 = vmatprep.subr.mxu0 0.0
  %73 = vmatpush2.msra.mxu0 0.0
  %74 = vmatprep.subr.mxu0 0.0
  %75 = vmatpush2.msra.mxu0 0.0
  %76 = vmatprep.subr.mxu0 0.0
  %77 = vmatpush2.msra.mxu0 0.0
  %78 = vmatprep.subr.mxu0 0.0
  %79 = vmatpush2.msra.mxu0 0.0
  %80 = vmatprep.subr.mxu0 0.0
  %81 = vmatpush2.msra.mxu0 0.0
  %82 = vmatprep.subr.mxu0 0.0
  %83 = vmatpush2.msra.mxu0 0.0
  %84 = vmatprep.subr.mxu0 0.0
  %85 = vmatpush2.msra.mxu0 0.0
  %86 = vmatprep.subr.mxu0 0.0
  %87 = vmatpush2.msra.mxu0 0.0
  %88 = vmatprep.subr.mxu0 0.0
  %89 = vmatpush2.msra.mxu0 0.0
  %90 = vmatprep.mubr.f32.mxu0 0.0
  %91 = vmatmul.mubr.f32.gmra.mxu0 %v24
  %v92 = vpop.f32.mrf.mxu0
  %v93 = vadd.f32 0.0, %v92
  %v94 = vpop.f32.mrf.mxu0
  %95 = vdwg.mxu0
  %v96 = vadd.f32 %v19, %v93
  %97 = vst [vmem:[#allocation2] sm:$0xff] %v96
  // Predicated region
  $region18: #{gcn_gat_autoencoder.10} parent=0 // pred_check
    %p98 = pneg %p14
  $region19: #{gcn_gat_autoencoder.10} parent=0 // pred_check_branch
    %100 = sbr.rel (%p98) target = $region21
  $region20: #{gcn_gat_autoencoder.10} parent=0 // pred_region
    %v101 = vld [vmem:[#allocation2] sm:$0xff]
    %v102 = vld [vmem:[%s2] sm:$0x1]
    %v104 = vlaneseq
    %v105 = vshrl.u32 %v104, 7
    %v106 = vsub.s32 0, %v105
    %v107 = vrot.slane %v102, %v106
    %v109 = vadd.f32 %v101, %v107
    %v110 = vmax.f32 %v109, 0.0
    %111 = vst [vmem:[%s3] sm:$0xff] %v110
  $region21: #{gcn_gat_autoencoder.10} parent=0 // pred_fallthru
    _
  // Predicated region
  $region22: #{gcn_gat_autoencoder.10} parent=0 // pred_check
    _
  $region23: #{gcn_gat_autoencoder.10} parent=0 // pred_check_branch
    %113 = sbr.rel (0) target = $region25
  $region24: #{gcn_gat_autoencoder.10} parent=0 // pred_region
    _
  $region25: #{gcn_gat_autoencoder.10} parent=0 // pred_fallthru
    _
  // Predicated region
  $region26: #{gcn_gat_autoencoder.10} parent=0 // pred_check
    _
  $region27: #{gcn_gat_autoencoder.10} parent=0 // pred_check_branch
    %115 = sbr.rel (0) target = $region29
  $region28: #{gcn_gat_autoencoder.10} parent=0 // pred_region
    _
  $region29: #{gcn_gat_autoencoder.10} parent=0 // pred_fallthru
    _

// kernel: gcn_gat_autoencoder.15
$region0: #{gcn_gat_autoencoder.15}
  #allocation0 [shape = 'u32[]', space=smem, size = 0x4, offset = 0x4, fixed_abs, tag = 'smem constant byte address 0x4 - core index']
  #allocation1 [shape = 'u32[144,128]{1,0:T(1,128)}', space=vmem, size = 0x12000, scoped, tag = 'internal scratch']
  #allocation2 [shape = 'f32[8,128]{1,0:T(8,128)}', space=vmem, size = 0x1000, scoped, tag = 'scratch operand']
  %s0 = inlined_call_operand.vmem [shape: f32[8,8], index: 0, kind: input, shape index: {}]
  %s1 = inlined_call_operand.vmem [shape: f32[8,128], index: 1, kind: input, shape index: {}]
  %s2 = inlined_call_operand.vmem [shape: f32[1,128], index: 2, kind: input, shape index: {}]
  %s3 = inlined_call_operand.vmem [shape: f32[8,128], index: 3, kind: output, shape index: {}]
  %s4 = sld [smem:[#allocation0]]
  $region30: #{gcn_gat_autoencoder.15} parent=0
    _
  %s6 = ssub.s32 1, %s4
  %s7 = scalar_select 0, %s6, %s4
  // Predicated region
  $region2: #{gcn_gat_autoencoder.15} parent=0 // pred_check
    _
  $region3: #{gcn_gat_autoencoder.15} parent=0 // pred_check_branch
    %9 = sbr.rel (0) target = $region5
  $region4: #{gcn_gat_autoencoder.15} parent=0 // pred_region
    _
  $region5: #{gcn_gat_autoencoder.15} parent=0 // pred_fallthru
    _
  // Predicated region
  $region6: #{gcn_gat_autoencoder.15} parent=0 // pred_check
    _
  $region7: #{gcn_gat_autoencoder.15} parent=0 // pred_check_branch
    %11 = sbr.rel (0) target = $region9
  $region8: #{gcn_gat_autoencoder.15} parent=0 // pred_region
    _
  $region9: #{gcn_gat_autoencoder.15} parent=0 // pred_fallthru
    _
  // Predicated region
  $region10: #{gcn_gat_autoencoder.15} parent=0 // pred_check
    _
  $region11: #{gcn_gat_autoencoder.15} parent=0 // pred_check_branch
    %13 = sbr.rel (0) target = $region13
  $region12: #{gcn_gat_autoencoder.15} parent=0 // pred_region
    _
  $region13: #{gcn_gat_autoencoder.15} parent=0 // pred_fallthru
    _
  %p14 = scmp.eq.s32.totalorder 0, 0
  // Predicated region
  $region14: #{gcn_gat_autoencoder.15} parent=0 // pred_check
    %p15 = pneg %p14
  $region15: #{gcn_gat_autoencoder.15} parent=0 // pred_check_branch
    %17 = sbr.rel (%p15) target = $region17
  $region16: #{gcn_gat_autoencoder.15} parent=0 // pred_region
    %18 = vst [vmem:[#allocation2] sm:$0xff] 0.0
  $region17: #{gcn_gat_autoencoder.15} parent=0 // pred_fallthru
    _
  %v19 = vld [vmem:[#allocation2] sm:$0xff]
  %v20 = vld [vmem:[%s0] sm:$0xff]
  %v21 = vld [vmem:[%s1] sm:$0xff]
  %vm22 = vcmask 64512
  %v24 = vsel %vm22, %v20, 0
  %26 = vmatprep.subr.mxu0 0.0
  %27 = vmatpush1.msra.mxu0 0.0
  %28 = vmatprep.subr.mxu0 0.0
  %29 = vmatpush1.msra.mxu0 0.0
  %30 = vmatprep.subr.mxu0 0.0
  %31 = vmatpush1.msra.mxu0 0.0
  %32 = vmatprep.subr.mxu0 0.0
  %33 = vmatpush1.msra.mxu0 0.0
  %34 = vmatprep.subr.mxu0 0.0
  %35 = vmatpush1.msra.mxu0 0.0
  %36 = vmatprep.subr.mxu0 0.0
  %37 = vmatpush1.msra.mxu0 0.0
  %38 = vmatprep.subr.mxu0 0.0
  %39 = vmatpush1.msra.mxu0 0.0
  %40 = vmatprep.subr.mxu0 0.0
  %41 = vmatpush1.msra.mxu0 0.0
  %42 = vmatprep.subr.mxu0 0.0
  %43 = vmatpush1.msra.mxu0 0.0
  %44 = vmatprep.subr.mxu0 0.0
  %45 = vmatpush1.msra.mxu0 0.0
  %46 = vmatprep.subr.mxu0 0.0
  %47 = vmatpush1.msra.mxu0 0.0
  %48 = vmatprep.subr.mxu0 0.0
  %49 = vmatpush1.msra.mxu0 0.0
  %50 = vmatprep.subr.mxu0 0.0
  %51 = vmatpush1.msra.mxu0 0.0
  %52 = vmatprep.subr.mxu0 0.0
  %53 = vmatpush1.msra.mxu0 0.0
  %54 = vmatprep.subr.mxu0 0.0
  %55 = vmatpush1.msra.mxu0 0.0
  %56 = vmatprep.subr.mxu0 0.0
  %57 = vmatpush1.msra.mxu0 %v21
  %58 = vmatprep.subr.mxu0 0.0
  %59 = vmatpush2.msra.mxu0 0.0
  %60 = vmatprep.subr.mxu0 0.0
  %61 = vmatpush2.msra.mxu0 0.0
  %62 = vmatprep.subr.mxu0 0.0
  %63 = vmatpush2.msra.mxu0 0.0
  %64 = vmatprep.subr.mxu0 0.0
  %65 = vmatpush2.msra.mxu0 0.0
  %66 = vmatprep.subr.mxu0 0.0
  %67 = vmatpush2.msra.mxu0 0.0
  %68 = vmatprep.subr.mxu0 0.0
  %69 = vmatpush2.msra.mxu0 0.0
  %70 = vmatprep.subr.mxu0 0.0
  %71 = vmatpush2.msra.mxu0 0.0
  %72 = vmatprep.subr.mxu0 0.0
  %73 = vmatpush2.msra.mxu0 0.0
  %74 = vmatprep.subr.mxu0 0.0
  %75 = vmatpush2.msra.mxu0 0.0
  %76 = vmatprep.subr.mxu0 0.0
  %77 = vmatpush2.msra.mxu0 0.0
  %78 = vmatprep.subr.mxu0 0.0
  %79 = vmatpush2.msra.mxu0 0.0
  %80 = vmatprep.subr.mxu0 0.0
  %81 = vmatpush2.msra.mxu0 0.0
  %82 = vmatprep.subr.mxu0 0.0
  %83 = vmatpush2.msra.mxu0 0.0
  %84 = vmatprep.subr.mxu0 0.0
  %85 = vmatpush2.msra.mxu0 0.0
  %86 = vmatprep.subr.mxu0 0.0
  %87 = vmatpush2.msra.mxu0 0.0
  %88 = vmatprep.subr.mxu0 0.0
  %89 = vmatpush2.msra.mxu0 0.0
  %90 = vmatprep.mubr.f32.mxu0 0.0
  %91 = vmatmul.mubr.f32.gmra.mxu0 %v24
  %v92 = vpop.f32.mrf.mxu0
  %v93 = vadd.f32 0.0, %v92
  %v94 = vpop.f32.mrf.mxu0
  %95 = vdwg.mxu0
  %v96 = vadd.f32 %v19, %v93
  %97 = vst [vmem:[#allocation2] sm:$0xff] %v96
  // Predicated region
  $region18: #{gcn_gat_autoencoder.15} parent=0 // pred_check
    %p98 = pneg %p14
  $region19: #{gcn_gat_autoencoder.15} parent=0 // pred_check_branch
    %100 = sbr.rel (%p98) target = $region21
  $region20: #{gcn_gat_autoencoder.15} parent=0 // pred_region
    %v101 = vld [vmem:[#allocation2] sm:$0xff]
    %v102 = vld [vmem:[%s2] sm:$0x1]
    %v104 = vlaneseq
    %v105 = vshrl.u32 %v104, 7
    %v106 = vsub.s32 0, %v105
    %v107 = vrot.slane %v102, %v106
    %v109 = vadd.f32 %v101, %v107
    %110 = vst [vmem:[%s3] sm:$0xff] %v109
  $region21: #{gcn_gat_autoencoder.15} parent=0 // pred_fallthru
    _
  // Predicated region
  $region22: #{gcn_gat_autoencoder.15} parent=0 // pred_check
    _
  $region23: #{gcn_gat_autoencoder.15} parent=0 // pred_check_branch
    %112 = sbr.rel (0) target = $region25
  $region24: #{gcn_gat_autoencoder.15} parent=0 // pred_region
    _
  $region25: #{gcn_gat_autoencoder.15} parent=0 // pred_fallthru
    _
  // Predicated region
  $region26: #{gcn_gat_autoencoder.15} parent=0 // pred_check
    _
  $region27: #{gcn_gat_autoencoder.15} parent=0 // pred_check_branch
    %114 = sbr.rel (0) target = $region29
  $region28: #{gcn_gat_autoencoder.15} parent=0 // pred_region
    _
  $region29: #{gcn_gat_autoencoder.15} parent=0 // pred_fallthru
    _

// kernel: gcn_gat_autoencoder.16
$region0: #{gcn_gat_autoencoder.16}
  #allocation0 [shape = 'u32[]', space=smem, size = 0x4, offset = 0x4, fixed_abs, tag = 'smem constant byte address 0x4 - core index']
  #allocation1 [shape = 'u32[144,128]{1,0:T(1,128)}', space=vmem, size = 0x12000, scoped, tag = 'internal scratch']
  %s0 = inlined_call_operand.vmem [shape: f32[8,128], index: 0, kind: input, shape index: {}]
  %s1 = inlined_call_operand.vmem [shape: f32[128,128], index: 1, kind: input, shape index: {}]
  %s2 = inlined_call_operand.vmem [shape: f32[1,128], index: 2, kind: input, shape index: {}]
  %s3 = inlined_call_operand.vmem [shape: f32[8,128], index: 3, kind: output, shape index: {}]
  %s4 = sld [smem:[#allocation0]]
  $region22: #{gcn_gat_autoencoder.16} parent=0
    _
  %s6 = ssub.s32 1, %s4
  %s7 = scalar_select 0, %s6, %s4
  // Predicated region
  $region2: #{gcn_gat_autoencoder.16} parent=0 // pred_check
    _
  $region3: #{gcn_gat_autoencoder.16} parent=0 // pred_check_branch
    %9 = sbr.rel (0) target = $region5
  $region4: #{gcn_gat_autoencoder.16} parent=0 // pred_region
    _
  $region5: #{gcn_gat_autoencoder.16} parent=0 // pred_fallthru
    _
  // Predicated region
  $region6: #{gcn_gat_autoencoder.16} parent=0 // pred_check
    _
  $region7: #{gcn_gat_autoencoder.16} parent=0 // pred_check_branch
    %11 = sbr.rel (0) target = $region9
  $region8: #{gcn_gat_autoencoder.16} parent=0 // pred_region
    _
  $region9: #{gcn_gat_autoencoder.16} parent=0 // pred_fallthru
    _
  // Predicated region
  $region10: #{gcn_gat_autoencoder.16} parent=0 // pred_check
    _
  $region11: #{gcn_gat_autoencoder.16} parent=0 // pred_check_branch
    %13 = sbr.rel (0) target = $region13
  $region12: #{gcn_gat_autoencoder.16} parent=0 // pred_region
    _
  $region13: #{gcn_gat_autoencoder.16} parent=0 // pred_fallthru
    _
  %v14 = vld [vmem:[%s0] sm:$0xff]
  %v15 = vld [vmem:[%s1] sm:$0xff]
  %v16 = vld [vmem:[%s1 + $0x8] sm:$0xff]
  %v17 = vld [vmem:[%s1 + $0x10] sm:$0xff]
  %v18 = vld [vmem:[%s1 + $0x18] sm:$0xff]
  %v19 = vld [vmem:[%s1 + $0x20] sm:$0xff]
  %v20 = vld [vmem:[%s1 + $0x28] sm:$0xff]
  %v21 = vld [vmem:[%s1 + $0x30] sm:$0xff]
  %v22 = vld [vmem:[%s1 + $0x38] sm:$0xff]
  %v23 = vld [vmem:[%s1 + $0x40] sm:$0xff]
  %v24 = vld [vmem:[%s1 + $0x48] sm:$0xff]
  %v25 = vld [vmem:[%s1 + $0x50] sm:$0xff]
  %v26 = vld [vmem:[%s1 + $0x58] sm:$0xff]
  %v27 = vld [vmem:[%s1 + $0x60] sm:$0xff]
  %v28 = vld [vmem:[%s1 + $0x68] sm:$0xff]
  %v29 = vld [vmem:[%s1 + $0x70] sm:$0xff]
  %v30 = vld [vmem:[%s1 + $0x78] sm:$0xff]
  %v31 = vld [vmem:[%s2] sm:$0x1]
  %v33 = vlaneseq
  %v34 = vshrl.u32 %v33, 7
  %v35 = vsub.s32 0, %v34
  %v36 = vrot.slane %v31, %v35
  %38 = vmatprep.subr.mxu0 0.0
  %39 = vmatpush1.xpose.msra.mxu0 %v30
  %40 = vmatprep.subr.mxu0 0.0
  %41 = vmatpush1.xpose.msra.mxu0 %v29
  %42 = vmatprep.subr.mxu0 0.0
  %43 = vmatpush1.xpose.msra.mxu0 %v28
  %44 = vmatprep.subr.mxu0 0.0
  %45 = vmatpush1.xpose.msra.mxu0 %v27
  %46 = vmatprep.subr.mxu0 0.0
  %47 = vmatpush1.xpose.msra.mxu0 %v26
  %48 = vmatprep.subr.mxu0 0.0
  %49 = vmatpush1.xpose.msra.mxu0 %v25
  %50 = vmatprep.subr.mxu0 0.0
  %51 = vmatpush1.xpose.msra.mxu0 %v24
  %52 = vmatprep.subr.mxu0 0.0
  %53 = vmatpush1.xpose.msra.mxu0 %v23
  %54 = vmatprep.subr.mxu0 0.0
  %55 = vmatpush1.xpose.msra.mxu0 %v22
  %56 = vmatprep.subr.mxu0 0.0
  %57 = vmatpush1.xpose.msra.mxu0 %v21
  %58 = vmatprep.subr.mxu0 0.0
  %59 = vmatpush1.xpose.msra.mxu0 %v20
  %60 = vmatprep.subr.mxu0 0.0
  %61 = vmatpush1.xpose.msra.mxu0 %v19
  %62 = vmatprep.subr.mxu0 0.0
  %63 = vmatpush1.xpose.msra.mxu0 %v18
  %64 = vmatprep.subr.mxu0 0.0
  %65 = vmatpush1.xpose.msra.mxu0 %v17
  %66 = vmatprep.subr.mxu0 0.0
  %67 = vmatpush1.xpose.msra.mxu0 %v16
  %68 = vmatprep.subr.mxu0 0.0
  %69 = vmatpush1.xpose.msra.mxu0 %v15
  %70 = vmatprep.subr.mxu0 0.0
  %71 = vmatpush2.xpose.msra.mxu0 0.0
  %72 = vmatprep.subr.mxu0 0.0
  %73 = vmatpush2.xpose.msra.mxu0 0.0
  %74 = vmatprep.subr.mxu0 0.0
  %75 = vmatpush2.xpose.msra.mxu0 0.0
  %76 = vmatprep.subr.mxu0 0.0
  %77 = vmatpush2.xpose.msra.mxu0 0.0
  %78 = vmatprep.subr.mxu0 0.0
  %79 = vmatpush2.xpose.msra.mxu0 0.0
  %80 = vmatprep.subr.mxu0 0.0
  %81 = vmatpush2.xpose.msra.mxu0 0.0
  %82 = vmatprep.subr.mxu0 0.0
  %83 = vmatpush2.xpose.msra.mxu0 0.0
  %84 = vmatprep.subr.mxu0 0.0
  %85 = vmatpush2.xpose.msra.mxu0 0.0
  %86 = vmatprep.subr.mxu0 0.0
  %87 = vmatpush2.xpose.msra.mxu0 0.0
  %88 = vmatprep.subr.mxu0 0.0
  %89 = vmatpush2.xpose.msra.mxu0 0.0
  %90 = vmatprep.subr.mxu0 0.0
  %91 = vmatpush2.xpose.msra.mxu0 0.0
  %92 = vmatprep.subr.mxu0 0.0
  %93 = vmatpush2.xpose.msra.mxu0 0.0
  %94 = vmatprep.subr.mxu0 0.0
  %95 = vmatpush2.xpose.msra.mxu0 0.0
  %96 = vmatprep.subr.mxu0 0.0
  %97 = vmatpush2.xpose.msra.mxu0 0.0
  %98 = vmatprep.subr.mxu0 0.0
  %99 = vmatpush2.xpose.msra.mxu0 0.0
  %100 = vmatprep.subr.mxu0 0.0
  %101 = vmatpush2.xpose.msra.mxu0 0.0
  %102 = vmatprep.mubr.f32.mxu0 0.0
  %103 = vmatmul.mubr.f32.gmra.mxu0 %v14
  %v104 = vpop.f32.mrf.mxu0
  %v105 = vadd.f32 %v36, %v104
  %v106 = vpop.f32.mrf.mxu0
  %107 = vdwg.mxu0
  %v108 = vmax.f32 %v105, 0.0
  %109 = vst [vmem:[%s3] sm:$0xff] %v108
  // Predicated region
  $region14: #{gcn_gat_autoencoder.16} parent=0 // pred_check
    _
  $region15: #{gcn_gat_autoencoder.16} parent=0 // pred_check_branch
    %111 = sbr.rel (0) target = $region17
  $region16: #{gcn_gat_autoencoder.16} parent=0 // pred_region
    _
  $region17: #{gcn_gat_autoencoder.16} parent=0 // pred_fallthru
    _
  // Predicated region
  $region18: #{gcn_gat_autoencoder.16} parent=0 // pred_check
    _
  $region19: #{gcn_gat_autoencoder.16} parent=0 // pred_check_branch
    %113 = sbr.rel (0) target = $region21
  $region20: #{gcn_gat_autoencoder.16} parent=0 // pred_region
    _
  $region21: #{gcn_gat_autoencoder.16} parent=0 // pred_fallthru
    _

// kernel: gcn_gat_autoencoder.17
$region0: #{gcn_gat_autoencoder.17}
  #allocation0 [shape = 'u32[]', space=smem, size = 0x4, offset = 0x4, fixed_abs, tag = 'smem constant byte address 0x4 - core index']
  #allocation1 [shape = 'u32[144,128]{1,0:T(1,128)}', space=vmem, size = 0x12000, scoped, tag = 'internal scratch']
  %s0 = inlined_call_operand.vmem [shape: f32[8,128], index: 0, kind: input, shape index: {}, may-alias: {0,1}]
  %s1 = inlined_call_operand.vmem [shape: f32[8,128], index: 1, kind: input, shape index: {}, may-alias: {0,1}]
  %s2 = inlined_call_operand.hbm [shape: f32[8,8], index: 2, kind: output, shape index: {}]
  %s3 = sld [smem:[#allocation0]]
  $region18: #{gcn_gat_autoencoder.17} parent=0
    _
  %s5 = ssub.s32 1, %s3
  %s6 = scalar_select 0, %s5, %s3
  $region1: #{gcn_gat_autoencoder.17} parent=0
    #allocation2 [shape = 'u8[4096]{0}', space=vmem, size = 0x1000, scoped, tag = 'output window, operand 0, single buffered']
    #allocation3 [shape = 's32[1]{0}', space=sflag, size = 0x4, scoped, tag = 'scoped memory for gcn_gat_autoencoder.17']
    %7 = vsyncpa [#allocation3], 0
    // Predicated region
    $region2: #{gcn_gat_autoencoder.17} parent=1 // pred_check
      _
    $region3: #{gcn_gat_autoencoder.17} parent=1 // pred_check_branch
      %9 = sbr.rel (0) target = $region5
    $region4: #{gcn_gat_autoencoder.17} parent=1 // pred_region
      _
    $region5: #{gcn_gat_autoencoder.17} parent=1 // pred_fallthru
      _
    // Predicated region
    $region6: #{gcn_gat_autoencoder.17} parent=1 // pred_check
      _
    $region7: #{gcn_gat_autoencoder.17} parent=1 // pred_check_branch
      %11 = sbr.rel (0) target = $region9
    $region8: #{gcn_gat_autoencoder.17} parent=1 // pred_region
      _
    $region9: #{gcn_gat_autoencoder.17} parent=1 // pred_fallthru
      _
    %v12 = vld [vmem:[%s0] sm:$0xff]
    %v13 = vld [vmem:[%s1] sm:$0xff]
    %14 = vmatprep.subr.mxu0 0.0
    %15 = vmatpush1.xpose.msra.mxu0 0.0
    %16 = vmatprep.subr.mxu0 0.0
    %17 = vmatpush1.xpose.msra.mxu0 0.0
    %18 = vmatprep.subr.mxu0 0.0
    %19 = vmatpush1.xpose.msra.mxu0 0.0
    %20 = vmatprep.subr.mxu0 0.0
    %21 = vmatpush1.xpose.msra.mxu0 0.0
    %22 = vmatprep.subr.mxu0 0.0
    %23 = vmatpush1.xpose.msra.mxu0 0.0
    %24 = vmatprep.subr.mxu0 0.0
    %25 = vmatpush1.xpose.msra.mxu0 0.0
    %26 = vmatprep.subr.mxu0 0.0
    %27 = vmatpush1.xpose.msra.mxu0 0.0
    %28 = vmatprep.subr.mxu0 0.0
    %29 = vmatpush1.xpose.msra.mxu0 0.0
    %30 = vmatprep.subr.mxu0 0.0
    %31 = vmatpush1.xpose.msra.mxu0 0.0
    %32 = vmatprep.subr.mxu0 0.0
    %33 = vmatpush1.xpose.msra.mxu0 0.0
    %34 = vmatprep.subr.mxu0 0.0
    %35 = vmatpush1.xpose.msra.mxu0 0.0
    %36 = vmatprep.subr.mxu0 0.0
    %37 = vmatpush1.xpose.msra.mxu0 0.0
    %38 = vmatprep.subr.mxu0 0.0
    %39 = vmatpush1.xpose.msra.mxu0 0.0
    %40 = vmatprep.subr.mxu0 0.0
    %41 = vmatpush1.xpose.msra.mxu0 0.0
    %42 = vmatprep.subr.mxu0 0.0
    %43 = vmatpush1.xpose.msra.mxu0 0.0
    %44 = vmatprep.subr.mxu0 0.0
    %45 = vmatpush1.xpose.msra.mxu0 %v13
    %46 = vmatprep.subr.mxu0 0.0
    %47 = vmatpush2.xpose.msra.mxu0 0.0
    %48 = vmatprep.subr.mxu0 0.0
    %49 = vmatpush2.xpose.msra.mxu0 0.0
    %50 = vmatprep.subr.mxu0 0.0
    %51 = vmatpush2.xpose.msra.mxu0 0.0
    %52 = vmatprep.subr.mxu0 0.0
    %53 = vmatpush2.xpose.msra.mxu0 0.0
    %54 = vmatprep.subr.mxu0 0.0
    %55 = vmatpush2.xpose.msra.mxu0 0.0
    %56 = vmatprep.subr.mxu0 0.0
    %57 = vmatpush2.xpose.msra.mxu0 0.0
    %58 = vmatprep.subr.mxu0 0.0
    %59 = vmatpush2.xpose.msra.mxu0 0.0
    %60 = vmatprep.subr.mxu0 0.0
    %61 = vmatpush2.xpose.msra.mxu0 0.0
    %62 = vmatprep.subr.mxu0 0.0
    %63 = vmatpush2.xpose.msra.mxu0 0.0
    %64 = vmatprep.subr.mxu0 0.0
    %65 = vmatpush2.xpose.msra.mxu0 0.0
    %66 = vmatprep.subr.mxu0 0.0
    %67 = vmatpush2.xpose.msra.mxu0 0.0
    %68 = vmatprep.subr.mxu0 0.0
    %69 = vmatpush2.xpose.msra.mxu0 0.0
    %70 = vmatprep.subr.mxu0 0.0
    %71 = vmatpush2.xpose.msra.mxu0 0.0
    %72 = vmatprep.subr.mxu0 0.0
    %73 = vmatpush2.xpose.msra.mxu0 0.0
    %74 = vmatprep.subr.mxu0 0.0
    %75 = vmatpush2.xpose.msra.mxu0 0.0
    %76 = vmatprep.subr.mxu0 0.0
    %77 = vmatpush2.xpose.msra.mxu0 0.0
    %78 = vmatprep.mubr.f32.mxu0 0.0
    %79 = vmatmul.mubr.f32.gmra.mxu0 %v12
    %v80 = vpop.f32.mrf.mxu0
    %v81 = vadd.f32 0.0, %v80
    %v82 = vpop.f32.mrf.mxu0
    %83 = vdwg.mxu0
    %vm84 = vcmask 64512
    %85 = vst.msk [vmem:[#allocation2] sm:$0xff] %vm84, %v81
    // Predicated region
    $region10: #{gcn_gat_autoencoder.17} parent=1 // pred_check
      _
    $region11: #{gcn_gat_autoencoder.17} parent=1 // pred_check_branch
      %87 = sbr.rel (0) target = $region13
    $region12: #{gcn_gat_autoencoder.17} parent=1 // pred_region
      %s89 = ssub.s32 128, 128
      %90 = vsyncadd [#allocation3], %s89
      %s92 = sshll.u32 [#allocation2], 4
      %s93 = int_to_ptr.vmem [resolvable:$true] %s92
      %95 = dma.vmem_to_hbm [thread:$0]  %s93, 128, %s2, [#allocation3]
    $region13: #{gcn_gat_autoencoder.17} parent=1 // pred_fallthru
      _
    // Predicated region
    $region14: #{gcn_gat_autoencoder.17} parent=1 // pred_check
      _
    $region15: #{gcn_gat_autoencoder.17} parent=1 // pred_check_branch
      %97 = sbr.rel (0) target = $region17
    $region16: #{gcn_gat_autoencoder.17} parent=1 // pred_region
      %98 = dma.done [#allocation3], 128
    $region17: #{gcn_gat_autoencoder.17} parent=1 // pred_fallthru
      _
    %99 = vsyncpa [#allocation3], 1

// kernel: gcn_gat_autoencoder.13
$region0: #{gcn_gat_autoencoder.13}
  #allocation0 [shape = 'u32[]', space=smem, size = 0x4, offset = 0x4, fixed_abs, tag = 'smem constant byte address 0x4 - core index']
  #allocation1 [shape = 'u32[144,128]{1,0:T(1,128)}', space=vmem, size = 0x12000, scoped, tag = 'internal scratch']
  #allocation2 [shape = 'f32[8,1]{1,0:T(8,128)}', space=vmem, size = 0x1000, scoped, tag = 'scratch operand']
  #allocation3 [shape = 'f32[8,1]{1,0:T(8,128)}', space=vmem, size = 0x1000, scoped, tag = 'scratch operand']
  #allocation4 [shape = 'f32[8,128]{1,0:T(8,128)}', space=vmem, size = 0x1000, scoped, tag = 'scratch operand']
  %s0 = inlined_call_operand.vmem [shape: f32[8,8], index: 0, kind: input, shape index: {}]
  %s1 = inlined_call_operand.vmem [shape: f32[8,8], index: 1, kind: input, shape index: {}]
  %s2 = inlined_call_operand.vmem [shape: f32[128,8], index: 2, kind: input, shape index: {}]
  %s3 = inlined_call_operand.vmem [shape: f32[8,128], index: 3, kind: input, shape index: {}]
  %s4 = inlined_call_operand.vmem [shape: f32[1,128], index: 4, kind: input, shape index: {}]
  %s5 = inlined_call_operand.vmem [shape: f32[1,128], index: 5, kind: input, shape index: {}]
  %s6 = inlined_call_operand.vmem [shape: f32[1,128], index: 6, kind: input, shape index: {}]
  %s7 = inlined_call_operand.vmem [shape: f32[8,128], index: 7, kind: output, shape index: {}]
  %s8 = sld [smem:[#allocation0]]
  $region46: #{gcn_gat_autoencoder.13} parent=0
    _
  %s10 = ssub.s32 1, %s8
  %s11 = scalar_select 0, %s10, %s8
  // Predicated region
  $region2: #{gcn_gat_autoencoder.13} parent=0 // pred_check
    _
  $region3: #{gcn_gat_autoencoder.13} parent=0 // pred_check_branch
    %13 = sbr.rel (0) target = $region5
  $region4: #{gcn_gat_autoencoder.13} parent=0 // pred_region
    _
  $region5: #{gcn_gat_autoencoder.13} parent=0 // pred_fallthru
    _
  // Predicated region
  $region6: #{gcn_gat_autoencoder.13} parent=0 // pred_check
    _
  $region7: #{gcn_gat_autoencoder.13} parent=0 // pred_check_branch
    %15 = sbr.rel (0) target = $region9
  $region8: #{gcn_gat_autoencoder.13} parent=0 // pred_region
    _
  $region9: #{gcn_gat_autoencoder.13} parent=0 // pred_fallthru
    _
  // Predicated region
  $region10: #{gcn_gat_autoencoder.13} parent=0 // pred_check
    _
  $region11: #{gcn_gat_autoencoder.13} parent=0 // pred_check_branch
    %17 = sbr.rel (0) target = $region13
  $region12: #{gcn_gat_autoencoder.13} parent=0 // pred_region
    _
  $region13: #{gcn_gat_autoencoder.13} parent=0 // pred_fallthru
    _
  // Predicated region
  $region14: #{gcn_gat_autoencoder.13} parent=0 // pred_check
    _
  $region15: #{gcn_gat_autoencoder.13} parent=0 // pred_check_branch
    %19 = sbr.rel (0) target = $region17
  $region16: #{gcn_gat_autoencoder.13} parent=0 // pred_region
    _
  $region17: #{gcn_gat_autoencoder.13} parent=0 // pred_fallthru
    _
  // Predicated region
  $region18: #{gcn_gat_autoencoder.13} parent=0 // pred_check
    _
  $region19: #{gcn_gat_autoencoder.13} parent=0 // pred_check_branch
    %21 = sbr.rel (0) target = $region21
  $region20: #{gcn_gat_autoencoder.13} parent=0 // pred_region
    _
  $region21: #{gcn_gat_autoencoder.13} parent=0 // pred_fallthru
    _
  // Predicated region
  $region22: #{gcn_gat_autoencoder.13} parent=0 // pred_check
    _
  $region23: #{gcn_gat_autoencoder.13} parent=0 // pred_check_branch
    %23 = sbr.rel (0) target = $region25
  $region24: #{gcn_gat_autoencoder.13} parent=0 // pred_region
    _
  $region25: #{gcn_gat_autoencoder.13} parent=0 // pred_fallthru
    _
  // Predicated region
  $region26: #{gcn_gat_autoencoder.13} parent=0 // pred_check
    _
  $region27: #{gcn_gat_autoencoder.13} parent=0 // pred_check_branch
    %25 = sbr.rel (0) target = $region29
  $region28: #{gcn_gat_autoencoder.13} parent=0 // pred_region
    _
  $region29: #{gcn_gat_autoencoder.13} parent=0 // pred_fallthru
    _
  %p26 = scmp.eq.s32.totalorder 0, 0
  // Predicated region
  $region30: #{gcn_gat_autoencoder.13} parent=0 // pred_check
    %p27 = pneg %p26
  $region31: #{gcn_gat_autoencoder.13} parent=0 // pred_check_branch
    %29 = sbr.rel (%p27) target = $region33
  $region32: #{gcn_gat_autoencoder.13} parent=0 // pred_region
    %vm30 = vcmask 7168
    %31 = vst.msk [vmem:[#allocation2] sm:$0xff] %vm30, -1e+30
    %32 = vst.msk [vmem:[#allocation3] sm:$0xff] %vm30, 0.0
    %33 = vst [vmem:[#allocation4] sm:$0xff] 0.0
  $region33: #{gcn_gat_autoencoder.13} parent=0 // pred_fallthru
    _
  %v34 = vld [vmem:[%s0] sm:$0xff]
  %vm35 = vcmp.gt.f32.partialorder %v34, 0.0
  %v36 = vld [vmem:[%s1] sm:$0xff]
  %v37 = vld [vmem:[%s3] sm:$0xff]
  %v38 = vld [vmem:[%s2] sm:$0xff]
  %v39 = vld [vmem:[%s2 + $0x8] sm:$0xff]
  %v40 = vld [vmem:[%s2 + $0x10] sm:$0xff]
  %v41 = vld [vmem:[%s2 + $0x18] sm:$0xff]
  %v42 = vld [vmem:[%s2 + $0x20] sm:$0xff]
  %v43 = vld [vmem:[%s2 + $0x28] sm:$0xff]
  %v44 = vld [vmem:[%s2 + $0x30] sm:$0xff]
  %v45 = vld [vmem:[%s2 + $0x38] sm:$0xff]
  %v46 = vld [vmem:[%s2 + $0x40] sm:$0xff]
  %v47 = vld [vmem:[%s2 + $0x48] sm:$0xff]
  %v48 = vld [vmem:[%s2 + $0x50] sm:$0xff]
  %v49 = vld [vmem:[%s2 + $0x58] sm:$0xff]
  %v50 = vld [vmem:[%s2 + $0x60] sm:$0xff]
  %v51 = vld [vmem:[%s2 + $0x68] sm:$0xff]
  %v52 = vld [vmem:[%s2 + $0x70] sm:$0xff]
  %v53 = vld [vmem:[%s2 + $0x78] sm:$0xff]
  %v54 = vld [vmem:[%s4] sm:$0x1]
  %v55 = vld [vmem:[%s5] sm:$0x1]
  %57 = vset.pattern.permute.xlu0 0
  %58 = vperm.xlu0 %57, %v37
  %v59 = vpop.permute.xlu0 %58
  %v61 = vlaneseq
  %v62 = vshrl.u32 %v61, 7
  %v63 = vsub.s32 0, %v62
  %v64 = vrot.slane %v38, %v63
  %v65 = vadd.f32 %v59, %v64
  %v67 = vlaneseq
  %v68 = vshrl.u32 %v67, 7
  %v69 = vsub.s32 0, %v68
  %v70 = vrot.slane %v54, %v69
  %71 = vset.pattern.permute.xlu0 0
  %72 = vperm.xlu0 %71, %v70
  %v73 = vpop.permute.xlu0 %72
  %v75 = vmul.f32 %v73, %v36
  %v76 = vadd.f32 %v65, %v75
  %vm77 = vcmp.ge.f32.partialorder %v76, 0.0
  %v78 = vmul.f32 %v76, 0.2
  %v79 = vsel %vm77, %v76, %v78
  %v81 = vlaneseq
  %v82 = vshrl.u32 %v81, 7
  %v83 = vsub.s32 0, %v82
  %v84 = vrot.slane %v55, %v83
  %85 = vset.pattern.permute.xlu0 0
  %86 = vperm.xlu0 %85, %v84
  %v87 = vpop.permute.xlu0 %86
  %v89 = vmul.f32 %v87, %v79
  %v90 = vadd.f32 %v89, 0.0
  %91 = vset.pattern.permute.xlu0 1
  %92 = vperm.xlu0 %91, %v37
  %v93 = vpop.permute.xlu0 %92
  %v95 = vlaneseq
  %v96 = vshrl.u32 %v95, 7
  %v97 = vsub.s32 1, %v96
  %v98 = vrot.slane %v38, %v97
  %v99 = vadd.f32 %v93, %v98
  %100 = vset.pattern.permute.xlu0 1
  %101 = vperm.xlu0 %100, %v70
  %v102 = vpop.permute.xlu0 %101
  %v104 = vmul.f32 %v102, %v36
  %v105 = vadd.f32 %v99, %v104
  %vm106 = vcmp.ge.f32.partialorder %v105, 0.0
  %v107 = vmul.f32 %v105, 0.2
  %v108 = vsel %vm106, %v105, %v107
  %109 = vset.pattern.permute.xlu0 1
  %110 = vperm.xlu0 %109, %v84
  %v111 = vpop.permute.xlu0 %110
  %v113 = vmul.f32 %v111, %v108
  %v114 = vadd.f32 %v90, %v113
  %115 = vset.pattern.permute.xlu0 2
  %116 = vperm.xlu0 %115, %v37
  %v117 = vpop.permute.xlu0 %116
  %v119 = vlaneseq
  %v120 = vshrl.u32 %v119, 7
  %v121 = vsub.s32 2, %v120
  %v122 = vrot.slane %v38, %v121
  %v123 = vadd.f32 %v117, %v122
  %124 = vset.pattern.permute.xlu0 2
  %125 = vperm.xlu0 %124, %v70
  %v126 = vpop.permute.xlu0 %125
  %v128 = vmul.f32 %v126, %v36
  %v129 = vadd.f32 %v123, %v128
  %vm130 = vcmp.ge.f32.partialorder %v129, 0.0
  %v131 = vmul.f32 %v129, 0.2
  %v132 = vsel %vm130, %v129, %v131
  %133 = vset.pattern.permute.xlu0 2
  %134 = vperm.xlu0 %133, %v84
  %v135 = vpop.permute.xlu0 %134
  %v137 = vmul.f32 %v135, %v132
  %v138 = vadd.f32 %v114, %v137
  %139 = vset.pattern.permute.xlu0 3
  %140 = vperm.xlu0 %139, %v37
  %v141 = vpop.permute.xlu0 %140
  %v143 = vlaneseq
  %v144 = vshrl.u32 %v143, 7
  %v145 = vsub.s32 3, %v144
  %v146 = vrot.slane %v38, %v145
  %v147 = vadd.f32 %v141, %v146
  %148 = vset.pattern.permute.xlu0 3
  %149 = vperm.xlu0 %148, %v70
  %v150 = vpop.permute.xlu0 %149
  %v152 = vmul.f32 %v150, %v36
  %v153 = vadd.f32 %v147, %v152
  %vm154 = vcmp.ge.f32.partialorder %v153, 0.0
  %v155 = vmul.f32 %v153, 0.2
  %v156 = vsel %vm154, %v153, %v155
  %157 = vset.pattern.permute.xlu0 3
  %158 = vperm.xlu0 %157, %v84
  %v159 = vpop.permute.xlu0 %158
  %v161 = vmul.f32 %v159, %v156
  %v162 = vadd.f32 %v138, %v161
  %163 = vset.pattern.permute.xlu0 4
  %164 = vperm.xlu0 %163, %v37
  %v165 = vpop.permute.xlu0 %164
  %v167 = vlaneseq
  %v168 = vshrl.u32 %v167, 7
  %v169 = vsub.s32 4, %v168
  %v170 = vrot.slane %v38, %v169
  %v171 = vadd.f32 %v165, %v170
  %172 = vset.pattern.permute.xlu0 4
  %173 = vperm.xlu0 %172, %v70
  %v174 = vpop.permute.xlu0 %173
  %v176 = vmul.f32 %v174, %v36
  %v177 = vadd.f32 %v171, %v176
  %vm178 = vcmp.ge.f32.partialorder %v177, 0.0
  %v179 = vmul.f32 %v177, 0.2
  %v180 = vsel %vm178, %v177, %v179
  %181 = vset.pattern.permute.xlu0 4
  %182 = vperm.xlu0 %181, %v84
  %v183 = vpop.permute.xlu0 %182
  %v185 = vmul.f32 %v183, %v180
  %v186 = vadd.f32 %v162, %v185
  %187 = vset.pattern.permute.xlu0 5
  %188 = vperm.xlu0 %187, %v37
  %v189 = vpop.permute.xlu0 %188
  %v191 = vlaneseq
  %v192 = vshrl.u32 %v191, 7
  %v193 = vsub.s32 5, %v192
  %v194 = vrot.slane %v38, %v193
  %v195 = vadd.f32 %v189, %v194
  %196 = vset.pattern.permute.xlu0 5
  %197 = vperm.xlu0 %196, %v70
  %v198 = vpop.permute.xlu0 %197
  %v200 = vmul.f32 %v198, %v36
  %v201 = vadd.f32 %v195, %v200
  %vm202 = vcmp.ge.f32.partialorder %v201, 0.0
  %v203 = vmul.f32 %v201, 0.2
  %v204 = vsel %vm202, %v201, %v203
  %205 = vset.pattern.permute.xlu0 5
  %206 = vperm.xlu0 %205, %v84
  %v207 = vpop.permute.xlu0 %206
  %v209 = vmul.f32 %v207, %v204
  %v210 = vadd.f32 %v186, %v209
  %211 = vset.pattern.permute.xlu0 6
  %212 = vperm.xlu0 %211, %v37
  %v213 = vpop.permute.xlu0 %212
  %v215 = vlaneseq
  %v216 = vshrl.u32 %v215, 7
  %v217 = vsub.s32 6, %v216
  %v218 = vrot.slane %v38, %v217
  %v219 = vadd.f32 %v213, %v218
  %220 = vset.pattern.permute.xlu0 6
  %221 = vperm.xlu0 %220, %v70
  %v222 = vpop.permute.xlu0 %221
  %v224 = vmul.f32 %v222, %v36
  %v225 = vadd.f32 %v219, %v224
  %vm226 = vcmp.ge.f32.partialorder %v225, 0.0
  %v227 = vmul.f32 %v225, 0.2
  %v228 = vsel %vm226, %v225, %v227
  %229 = vset.pattern.permute.xlu0 6
  %230 = vperm.xlu0 %229, %v84
  %v231 = vpop.permute.xlu0 %230
  %v233 = vmul.f32 %v231, %v228
  %v234 = vadd.f32 %v210, %v233
  %235 = vset.pattern.permute.xlu0 7
  %236 = vperm.xlu0 %235, %v37
  %v237 = vpop.permute.xlu0 %236
  %v239 = vlaneseq
  %v240 = vshrl.u32 %v239, 7
  %v241 = vsub.s32 7, %v240
  %v242 = vrot.slane %v38, %v241
  %v243 = vadd.f32 %v237, %v242
  %244 = vset.pattern.permute.xlu0 7
  %245 = vperm.xlu0 %244, %v70
  %v246 = vpop.permute.xlu0 %245
  %v248 = vmul.f32 %v246, %v36
  %v249 = vadd.f32 %v243, %v248
  %vm250 = vcmp.ge.f32.partialorder %v249, 0.0
  %v251 = vmul.f32 %v249, 0.2
  %v252 = vsel %vm250, %v249, %v251
  %253 = vset.pattern.permute.xlu0 7
  %254 = vperm.xlu0 %253, %v84
  %v255 = vpop.permute.xlu0 %254
  %v257 = vmul.f32 %v255, %v252
  %v258 = vadd.f32 %v234, %v257
  %259 = vset.pattern.permute.xlu0 8
  %260 = vperm.xlu0 %259, %v37
  %v261 = vpop.permute.xlu0 %260
  %v263 = vlaneseq
  %v264 = vshrl.u32 %v263, 7
  %v265 = vsub.s32 0, %v264
  %v266 = vrot.slane %v39, %v265
  %v267 = vadd.f32 %v261, %v266
  %268 = vset.pattern.permute.xlu0 8
  %269 = vperm.xlu0 %268, %v70
  %v270 = vpop.permute.xlu0 %269
  %v272 = vmul.f32 %v270, %v36
  %v273 = vadd.f32 %v267, %v272
  %vm274 = vcmp.ge.f32.partialorder %v273, 0.0
  %v275 = vmul.f32 %v273, 0.2
  %v276 = vsel %vm274, %v273, %v275
  %277 = vset.pattern.permute.xlu0 8
  %278 = vperm.xlu0 %277, %v84
  %v279 = vpop.permute.xlu0 %278
  %v281 = vmul.f32 %v279, %v276
  %v282 = vadd.f32 %v258, %v281
  %283 = vset.pattern.permute.xlu0 9
  %284 = vperm.xlu0 %283, %v37
  %v285 = vpop.permute.xlu0 %284
  %v287 = vlaneseq
  %v288 = vshrl.u32 %v287, 7
  %v289 = vsub.s32 1, %v288
  %v290 = vrot.slane %v39, %v289
  %v291 = vadd.f32 %v285, %v290
  %292 = vset.pattern.permute.xlu0 9
  %293 = vperm.xlu0 %292, %v70
  %v294 = vpop.permute.xlu0 %293
  %v296 = vmul.f32 %v294, %v36
  %v297 = vadd.f32 %v291, %v296
  %vm298 = vcmp.ge.f32.partialorder %v297, 0.0
  %v299 = vmul.f32 %v297, 0.2
  %v300 = vsel %vm298, %v297, %v299
  %301 = vset.pattern.permute.xlu0 9
  %302 = vperm.xlu0 %301, %v84
  %v303 = vpop.permute.xlu0 %302
  %v305 = vmul.f32 %v303, %v300
  %v306 = vadd.f32 %v282, %v305
  %307 = vset.pattern.permute.xlu0 10
  %308 = vperm.xlu0 %307, %v37
  %v309 = vpop.permute.xlu0 %308
  %v311 = vlaneseq
  %v312 = vshrl.u32 %v311, 7
  %v313 = vsub.s32 2, %v312
  %v314 = vrot.slane %v39, %v313
  %v315 = vadd.f32 %v309, %v314
  %316 = vset.pattern.permute.xlu0 10
  %317 = vperm.xlu0 %316, %v70
  %v318 = vpop.permute.xlu0 %317
  %v320 = vmul.f32 %v318, %v36
  %v321 = vadd.f32 %v315, %v320
  %vm322 = vcmp.ge.f32.partialorder %v321, 0.0
  %v323 = vmul.f32 %v321, 0.2
  %v324 = vsel %vm322, %v321, %v323
  %325 = vset.pattern.permute.xlu0 10
  %326 = vperm.xlu0 %325, %v84
  %v327 = vpop.permute.xlu0 %326
  %v329 = vmul.f32 %v327, %v324
  %v330 = vadd.f32 %v306, %v329
  %331 = vset.pattern.permute.xlu0 11
  %332 = vperm.xlu0 %331, %v37
  %v333 = vpop.permute.xlu0 %332
  %v335 = vlaneseq
  %v336 = vshrl.u32 %v335, 7
  %v337 = vsub.s32 3, %v336
  %v338 = vrot.slane %v39, %v337
  %v339 = vadd.f32 %v333, %v338
  %340 = vset.pattern.permute.xlu0 11
  %341 = vperm.xlu0 %340, %v70
  %v342 = vpop.permute.xlu0 %341
  %v344 = vmul.f32 %v342, %v36
  %v345 = vadd.f32 %v339, %v344
  %vm346 = vcmp.ge.f32.partialorder %v345, 0.0
  %v347 = vmul.f32 %v345, 0.2
  %v348 = vsel %vm346, %v345, %v347
  %349 = vset.pattern.permute.xlu0 11
  %350 = vperm.xlu0 %349, %v84
  %v351 = vpop.permute.xlu0 %350
  %v353 = vmul.f32 %v351, %v348
  %v354 = vadd.f32 %v330, %v353
  %355 = vset.pattern.permute.xlu0 12
  %356 = vperm.xlu0 %355, %v37
  %v357 = vpop.permute.xlu0 %356
  %v359 = vlaneseq
  %v360 = vshrl.u32 %v359, 7
  %v361 = vsub.s32 4, %v360
  %v362 = vrot.slane %v39, %v361
  %v363 = vadd.f32 %v357, %v362
  %364 = vset.pattern.permute.xlu0 12
  %365 = vperm.xlu0 %364, %v70
  %v366 = vpop.permute.xlu0 %365
  %v368 = vmul.f32 %v366, %v36
  %v369 = vadd.f32 %v363, %v368
  %vm370 = vcmp.ge.f32.partialorder %v369, 0.0
  %v371 = vmul.f32 %v369, 0.2
  %v372 = vsel %vm370, %v369, %v371
  %373 = vset.pattern.permute.xlu0 12
  %374 = vperm.xlu0 %373, %v84
  %v375 = vpop.permute.xlu0 %374
  %v377 = vmul.f32 %v375, %v372
  %v378 = vadd.f32 %v354, %v377
  %379 = vset.pattern.permute.xlu0 13
  %380 = vperm.xlu0 %379, %v37
  %v381 = vpop.permute.xlu0 %380
  %v383 = vlaneseq
  %v384 = vshrl.u32 %v383, 7
  %v385 = vsub.s32 5, %v384
  %v386 = vrot.slane %v39, %v385
  %v387 = vadd.f32 %v381, %v386
  %388 = vset.pattern.permute.xlu0 13
  %389 = vperm.xlu0 %388, %v70
  %v390 = vpop.permute.xlu0 %389
  %v392 = vmul.f32 %v390, %v36
  %v393 = vadd.f32 %v387, %v392
  %vm394 = vcmp.ge.f32.partialorder %v393, 0.0
  %v395 = vmul.f32 %v393, 0.2
  %v396 = vsel %vm394, %v393, %v395
  %397 = vset.pattern.permute.xlu0 13
  %398 = vperm.xlu0 %397, %v84
  %v399 = vpop.permute.xlu0 %398
  %v401 = vmul.f32 %v399, %v396
  %v402 = vadd.f32 %v378, %v401
  %403 = vset.pattern.permute.xlu0 14
  %404 = vperm.xlu0 %403, %v37
  %v405 = vpop.permute.xlu0 %404
  %v407 = vlaneseq
  %v408 = vshrl.u32 %v407, 7
  %v409 = vsub.s32 6, %v408
  %v410 = vrot.slane %v39, %v409
  %v411 = vadd.f32 %v405, %v410
  %412 = vset.pattern.permute.xlu0 14
  %413 = vperm.xlu0 %412, %v70
  %v414 = vpop.permute.xlu0 %413
  %v416 = vmul.f32 %v414, %v36
  %v417 = vadd.f32 %v411, %v416
  %vm418 = vcmp.ge.f32.partialorder %v417, 0.0
  %v419 = vmul.f32 %v417, 0.2
  %v420 = vsel %vm418, %v417, %v419
  %421 = vset.pattern.permute.xlu0 14
  %422 = vperm.xlu0 %421, %v84
  %v423 = vpop.permute.xlu0 %422
  %v425 = vmul.f32 %v423, %v420
  %v426 = vadd.f32 %v402, %v425
  %427 = vset.pattern.permute.xlu0 15
  %428 = vperm.xlu0 %427, %v37
  %v429 = vpop.permute.xlu0 %428
  %v431 = vlaneseq
  %v432 = vshrl.u32 %v431, 7
  %v433 = vsub.s32 7, %v432
  %v434 = vrot.slane %v39, %v433
  %v435 = vadd.f32 %v429, %v434
  %436 = vset.pattern.permute.xlu0 15
  %437 = vperm.xlu0 %436, %v70
  %v438 = vpop.permute.xlu0 %437
  %v440 = vmul.f32 %v438, %v36
  %v441 = vadd.f32 %v435, %v440
  %vm442 = vcmp.ge.f32.partialorder %v441, 0.0
  %v443 = vmul.f32 %v441, 0.2
  %v444 = vsel %vm442, %v441, %v443
  %445 = vset.pattern.permute.xlu0 15
  %446 = vperm.xlu0 %445, %v84
  %v447 = vpop.permute.xlu0 %446
  %v449 = vmul.f32 %v447, %v444
  %v450 = vadd.f32 %v426, %v449
  %451 = vset.pattern.permute.xlu0 16
  %452 = vperm.xlu0 %451, %v37
  %v453 = vpop.permute.xlu0 %452
  %v455 = vlaneseq
  %v456 = vshrl.u32 %v455, 7
  %v457 = vsub.s32 0, %v456
  %v458 = vrot.slane %v40, %v457
  %v459 = vadd.f32 %v453, %v458
  %460 = vset.pattern.permute.xlu0 16
  %461 = vperm.xlu0 %460, %v70
  %v462 = vpop.permute.xlu0 %461
  %v464 = vmul.f32 %v462, %v36
  %v465 = vadd.f32 %v459, %v464
  %vm466 = vcmp.ge.f32.partialorder %v465, 0.0
  %v467 = vmul.f32 %v465, 0.2
  %v468 = vsel %vm466, %v465, %v467
  %469 = vset.pattern.permute.xlu0 16
  %470 = vperm.xlu0 %469, %v84
  %v471 = vpop.permute.xlu0 %470
  %v473 = vmul.f32 %v471, %v468
  %v474 = vadd.f32 %v450, %v473
  %475 = vset.pattern.permute.xlu0 17
  %476 = vperm.xlu0 %475, %v37
  %v477 = vpop.permute.xlu0 %476
  %v479 = vlaneseq
  %v480 = vshrl.u32 %v479, 7
  %v481 = vsub.s32 1, %v480
  %v482 = vrot.slane %v40, %v481
  %v483 = vadd.f32 %v477, %v482
  %484 = vset.pattern.permute.xlu0 17
  %485 = vperm.xlu0 %484, %v70
  %v486 = vpop.permute.xlu0 %485
  %v488 = vmul.f32 %v486, %v36
  %v489 = vadd.f32 %v483, %v488
  %vm490 = vcmp.ge.f32.partialorder %v489, 0.0
  %v491 = vmul.f32 %v489, 0.2
  %v492 = vsel %vm490, %v489, %v491
  %493 = vset.pattern.permute.xlu0 17
  %494 = vperm.xlu0 %493, %v84
  %v495 = vpop.permute.xlu0 %494
  %v497 = vmul.f32 %v495, %v492
  %v498 = vadd.f32 %v474, %v497
  %499 = vset.pattern.permute.xlu0 18
  %500 = vperm.xlu0 %499, %v37
  %v501 = vpop.permute.xlu0 %500
  %v503 = vlaneseq
  %v504 = vshrl.u32 %v503, 7
  %v505 = vsub.s32 2, %v504
  %v506 = vrot.slane %v40, %v505
  %v507 = vadd.f32 %v501, %v506
  %508 = vset.pattern.permute.xlu0 18
  %509 = vperm.xlu0 %508, %v70
  %v510 = vpop.permute.xlu0 %509
  %v512 = vmul.f32 %v510, %v36
  %v513 = vadd.f32 %v507, %v512
  %vm514 = vcmp.ge.f32.partialorder %v513, 0.0
  %v515 = vmul.f32 %v513, 0.2
  %v516 = vsel %vm514, %v513, %v515
  %517 = vset.pattern.permute.xlu0 18
  %518 = vperm.xlu0 %517, %v84
  %v519 = vpop.permute.xlu0 %518
  %v521 = vmul.f32 %v519, %v516
  %v522 = vadd.f32 %v498, %v521
  %523 = vset.pattern.permute.xlu0 19
  %524 = vperm.xlu0 %523, %v37
  %v525 = vpop.permute.xlu0 %524
  %v527 = vlaneseq
  %v528 = vshrl.u32 %v527, 7
  %v529 = vsub.s32 3, %v528
  %v530 = vrot.slane %v40, %v529
  %v531 = vadd.f32 %v525, %v530
  %532 = vset.pattern.permute.xlu0 19
  %533 = vperm.xlu0 %532, %v70
  %v534 = vpop.permute.xlu0 %533
  %v536 = vmul.f32 %v534, %v36
  %v537 = vadd.f32 %v531, %v536
  %vm538 = vcmp.ge.f32.partialorder %v537, 0.0
  %v539 = vmul.f32 %v537, 0.2
  %v540 = vsel %vm538, %v537, %v539
  %541 = vset.pattern.permute.xlu0 19
  %542 = vperm.xlu0 %541, %v84
  %v543 = vpop.permute.xlu0 %542
  %v545 = vmul.f32 %v543, %v540
  %v546 = vadd.f32 %v522, %v545
  %547 = vset.pattern.permute.xlu0 20
  %548 = vperm.xlu0 %547, %v37
  %v549 = vpop.permute.xlu0 %548
  %v551 = vlaneseq
  %v552 = vshrl.u32 %v551, 7
  %v553 = vsub.s32 4, %v552
  %v554 = vrot.slane %v40, %v553
  %v555 = vadd.f32 %v549, %v554
  %556 = vset.pattern.permute.xlu0 20
  %557 = vperm.xlu0 %556, %v70
  %v558 = vpop.permute.xlu0 %557
  %v560 = vmul.f32 %v558, %v36
  %v561 = vadd.f32 %v555, %v560
  %vm562 = vcmp.ge.f32.partialorder %v561, 0.0
  %v563 = vmul.f32 %v561, 0.2
  %v564 = vsel %vm562, %v561, %v563
  %565 = vset.pattern.permute.xlu0 20
  %566 = vperm.xlu0 %565, %v84
  %v567 = vpop.permute.xlu0 %566
  %v569 = vmul.f32 %v567, %v564
  %v570 = vadd.f32 %v546, %v569
  %571 = vset.pattern.permute.xlu0 21
  %572 = vperm.xlu0 %571, %v37
  %v573 = vpop.permute.xlu0 %572
  %v575 = vlaneseq
  %v576 = vshrl.u32 %v575, 7
  %v577 = vsub.s32 5, %v576
  %v578 = vrot.slane %v40, %v577
  %v579 = vadd.f32 %v573, %v578
  %580 = vset.pattern.permute.xlu0 21
  %581 = vperm.xlu0 %580, %v70
  %v582 = vpop.permute.xlu0 %581
  %v584 = vmul.f32 %v582, %v36
  %v585 = vadd.f32 %v579, %v584
  %vm586 = vcmp.ge.f32.partialorder %v585, 0.0
  %v587 = vmul.f32 %v585, 0.2
  %v588 = vsel %vm586, %v585, %v587
  %589 = vset.pattern.permute.xlu0 21
  %590 = vperm.xlu0 %589, %v84
  %v591 = vpop.permute.xlu0 %590
  %v593 = vmul.f32 %v591, %v588
  %v594 = vadd.f32 %v570, %v593
  %595 = vset.pattern.permute.xlu0 22
  %596 = vperm.xlu0 %595, %v37
  %v597 = vpop.permute.xlu0 %596
  %v599 = vlaneseq
  %v600 = vshrl.u32 %v599, 7
  %v601 = vsub.s32 6, %v600
  %v602 = vrot.slane %v40, %v601
  %v603 = vadd.f32 %v597, %v602
  %604 = vset.pattern.permute.xlu0 22
  %605 = vperm.xlu0 %604, %v70
  %v606 = vpop.permute.xlu0 %605
  %v608 = vmul.f32 %v606, %v36
  %v609 = vadd.f32 %v603, %v608
  %vm610 = vcmp.ge.f32.partialorder %v609, 0.0
  %v611 = vmul.f32 %v609, 0.2
  %v612 = vsel %vm610, %v609, %v611
  %613 = vset.pattern.permute.xlu0 22
  %614 = vperm.xlu0 %613, %v84
  %v615 = vpop.permute.xlu0 %614
  %v617 = vmul.f32 %v615, %v612
  %v618 = vadd.f32 %v594, %v617
  %619 = vset.pattern.permute.xlu0 23
  %620 = vperm.xlu0 %619, %v37
  %v621 = vpop.permute.xlu0 %620
  %v623 = vlaneseq
  %v624 = vshrl.u32 %v623, 7
  %v625 = vsub.s32 7, %v624
  %v626 = vrot.slane %v40, %v625
  %v627 = vadd.f32 %v621, %v626
  %628 = vset.pattern.permute.xlu0 23
  %629 = vperm.xlu0 %628, %v70
  %v630 = vpop.permute.xlu0 %629
  %v632 = vmul.f32 %v630, %v36
  %v633 = vadd.f32 %v627, %v632
  %vm634 = vcmp.ge.f32.partialorder %v633, 0.0
  %v635 = vmul.f32 %v633, 0.2
  %v636 = vsel %vm634, %v633, %v635
  %637 = vset.pattern.permute.xlu0 23
  %638 = vperm.xlu0 %637, %v84
  %v639 = vpop.permute.xlu0 %638
  %v641 = vmul.f32 %v639, %v636
  %v642 = vadd.f32 %v618, %v641
  %643 = vset.pattern.permute.xlu0 24
  %644 = vperm.xlu0 %643, %v37
  %v645 = vpop.permute.xlu0 %644
  %v647 = vlaneseq
  %v648 = vshrl.u32 %v647, 7
  %v649 = vsub.s32 0, %v648
  %v650 = vrot.slane %v41, %v649
  %v651 = vadd.f32 %v645, %v650
  %652 = vset.pattern.permute.xlu0 24
  %653 = vperm.xlu0 %652, %v70
  %v654 = vpop.permute.xlu0 %653
  %v656 = vmul.f32 %v654, %v36
  %v657 = vadd.f32 %v651, %v656
  %vm658 = vcmp.ge.f32.partialorder %v657, 0.0
  %v659 = vmul.f32 %v657, 0.2
  %v660 = vsel %vm658, %v657, %v659
  %661 = vset.pattern.permute.xlu0 24
  %662 = vperm.xlu0 %661, %v84
  %v663 = vpop.permute.xlu0 %662
  %v665 = vmul.f32 %v663, %v660
  %v666 = vadd.f32 %v642, %v665
  %667 = vset.pattern.permute.xlu0 25
  %668 = vperm.xlu0 %667, %v37
  %v669 = vpop.permute.xlu0 %668
  %v671 = vlaneseq
  %v672 = vshrl.u32 %v671, 7
  %v673 = vsub.s32 1, %v672
  %v674 = vrot.slane %v41, %v673
  %v675 = vadd.f32 %v669, %v674
  %676 = vset.pattern.permute.xlu0 25
  %677 = vperm.xlu0 %676, %v70
  %v678 = vpop.permute.xlu0 %677
  %v680 = vmul.f32 %v678, %v36
  %v681 = vadd.f32 %v675, %v680
  %vm682 = vcmp.ge.f32.partialorder %v681, 0.0
  %v683 = vmul.f32 %v681, 0.2
  %v684 = vsel %vm682, %v681, %v683
  %685 = vset.pattern.permute.xlu0 25
  %686 = vperm.xlu0 %685, %v84
  %v687 = vpop.permute.xlu0 %686
  %v689 = vmul.f32 %v687, %v684
  %v690 = vadd.f32 %v666, %v689
  %691 = vset.pattern.permute.xlu0 26
  %692 = vperm.xlu0 %691, %v37
  %v693 = vpop.permute.xlu0 %692
  %v695 = vlaneseq
  %v696 = vshrl.u32 %v695, 7
  %v697 = vsub.s32 2, %v696
  %v698 = vrot.slane %v41, %v697
  %v699 = vadd.f32 %v693, %v698
  %700 = vset.pattern.permute.xlu0 26
  %701 = vperm.xlu0 %700, %v70
  %v702 = vpop.permute.xlu0 %701
  %v704 = vmul.f32 %v702, %v36
  %v705 = vadd.f32 %v699, %v704
  %vm706 = vcmp.ge.f32.partialorder %v705, 0.0
  %v707 = vmul.f32 %v705, 0.2
  %v708 = vsel %vm706, %v705, %v707
  %709 = vset.pattern.permute.xlu0 26
  %710 = vperm.xlu0 %709, %v84
  %v711 = vpop.permute.xlu0 %710
  %v713 = vmul.f32 %v711, %v708
  %v714 = vadd.f32 %v690, %v713
  %715 = vset.pattern.permute.xlu0 27
  %716 = vperm.xlu0 %715, %v37
  %v717 = vpop.permute.xlu0 %716
  %v719 = vlaneseq
  %v720 = vshrl.u32 %v719, 7
  %v721 = vsub.s32 3, %v720
  %v722 = vrot.slane %v41, %v721
  %v723 = vadd.f32 %v717, %v722
  %724 = vset.pattern.permute.xlu0 27
  %725 = vperm.xlu0 %724, %v70
  %v726 = vpop.permute.xlu0 %725
  %v728 = vmul.f32 %v726, %v36
  %v729 = vadd.f32 %v723, %v728
  %vm730 = vcmp.ge.f32.partialorder %v729, 0.0
  %v731 = vmul.f32 %v729, 0.2
  %v732 = vsel %vm730, %v729, %v731
  %733 = vset.pattern.permute.xlu0 27
  %734 = vperm.xlu0 %733, %v84
  %v735 = vpop.permute.xlu0 %734
  %v737 = vmul.f32 %v735, %v732
  %v738 = vadd.f32 %v714, %v737
  %739 = vset.pattern.permute.xlu0 28
  %740 = vperm.xlu0 %739, %v37
  %v741 = vpop.permute.xlu0 %740
  %v743 = vlaneseq
  %v744 = vshrl.u32 %v743, 7
  %v745 = vsub.s32 4, %v744
  %v746 = vrot.slane %v41, %v745
  %v747 = vadd.f32 %v741, %v746
  %748 = vset.pattern.permute.xlu0 28
  %749 = vperm.xlu0 %748, %v70
  %v750 = vpop.permute.xlu0 %749
  %v752 = vmul.f32 %v750, %v36
  %v753 = vadd.f32 %v747, %v752
  %vm754 = vcmp.ge.f32.partialorder %v753, 0.0
  %v755 = vmul.f32 %v753, 0.2
  %v756 = vsel %vm754, %v753, %v755
  %757 = vset.pattern.permute.xlu0 28
  %758 = vperm.xlu0 %757, %v84
  %v759 = vpop.permute.xlu0 %758
  %v761 = vmul.f32 %v759, %v756
  %v762 = vadd.f32 %v738, %v761
  %763 = vset.pattern.permute.xlu0 29
  %764 = vperm.xlu0 %763, %v37
  %v765 = vpop.permute.xlu0 %764
  %v767 = vlaneseq
  %v768 = vshrl.u32 %v767, 7
  %v769 = vsub.s32 5, %v768
  %v770 = vrot.slane %v41, %v769
  %v771 = vadd.f32 %v765, %v770
  %772 = vset.pattern.permute.xlu0 29
  %773 = vperm.xlu0 %772, %v70
  %v774 = vpop.permute.xlu0 %773
  %v776 = vmul.f32 %v774, %v36
  %v777 = vadd.f32 %v771, %v776
  %vm778 = vcmp.ge.f32.partialorder %v777, 0.0
  %v779 = vmul.f32 %v777, 0.2
  %v780 = vsel %vm778, %v777, %v779
  %781 = vset.pattern.permute.xlu0 29
  %782 = vperm.xlu0 %781, %v84
  %v783 = vpop.permute.xlu0 %782
  %v785 = vmul.f32 %v783, %v780
  %v786 = vadd.f32 %v762, %v785
  %787 = vset.pattern.permute.xlu0 30
  %788 = vperm.xlu0 %787, %v37
  %v789 = vpop.permute.xlu0 %788
  %v791 = vlaneseq
  %v792 = vshrl.u32 %v791, 7
  %v793 = vsub.s32 6, %v792
  %v794 = vrot.slane %v41, %v793
  %v795 = vadd.f32 %v789, %v794
  %796 = vset.pattern.permute.xlu0 30
  %797 = vperm.xlu0 %796, %v70
  %v798 = vpop.permute.xlu0 %797
  %v800 = vmul.f32 %v798, %v36
  %v801 = vadd.f32 %v795, %v800
  %vm802 = vcmp.ge.f32.partialorder %v801, 0.0
  %v803 = vmul.f32 %v801, 0.2
  %v804 = vsel %vm802, %v801, %v803
  %805 = vset.pattern.permute.xlu0 30
  %806 = vperm.xlu0 %805, %v84
  %v807 = vpop.permute.xlu0 %806
  %v809 = vmul.f32 %v807, %v804
  %v810 = vadd.f32 %v786, %v809
  %811 = vset.pattern.permute.xlu0 31
  %812 = vperm.xlu0 %811, %v37
  %v813 = vpop.permute.xlu0 %812
  %v815 = vlaneseq
  %v816 = vshrl.u32 %v815, 7
  %v817 = vsub.s32 7, %v816
  %v818 = vrot.slane %v41, %v817
  %v819 = vadd.f32 %v813, %v818
  %820 = vset.pattern.permute.xlu0 31
  %821 = vperm.xlu0 %820, %v70
  %v822 = vpop.permute.xlu0 %821
  %v824 = vmul.f32 %v822, %v36
  %v825 = vadd.f32 %v819, %v824
  %vm826 = vcmp.ge.f32.partialorder %v825, 0.0
  %v827 = vmul.f32 %v825, 0.2
  %v828 = vsel %vm826, %v825, %v827
  %829 = vset.pattern.permute.xlu0 31
  %830 = vperm.xlu0 %829, %v84
  %v831 = vpop.permute.xlu0 %830
  %v833 = vmul.f32 %v831, %v828
  %v834 = vadd.f32 %v810, %v833
  %v835 = vsel %vm35, %v834, -1e+30
  %v836 = vld [vmem:[#allocation2] sm:$0xff]
  %vm837 = vcmask 64512
  %v838 = vsel %vm837, %v835, -inf
  %839 = vmax.xlane.f32.xlu0 %v838
  %v840 = vpop.xlane.xlu0 %839
  %v841 = vmax.f32 %v836, %v840
  %v842 = vsub.f32 %v836, %v841
  %v843 = vmul.f32 %v842, 1.442695
  %v844 = vpow.pop %v843
  %846 = vset.pattern.permute.xlu0 0
  %847 = vperm.xlu0 %846, %v841
  %v848 = vpop.permute.xlu0 %847
  %v850 = vsub.f32 %v835, %v848
  %v851 = vmul.f32 %v850, 1.442695
  %v852 = vpow.pop %v851
  %v853 = vsel %vm35, %v852, 0.0
  %v854 = vld [vmem:[#allocation3] sm:$0xff]
  %v855 = vmul.f32 %v844, %v854
  %v856 = vsel %vm837, %v853, 0.0
  %857 = vadd.xlane.f32.xlu0 %v856
  %v858 = vpop.xlane.xlu0 %857
  %v859 = vadd.f32 %v855, %v858
  %vm860 = vcmask 7168
  %861 = vst.msk [vmem:[#allocation3] sm:$0xff] %vm860, %v859
  %v863 = vsel %vm837, %v853, 0
  %v866 = vsel %vm837, %v38, 0
  %v869 = vsel %vm837, %v39, 0
  %v872 = vsel %vm837, %v40, 0
  %v875 = vsel %vm837, %v41, 0
  %v878 = vsel %vm837, %v42, 0
  %v881 = vsel %vm837, %v43, 0
  %v884 = vsel %vm837, %v44, 0
  %v887 = vsel %vm837, %v45, 0
  %v890 = vsel %vm837, %v46, 0
  %v893 = vsel %vm837, %v47, 0
  %v896 = vsel %vm837, %v48, 0
  %v899 = vsel %vm837, %v49, 0
  %v902 = vsel %vm837, %v50, 0
  %v905 = vsel %vm837, %v51, 0
  %v908 = vsel %vm837, %v52, 0
  %v911 = vsel %vm837, %v53, 0
  %913 = vmatprep.subr.mxu0 0.0
  %914 = vmatpush1.xpose.msra.mxu0 %v911
  %915 = vmatprep.subr.mxu0 0.0
  %916 = vmatpush1.xpose.msra.mxu0 %v908
  %917 = vmatprep.subr.mxu0 0.0
  %918 = vmatpush1.xpose.msra.mxu0 %v905
  %919 = vmatprep.subr.mxu0 0.0
  %920 = vmatpush1.xpose.msra.mxu0 %v902
  %921 = vmatprep.subr.mxu0 0.0
  %922 = vmatpush1.xpose.msra.mxu0 %v899
  %923 = vmatprep.subr.mxu0 0.0
  %924 = vmatpush1.xpose.msra.mxu0 %v896
  %925 = vmatprep.subr.mxu0 0.0
  %926 = vmatpush1.xpose.msra.mxu0 %v893
  %927 = vmatprep.subr.mxu0 0.0
  %928 = vmatpush1.xpose.msra.mxu0 %v890
  %929 = vmatprep.subr.mxu0 0.0
  %930 = vmatpush1.xpose.msra.mxu0 %v887
  %931 = vmatprep.subr.mxu0 0.0
  %932 = vmatpush1.xpose.msra.mxu0 %v884
  %933 = vmatprep.subr.mxu0 0.0
  %934 = vmatpush1.xpose.msra.mxu0 %v881
  %935 = vmatprep.subr.mxu0 0.0
  %936 = vmatpush1.xpose.msra.mxu0 %v878
  %937 = vmatprep.subr.mxu0 0.0
  %938 = vmatpush1.xpose.msra.mxu0 %v875
  %939 = vmatprep.subr.mxu0 0.0
  %940 = vmatpush1.xpose.msra.mxu0 %v872
  %941 = vmatprep.subr.mxu0 0.0
  %942 = vmatpush1.xpose.msra.mxu0 %v869
  %943 = vmatprep.subr.mxu0 0.0
  %944 = vmatpush1.xpose.msra.mxu0 %v866
  %945 = vmatprep.subr.mxu0 0.0
  %946 = vmatpush2.xpose.msra.mxu0 0.0
  %947 = vmatprep.subr.mxu0 0.0
  %948 = vmatpush2.xpose.msra.mxu0 0.0
  %949 = vmatprep.subr.mxu0 0.0
  %950 = vmatpush2.xpose.msra.mxu0 0.0
  %951 = vmatprep.subr.mxu0 0.0
  %952 = vmatpush2.xpose.msra.mxu0 0.0
  %953 = vmatprep.subr.mxu0 0.0
  %954 = vmatpush2.xpose.msra.mxu0 0.0
  %955 = vmatprep.subr.mxu0 0.0
  %956 = vmatpush2.xpose.msra.mxu0 0.0
  %957 = vmatprep.subr.mxu0 0.0
  %958 = vmatpush2.xpose.msra.mxu0 0.0
  %959 = vmatprep.subr.mxu0 0.0
  %960 = vmatpush2.xpose.msra.mxu0 0.0
  %961 = vmatprep.subr.mxu0 0.0
  %962 = vmatpush2.xpose.msra.mxu0 0.0
  %963 = vmatprep.subr.mxu0 0.0
  %964 = vmatpush2.xpose.msra.mxu0 0.0
  %965 = vmatprep.subr.mxu0 0.0
  %966 = vmatpush2.xpose.msra.mxu0 0.0
  %967 = vmatprep.subr.mxu0 0.0
  %968 = vmatpush2.xpose.msra.mxu0 0.0
  %969 = vmatprep.subr.mxu0 0.0
  %970 = vmatpush2.xpose.msra.mxu0 0.0
  %971 = vmatprep.subr.mxu0 0.0
  %972 = vmatpush2.xpose.msra.mxu0 0.0
  %973 = vmatprep.subr.mxu0 0.0
  %974 = vmatpush2.xpose.msra.mxu0 0.0
  %975 = vmatprep.subr.mxu0 0.0
  %976 = vmatpush2.xpose.msra.mxu0 0.0
  %977 = vmatprep.mubr.f32.mxu0 0.0
  %978 = vmatmul.mubr.f32.gmra.mxu0 %v863
  %v979 = vpop.f32.mrf.mxu0
  %v980 = vadd.f32 0.0, %v979
  %v981 = vpop.f32.mrf.mxu0
  %982 = vdwg.mxu0
  %v983 = vld [vmem:[#allocation4] sm:$0xff]
  %985 = vset.pattern.permute.xlu0 0
  %986 = vperm.xlu0 %985, %v844
  %v987 = vpop.permute.xlu0 %986
  %v989 = vmul.f32 %v987, %v983
  %v990 = vadd.f32 %v989, %v980
  %991 = vst [vmem:[#allocation4] sm:$0xff] %v990
  %992 = vst.msk [vmem:[#allocation2] sm:$0xff] %vm860, %v841
  // Predicated region
  $region34: #{gcn_gat_autoencoder.13} parent=0 // pred_check
    %p993 = pneg %p26
  $region35: #{gcn_gat_autoencoder.13} parent=0 // pred_check_branch
    %995 = sbr.rel (%p993) target = $region37
  $region36: #{gcn_gat_autoencoder.13} parent=0 // pred_region
    %v996 = vld [vmem:[#allocation4] sm:$0xff]
    %v997 = vld [vmem:[#allocation3] sm:$0xff]
    %999 = vset.pattern.permute.xlu0 0
    %1000 = vperm.xlu0 %999, %v997
    %v1001 = vpop.permute.xlu0 %1000
    %v1003 = vrcp.pop %v1001
    %v1004 = vmul.f32 %v996, %v1003
    %v1005 = vld [vmem:[%s6] sm:$0x1]
    %v1007 = vlaneseq
    %v1008 = vshrl.u32 %v1007, 7
    %v1009 = vsub.s32 0, %v1008
    %v1010 = vrot.slane %v1005, %v1009
    %v1012 = vadd.f32 %v1004, %v1010
    %v1013 = vmax.f32 %v1012, 0.0
    %1014 = vst [vmem:[%s7] sm:$0xff] %v1013
  $region37: #{gcn_gat_autoencoder.13} parent=0 // pred_fallthru
    _
  // Predicated region
  $region38: #{gcn_gat_autoencoder.13} parent=0 // pred_check
    _
  $region39: #{gcn_gat_autoencoder.13} parent=0 // pred_check_branch
    %1016 = sbr.rel (0) target = $region41
  $region40: #{gcn_gat_autoencoder.13} parent=0 // pred_region
    _
  $region41: #{gcn_gat_autoencoder.13} parent=0 // pred_fallthru
    _
  // Predicated region
  $region42: #{gcn_gat_autoencoder.13} parent=0 // pred_check
    _
  $region43: #{gcn_gat_autoencoder.13} parent=0 // pred_check_branch
    %1018 = sbr.rel (0) target = $region45
  $region44: #{gcn_gat_autoencoder.13} parent=0 // pred_region
    _
  $region45: #{gcn_gat_autoencoder.13} parent=0 // pred_fallthru
    _

</llo_original>
